<compile_context>
chip_gen: v7x
topology: tpu7x:2x2x1
jax: 0.10.0
libtpu: 0.0.40
codegen_flags: <defaults>
</compile_context>

<pallas_src>
import math
import jax
import jax.numpy as jnp
from jax.experimental import pallas as pl
from jax.experimental.pallas import tpu as pltpu

# ----- model config (small, consistent with the module's __init__) -----
VOCAB = 50        # wordDictSize
D_MODEL = 32      # embeddingSize
N_LAYERS = 2      # encoderNumber
N_HEADS = 4       # headNumber
D_K = D_MODEL // N_HEADS
D_FF = 64         # feedforwardSize
N_TAGS = 8        # len(tagDict)
LANES = 128       # lane width; also padded tag-head width
TAG_PAD = LANES
SEQ = 8
BATCH = 2
BS = BATCH * SEQ
EPS = 1e-6
NEG_INF = -1000000000.0

# ----- packed parameter slab layout (all blocks start at col 0, rows 8-aligned) -----
# per-layer weight slab (N_LAYERS, LAYER_ROWS, 128):
R_WQKV = 0          # rows   0: 32, cols 0:96   fused [Wq*s | Wk | Wv]
R_W1 = 32           # rows  32: 64, cols 0:64   FFN W1
R_W2 = 64           # rows  64:128, cols 0:32   FFN W2
R_WO = 128          # rows 128:160, cols 0:32   attention output projection
R_VEC = 160         # rows 160:168: bqkv*sQ, bo, b1, b2, ln1_a, ln1_b, ln2_a, ln2_b
LAYER_ROWS = 168
# head / constants slab (HEAD_ROWS, 128):
H_WFC = 0           # rows  0:32, cols 0:128    tag head weight (zero-padded cols 8:128)
H_BFC = 32          # row     32, cols 0:128    tag head bias (-1e9 on padded cols)
H_LNF = 33          # rows 33:35, cols 0:32     final LayerNorm scale / bias
H_BLK = 40          # rows 40:56, cols 0:16     block-diag (same-batch) attention bias
HEAD_ROWS = 56


# --------------------------- fused Pallas kernel ---------------------------

def fused_transformer_kernel(x_ref, mask_ref, wslab_ref, hslab_ref, o_ref):
    x = x_ref[...]                                   # (B*S, D)  batch folded into rows

    # Additive attention bias, materialized ONCE and reused by every layer & head:
    # block-diagonal (queries only attend within their own batch element) combined with
    # the key-padding mask. Single -1e9 per masked key, exactly like the reference.
    block_bias = hslab_ref[H_BLK:H_BLK + BS, 0:BS]                 # (B*S, B*S) constant
    attn_bias = jnp.where(mask_ref[...] != 0.0, block_bias, NEG_INF)

    def layernorm(v, a, b):
        # PyTorch-reference LayerNorm: unbiased std, eps added to std (not var).
        mean = jnp.mean(v, axis=-1, keepdims=True)
        var = jnp.sum((v - mean) ** 2, axis=-1, keepdims=True) * (1.0 / (D_MODEL - 1))
        inv = pl.reciprocal(jnp.sqrt(var) + EPS, approx=False)     # exact; multiply, no divide
        return a * ((v - mean) * inv) + b

    for l in range(N_LAYERS):                        # static unroll (2 layers)
        wqkv = wslab_ref[l, R_WQKV:R_WQKV + D_MODEL, 0:3 * D_MODEL]   # (32, 96)
        w1 = wslab_ref[l, R_W1:R_W1 + D_MODEL, 0:D_FF]                # (32, 64)
        w2 = wslab_ref[l, R_W2:R_W2 + D_FF, 0:D_MODEL]                # (64, 32)
        bqkv = wslab_ref[l, R_VEC + 0:R_VEC + 1, 0:3 * D_MODEL]       # (1, 96)
        bo = wslab_ref[l, R_VEC + 1:R_VEC + 2, 0:D_MODEL]
        b1 = wslab_ref[l, R_VEC + 2:R_VEC + 3, 0:D_FF]
        b2 = wslab_ref[l, R_VEC + 3:R_VEC + 4, 0:D_MODEL]
        ln1_a = wslab_ref[l, R_VEC + 4:R_VEC + 5, 0:D_MODEL]
        ln1_b = wslab_ref[l, R_VEC + 5:R_VEC + 6, 0:D_MODEL]
        ln2_a = wslab_ref[l, R_VEC + 6:R_VEC + 7, 0:D_MODEL]
        ln2_b = wslab_ref[l, R_VEC + 7:R_VEC + 8, 0:D_MODEL]

        # ---- MultiHeadedAttention sublayer: x + MHA(LayerNorm(x)) ----
        y = layernorm(x, ln1_a, ln1_b)                                          # (16, 32)
        # fused QKV projection; the 1/sqrt(d_k) scale is pre-folded into the Q columns
        qkv = jnp.dot(y, wqkv, preferred_element_type=jnp.float32) + bqkv       # (16, 96)

        attn_out = jnp.zeros((BS, D_MODEL), jnp.float32)
        for h in range(N_HEADS):                     # static unroll; all 2-D, no concat
            q_h = qkv[:, h * D_K:(h + 1) * D_K]                                  # (16, 8)
            k_h = qkv[:, D_MODEL + h * D_K:D_MODEL + (h + 1) * D_K]              # (16, 8)
            v_h = qkv[:, 2 * D_MODEL + h * D_K:2 * D_MODEL + (h + 1) * D_K]      # (16, 8)
            s = jax.lax.dot_general(q_h, k_h, (((1,), (1,)), ((), ())),
                                    preferred_element_type=jnp.float32)         # (16, 16)
            s = s + attn_bias
            m = jnp.max(s, axis=-1, keepdims=True)
            e = jnp.exp(s - m)
            p = e * pl.reciprocal(jnp.sum(e, axis=-1, keepdims=True), approx=True)
            ctx_h = jnp.dot(p, v_h, preferred_element_type=jnp.float32)          # (16, 8)
            # fold this head's context straight into the output projection (no concat)
            wo_h = wslab_ref[l, R_WO + h * D_K:R_WO + (h + 1) * D_K, 0:D_MODEL]  # (8, 32)
            attn_out = attn_out + jnp.dot(ctx_h, wo_h,
                                          preferred_element_type=jnp.float32)
        x = x + attn_out + bo

        # ---- feed-forward sublayer: x + FFN(LayerNorm(x)) ----
        y2 = layernorm(x, ln2_a, ln2_b)
        h1 = jnp.maximum(
            jnp.dot(y2, w1, preferred_element_type=jnp.float32) + b1, 0.0)
        x = x + jnp.dot(h1, w2, preferred_element_type=jnp.float32) + b2

    # ---- tag head: LayerNorm -> Linear (lane-padded to 128) -> log_softmax ----
    wfc = hslab_ref[H_WFC:H_WFC + D_MODEL, :]                        # (32, 128)
    bfc = hslab_ref[H_BFC:H_BFC + 1, :]                              # (1, 128)
    lnf_a = hslab_ref[H_LNF:H_LNF + 1, 0:D_MODEL]
    lnf_b = hslab_ref[H_LNF + 1:H_LNF + 2, 0:D_MODEL]
    yf = layernorm(x, lnf_a, lnf_b)
    logits = jnp.dot(yf, wfc, preferred_element_type=jnp.float32) + bfc          # (16, 128)
    m = jnp.max(logits, axis=-1, keepdims=True)
    lse = jnp.log(jnp.sum(jnp.exp(logits - m), axis=-1, keepdims=True)) + m
    # padded columns carry logits ~ -1e9 -> exp underflows to exactly 0, so the real
    # columns' log_softmax is unchanged. Store is one lane-dense (16, 128) slab.
    o_ref[...] = logits - lse


# --------------------------- wrappers ---------------------------

def _full_spec(shape):
    nd = len(shape)
    return pl.BlockSpec(shape, lambda i, _nd=nd: (0,) * _nd)


def _cost_estimate():
    per_layer = (2 * BS * D_MODEL * 3 * D_MODEL                       # fused QKV matmul
                 + N_HEADS * (2 * BS * BS * D_K                       # scores
                              + 2 * BS * BS * D_K                     # context
                              + 2 * BS * D_K * D_MODEL)               # per-head out-proj
                 + 2 * (2 * BS * D_MODEL * D_FF))                     # FFN
    flops = N_LAYERS * per_layer + 2 * BS * D_MODEL * TAG_PAD
    transcendentals = N_LAYERS * N_HEADS * BS * BS + BS * TAG_PAD
    bytes_accessed = 4 * (BS * D_MODEL + BS
                          + N_LAYERS * LAYER_ROWS * LANES
                          + HEAD_ROWS * LANES
                          + BS * TAG_PAD)
    return pl.CostEstimate(flops=flops, transcendentals=transcendentals,
                           bytes_accessed=bytes_accessed)


def positional_encoding(max_len, d_model):
    position = jnp.arange(0.0, max_len)[:, None]
    div_term = jnp.exp(jnp.arange(0.0, d_model, 2.0) * -(math.log(10000.0) / d_model))
    pe = jnp.zeros((max_len, d_model), jnp.float32)
    pe = pe.at[:, 0::2].set(jnp.sin(position * div_term))
    pe = pe.at[:, 1::2].set(jnp.cos(position * div_term))
    return pe


@jax.jit
def transformer_forward(tokens, packed):
    """Eval-mode forward (dropout = identity). Embedding lookup + PE are plain-JAX glue."""
    B, S = tokens.shape
    mask = (tokens != 0).astype(jnp.float32).reshape(1, B * S)        # flattened key mask
    x = packed["lut"][tokens] * math.sqrt(D_MODEL)                    # (B, S, D)
    x = x + positional_encoding(S, D_MODEL)[None]
    x2 = x.reshape(B * S, D_MODEL).astype(jnp.float32)                # fold batch into rows

    args = (x2, mask, packed["wslab"], packed["hslab"])
    out = pl.pallas_call(
        fused_transformer_kernel,
        out_shape=jax.ShapeDtypeStruct((B * S, TAG_PAD), jnp.float32),
        grid=(1,),                                    # single step, single TensorCore
        in_specs=[_full_spec(a.shape) for a in args],
        out_specs=pl.BlockSpec((B * S, TAG_PAD), lambda i: (0, 0)),
        compiler_params=pltpu.CompilerParams(dimension_semantics=("arbitrary",)),
        cost_estimate=_cost_estimate(),
    )(*args)

    return out[:, :N_TAGS].reshape(B, S, N_TAGS)      # slice lane padding back off


# --------------------------- parameters ---------------------------

def init_params(key):
    def nrm(k, shape, scale=0.02):
        return (scale * jax.random.normal(k, shape)).astype(jnp.float32)

    keys = jax.random.split(key, 16)
    ki = iter(keys)
    params = {
        "lut":  nrm(next(ki), (VOCAB, D_MODEL), 1.0),
        "wqkv": nrm(next(ki), (N_LAYERS, D_MODEL, 3 * D_MODEL)),   # fused Wq|Wk|Wv
        "bqkv": nrm(next(ki), (N_LAYERS, 1, 3 * D_MODEL)),
        "wo":   nrm(next(ki), (N_LAYERS, D_MODEL, D_MODEL)),
        "bo":   nrm(next(ki), (N_LAYERS, 1, D_MODEL)),
        # rows: [ln1_scale, ln1_bias, ln2_scale, ln2_bias]
        "ln":   jnp.tile(jnp.array([1.0, 0.0, 1.0, 0.0], jnp.float32)[None, :, None],
                         (N_LAYERS, 1, D_MODEL)),
        "w1":   nrm(next(ki), (N_LAYERS, D_MODEL, D_FF)),
        "b1":   nrm(next(ki), (N_LAYERS, 1, D_FF)),
        "w2":   nrm(next(ki), (N_LAYERS, D_FF, D_MODEL)),
        "b2":   nrm(next(ki), (N_LAYERS, 1, D_MODEL)),
        "lnf":  jnp.concatenate([jnp.ones((1, D_MODEL), jnp.float32),
                                 jnp.zeros((1, D_MODEL), jnp.float32)], axis=0),
        "wfc":  nrm(next(ki), (D_MODEL, N_TAGS)),
        "bfc":  nrm(next(ki), (1, N_TAGS)),
    }
    return params


def pack_params(p):
    """One-time packing of all parameters into two (8,128)-aligned f32 slabs."""
    scale = 1.0 / math.sqrt(D_K)
    # fold the softmax scale into the Q columns of the fused QKV projection
    wqkv = p["wqkv"].at[:, :, :D_MODEL].multiply(scale)
    bqkv = p["bqkv"].at[:, :, :D_MODEL].multiply(scale)

    wslab = jnp.zeros((N_LAYERS, LAYER_ROWS, LANES), jnp.float32)
    wslab = wslab.at[:, R_WQKV:R_WQKV + D_MODEL, 0:3 * D_MODEL].set(wqkv)
    wslab = wslab.at[:, R_W1:R_W1 + D_MODEL, 0:D_FF].set(p["w1"])
    wslab = wslab.at[:, R_W2:R_W2 + D_FF, 0:D_MODEL].set(p["w2"])
    wslab = wslab.at[:, R_WO:R_WO + D_MODEL, 0:D_MODEL].set(p["wo"])
    wslab = wslab.at[:, R_VEC + 0:R_VEC + 1, 0:3 * D_MODEL].set(bqkv)
    wslab = wslab.at[:, R_VEC + 1:R_VEC + 2, 0:D_MODEL].set(p["bo"])
    wslab = wslab.at[:, R_VEC + 2:R_VEC + 3, 0:D_FF].set(p["b1"])
    wslab = wslab.at[:, R_VEC + 3:R_VEC + 4, 0:D_MODEL].set(p["b2"])
    wslab = wslab.at[:, R_VEC + 4:R_VEC + 8, 0:D_MODEL].set(p["ln"])

    hslab = jnp.zeros((HEAD_ROWS, LANES), jnp.float32)
    hslab = hslab.at[H_WFC:H_WFC + D_MODEL, 0:N_TAGS].set(p["wfc"])
    hslab = hslab.at[H_BFC, N_TAGS:].set(NEG_INF)              # pad-column logit bias
    hslab = hslab.at[H_BFC:H_BFC + 1, 0:N_TAGS].set(p["bfc"])
    hslab = hslab.at[H_LNF:H_LNF + 2, 0:D_MODEL].set(p["lnf"])
    blk = jnp.where(jnp.kron(jnp.eye(BATCH), jnp.ones((SEQ, SEQ))) > 0.5, 0.0, NEG_INF)
    hslab = hslab.at[H_BLK:H_BLK + BS, 0:BS].set(blk.astype(jnp.float32))

    return {"lut": p["lut"], "wslab": wslab, "hslab": hslab}


# --------------------------- pure-JAX reference (for verification) ---------------------------

def _pt_layernorm_ref(x, a, b):
    mean = jnp.mean(x, axis=-1, keepdims=True)
    var = jnp.sum((x - mean) ** 2, axis=-1, keepdims=True) / (x.shape[-1] - 1)
    return a * (x - mean) / (jnp.sqrt(var) + EPS) + b


def reference_forward(tokens, params):
    B, S = tokens.shape
    mask = (tokens != 0).astype(jnp.float32)
    x = params["lut"][tokens] * math.sqrt(D_MODEL)
    x = x + positional_encoding(S, D_MODEL)[None]
    for l in range(N_LAYERS):
        wqkv, bqkv = params["wqkv"][l], params["bqkv"][l]
        wq, wk, wv = wqkv[:, :D_MODEL], wqkv[:, D_MODEL:2 * D_MODEL], wqkv[:, 2 * D_MODEL:]
        bq, bk, bv = bqkv[:, :D_MODEL], bqkv[:, D_MODEL:2 * D_MODEL], bqkv[:, 2 * D_MODEL:]
        ln = params["ln"][l]
        y = _pt_layernorm_ref(x, ln[0], ln[1])
        q, k, v = y @ wq + bq, y @ wk + bk, y @ wv + bv
        qh = q.reshape(B, S, N_HEADS, D_K).transpose(0, 2, 1, 3)
        kh = k.reshape(B, S, N_HEADS, D_K).transpose(0, 2, 1, 3)
        vh = v.reshape(B, S, N_HEADS, D_K).transpose(0, 2, 1, 3)
        scores = jnp.einsum("bhqd,bhkd->bhqk", qh, kh) / math.sqrt(D_K)
        scores = jnp.where(mask[:, None, None, :] == 0.0, NEG_INF, scores)
        p = jax.nn.softmax(scores, axis=-1)
        o = jnp.einsum("bhqk,bhkd->bhqd", p, vh).transpose(0, 2, 1, 3).reshape(B, S, D_MODEL)
        x = x + (o @ params["wo"][l] + params["bo"][l])
        y2 = _pt_layernorm_ref(x, ln[2], ln[3])
        x = x + (jnp.maximum(y2 @ params["w1"][l] + params["b1"][l], 0.0) @ params["w2"][l]
                 + params["b2"][l])
    logits = (_pt_layernorm_ref(x, params["lnf"][0], params["lnf"][1]) @ params["wfc"]
              + params["bfc"])
    return jax.nn.log_softmax(logits, axis=-1)


if __name__ == "__main__":
    key = jax.random.PRNGKey(0)
    k_tok, k_par = jax.random.split(key)
    # token ids in [0, VOCAB); id 0 acts as padding and is masked out in attention
    tokens = jax.random.randint(k_tok, (BATCH, SEQ), 0, VOCAB, dtype=jnp.int32)
    tokens = tokens.at[1, SEQ - 2:].set(0)   # ensure some padding so the mask matters
    params = init_params(k_par)
    packed = pack_params(params)             # one-time, outside the jitted forward

    out = transformer_forward(tokens, packed)
    out = jax.block_until_ready(out)

    ref = reference_forward(tokens, params)
    assert out.shape == (BATCH, SEQ, N_TAGS)
    assert bool(jnp.all(jnp.isfinite(out)))
    assert bool(jnp.allclose(out, ref, atol=1e-3, rtol=1e-3))
    print("KERNEL_OK")
</pallas_src>

<mosaic_0001>
module attributes {stable_mosaic.version = 11 : i64} {
  func.func @fused_transformer_kernel(%arg0: i32, %arg1: memref<16x32xf32, #tpu.memory_space<vmem>>, %arg2: memref<1x16xf32, #tpu.memory_space<vmem>>, %arg3: memref<2x168x128xf32, #tpu.memory_space<vmem>>, %arg4: memref<56x128xf32, #tpu.memory_space<vmem>>, %arg5: memref<16x128xf32, #tpu.memory_space<vmem>>) attributes {dimension_semantics = [#tpu.dimension_semantics<arbitrary>], iteration_bounds = array<i64: 1>, scalar_prefetch = 0 : i64, scratch_operands = 0 : i64, tpu.core_type = #tpu.core_type<tc>, window_params = [{pipeline_mode = #tpu.pipeline_mode<synchronous>, transform_indices = @transform_0, window_bounds = array<i64: 16, 32>}, {pipeline_mode = #tpu.pipeline_mode<synchronous>, transform_indices = @transform_1, window_bounds = array<i64: 1, 16>}, {pipeline_mode = #tpu.pipeline_mode<synchronous>, transform_indices = @transform_2, window_bounds = array<i64: 2, 168, 128>}, {pipeline_mode = #tpu.pipeline_mode<synchronous>, transform_indices = @transform_3, window_bounds = array<i64: 56, 128>}, {pipeline_mode = #tpu.pipeline_mode<synchronous>, transform_indices = @transform_4, window_bounds = array<i64: 16, 128>}]} {
    %c0 = arith.constant 0 : index
    %c0_0 = arith.constant 0 : index
    %0 = vector.load %arg1[%c0, %c0_0] : memref<16x32xf32, #tpu.memory_space<vmem>>, vector<16x32xf32>
    %c40 = arith.constant 40 : index
    %c0_1 = arith.constant 0 : index
    %1 = vector.load %arg4[%c40, %c0_1] : memref<56x128xf32, #tpu.memory_space<vmem>>, vector<16x16xf32>
    %c0_2 = arith.constant 0 : index
    %c0_3 = arith.constant 0 : index
    %2 = vector.load %arg2[%c0_2, %c0_3] : memref<1x16xf32, #tpu.memory_space<vmem>>, vector<1x16xf32>
    %cst = arith.constant 0.000000e+00 : f32
    %3 = vector.broadcast %cst : f32 to vector<1x16xf32>
    %4 = arith.cmpf one, %2, %3 : vector<1x16xf32>
    %cst_4 = arith.constant -1.000000e+09 : f32
    %5 = vector.shape_cast %4 : vector<1x16xi1> to vector<1x16xi1>
    %6 = vector.broadcast %5 : vector<1x16xi1> to vector<16x16xi1>
    %7 = vector.broadcast %cst_4 : f32 to vector<16x16xf32>
    %8 = arith.select %6, %1, %7 : vector<16x16xi1>, vector<16x16xf32>
    %c0_5 = arith.constant 0 : index
    %c0_6 = arith.constant 0 : index
    %c0_7 = arith.constant 0 : index
    %9 = vector.load %arg3[%c0_5, %c0_6, %c0_7] : memref<2x168x128xf32, #tpu.memory_space<vmem>>, vector<1x32x96xf32>
    %10 = vector.shape_cast %9 : vector<1x32x96xf32> to vector<32x96xf32>
    %c0_8 = arith.constant 0 : index
    %c32 = arith.constant 32 : index
    %c0_9 = arith.constant 0 : index
    %11 = vector.load %arg3[%c0_8, %c32, %c0_9] : memref<2x168x128xf32, #tpu.memory_space<vmem>>, vector<1x32x64xf32>
    %12 = vector.shape_cast %11 : vector<1x32x64xf32> to vector<32x64xf32>
    %c0_10 = arith.constant 0 : index
    %c64 = arith.constant 64 : index
    %c0_11 = arith.constant 0 : index
    %13 = vector.load %arg3[%c0_10, %c64, %c0_11] : memref<2x168x128xf32, #tpu.memory_space<vmem>>, vector<1x64x32xf32>
    %14 = vector.shape_cast %13 : vector<1x64x32xf32> to vector<64x32xf32>
    %c0_12 = arith.constant 0 : index
    %c160 = arith.constant 160 : index
    %c0_13 = arith.constant 0 : index
    %15 = vector.load %arg3[%c0_12, %c160, %c0_13] : memref<2x168x128xf32, #tpu.memory_space<vmem>>, vector<1x1x96xf32>
    %16 = vector.shape_cast %15 : vector<1x1x96xf32> to vector<1x96xf32>
    %c0_14 = arith.constant 0 : index
    %c161 = arith.constant 161 : index
    %c0_15 = arith.constant 0 : index
    %17 = vector.load %arg3[%c0_14, %c161, %c0_15] : memref<2x168x128xf32, #tpu.memory_space<vmem>>, vector<1x1x32xf32>
    %18 = vector.shape_cast %17 : vector<1x1x32xf32> to vector<1x32xf32>
    %c0_16 = arith.constant 0 : index
    %c162 = arith.constant 162 : index
    %c0_17 = arith.constant 0 : index
    %19 = vector.load %arg3[%c0_16, %c162, %c0_17] : memref<2x168x128xf32, #tpu.memory_space<vmem>>, vector<1x1x64xf32>
    %20 = vector.shape_cast %19 : vector<1x1x64xf32> to vector<1x64xf32>
    %c0_18 = arith.constant 0 : index
    %c163 = arith.constant 163 : index
    %c0_19 = arith.constant 0 : index
    %21 = vector.load %arg3[%c0_18, %c163, %c0_19] : memref<2x168x128xf32, #tpu.memory_space<vmem>>, vector<1x1x32xf32>
    %22 = vector.shape_cast %21 : vector<1x1x32xf32> to vector<1x32xf32>
    %c0_20 = arith.constant 0 : index
    %c164 = arith.constant 164 : index
    %c0_21 = arith.constant 0 : index
    %23 = vector.load %arg3[%c0_20, %c164, %c0_21] : memref<2x168x128xf32, #tpu.memory_space<vmem>>, vector<1x1x32xf32>
    %24 = vector.shape_cast %23 : vector<1x1x32xf32> to vector<1x32xf32>
    %c0_22 = arith.constant 0 : index
    %c165 = arith.constant 165 : index
    %c0_23 = arith.constant 0 : index
    %25 = vector.load %arg3[%c0_22, %c165, %c0_23] : memref<2x168x128xf32, #tpu.memory_space<vmem>>, vector<1x1x32xf32>
    %26 = vector.shape_cast %25 : vector<1x1x32xf32> to vector<1x32xf32>
    %c0_24 = arith.constant 0 : index
    %c166 = arith.constant 166 : index
    %c0_25 = arith.constant 0 : index
    %27 = vector.load %arg3[%c0_24, %c166, %c0_25] : memref<2x168x128xf32, #tpu.memory_space<vmem>>, vector<1x1x32xf32>
    %28 = vector.shape_cast %27 : vector<1x1x32xf32> to vector<1x32xf32>
    %c0_26 = arith.constant 0 : index
    %c167 = arith.constant 167 : index
    %c0_27 = arith.constant 0 : index
    %29 = vector.load %arg3[%c0_26, %c167, %c0_27] : memref<2x168x128xf32, #tpu.memory_space<vmem>>, vector<1x1x32xf32>
    %30 = vector.shape_cast %29 : vector<1x1x32xf32> to vector<1x32xf32>
    %cst_28 = arith.constant dense<0.000000e+00> : vector<16xf32>
    %31 = vector.multi_reduction <add>, %0, %cst_28 [1] : vector<16x32xf32> to vector<16xf32>
    %32 = vector.shape_cast %31 : vector<16xf32> to vector<16x1xf32>
    %cst_29 = arith.constant 3.200000e+01 : f32
    %33 = vector.broadcast %cst_29 : f32 to vector<16x1xf32>
    %34 = arith.divf %32, %33 : vector<16x1xf32>
    %35 = vector.broadcast %34 : vector<16x1xf32> to vector<16x32xf32>
    %36 = arith.subf %0, %35 : vector<16x32xf32>
    %37 = arith.mulf %36, %36 : vector<16x32xf32>
    %cst_30 = arith.constant dense<0.000000e+00> : vector<16xf32>
    %38 = vector.multi_reduction <add>, %37, %cst_30 [1] : vector<16x32xf32> to vector<16xf32>
    %39 = vector.shape_cast %38 : vector<16xf32> to vector<16x1xf32>
    %cst_31 = arith.constant 0.0322580636 : f32
    %40 = vector.broadcast %cst_31 : f32 to vector<16x1xf32>
    %41 = arith.mulf %39, %40 : vector<16x1xf32>
    %42 = math.sqrt %41 : vector<16x1xf32>
    %cst_32 = arith.constant 9.99999997E-7 : f32
    %43 = vector.broadcast %cst_32 : f32 to vector<16x1xf32>
    %44 = arith.addf %42, %43 : vector<16x1xf32>
    %45 = tpu.reciprocal %44 : vector<16x1xf32> -> vector<16x1xf32>
    %46 = vector.broadcast %34 : vector<16x1xf32> to vector<16x32xf32>
    %47 = arith.subf %0, %46 : vector<16x32xf32>
    %48 = vector.broadcast %45 : vector<16x1xf32> to vector<16x32xf32>
    %49 = arith.mulf %47, %48 : vector<16x32xf32>
    %50 = vector.broadcast %24 : vector<1x32xf32> to vector<16x32xf32>
    %51 = arith.mulf %50, %49 : vector<16x32xf32>
    %52 = vector.broadcast %26 : vector<1x32xf32> to vector<16x32xf32>
    %53 = arith.addf %51, %52 : vector<16x32xf32>
    %cst_33 = arith.constant dense<0.000000e+00> : vector<16x96xf32>
    %54 = tpu.matmul %53, %10, %cst_33 {dimension_numbers = #tpu.dot_dimension_numbers<[1], [0], [0], [1], [0, 0, 1, 1], [], []>} : vector<16x32xf32>, vector<32x96xf32>, vector<16x96xf32> -> vector<16x96xf32>
    %55 = vector.broadcast %16 : vector<1x96xf32> to vector<16x96xf32>
    %56 = arith.addf %54, %55 : vector<16x96xf32>
    %cst_34 = arith.constant 0.000000e+00 : f32
    %57 = vector.broadcast %cst_34 : f32 to vector<16x32xf32>
    %58 = vector.extract_strided_slice %56 {offsets = [0, 0], sizes = [16, 8], strides = [1, 1]} : vector<16x96xf32> to vector<16x8xf32>
    %59 = vector.extract_strided_slice %56 {offsets = [0, 32], sizes = [16, 8], strides = [1, 1]} : vector<16x96xf32> to vector<16x8xf32>
    %60 = vector.extract_strided_slice %56 {offsets = [0, 64], sizes = [16, 8], strides = [1, 1]} : vector<16x96xf32> to vector<16x8xf32>
    %cst_35 = arith.constant dense<0.000000e+00> : vector<16x16xf32>
    %61 = tpu.matmul %58, %59, %cst_35 {dimension_numbers = #tpu.dot_dimension_numbers<[1], [1], [0], [0], [0, 0, 1, 0], [], []>} : vector<16x8xf32>, vector<16x8xf32>, vector<16x16xf32> -> vector<16x16xf32>
    %62 = arith.addf %61, %8 : vector<16x16xf32>
    %cst_36 = arith.constant dense<0xFF800000> : vector<16xf32>
    %63 = vector.multi_reduction <maximumf>, %62, %cst_36 [1] : vector<16x16xf32> to vector<16xf32>
    %64 = vector.shape_cast %63 : vector<16xf32> to vector<16x1xf32>
    %65 = vector.broadcast %64 : vector<16x1xf32> to vector<16x16xf32>
    %66 = arith.subf %62, %65 : vector<16x16xf32>
    %67 = math.exp %66 : vector<16x16xf32>
    %cst_37 = arith.constant dense<0.000000e+00> : vector<16xf32>
    %68 = vector.multi_reduction <add>, %67, %cst_37 [1] : vector<16x16xf32> to vector<16xf32>
    %69 = vector.shape_cast %68 : vector<16xf32> to vector<16x1xf32>
    %70 = tpu.reciprocal %69 {approx = true} : vector<16x1xf32> -> vector<16x1xf32>
    %71 = vector.broadcast %70 : vector<16x1xf32> to vector<16x16xf32>
    %72 = arith.mulf %67, %71 : vector<16x16xf32>
    %cst_38 = arith.constant dense<0.000000e+00> : vector<16x8xf32>
    %73 = tpu.matmul %72, %60, %cst_38 {dimension_numbers = #tpu.dot_dimension_numbers<[1], [0], [0], [1], [0, 0, 1, 1], [], []>} : vector<16x16xf32>, vector<16x8xf32>, vector<16x8xf32> -> vector<16x8xf32>
    %c0_39 = arith.constant 0 : index
    %c128 = arith.constant 128 : index
    %c0_40 = arith.constant 0 : index
    %74 = vector.load %arg3[%c0_39, %c128, %c0_40] : memref<2x168x128xf32, #tpu.memory_space<vmem>>, vector<1x8x32xf32>
    %75 = vector.shape_cast %74 : vector<1x8x32xf32> to vector<8x32xf32>
    %cst_41 = arith.constant dense<0.000000e+00> : vector<16x32xf32>
    %76 = tpu.matmul %73, %75, %cst_41 {dimension_numbers = #tpu.dot_dimension_numbers<[1], [0], [0], [1], [0, 0, 1, 1], [], []>} : vector<16x8xf32>, vector<8x32xf32>, vector<16x32xf32> -> vector<16x32xf32>
    %77 = arith.addf %57, %76 : vector<16x32xf32>
    %78 = vector.extract_strided_slice %56 {offsets = [0, 8], sizes = [16, 8], strides = [1, 1]} : vector<16x96xf32> to vector<16x8xf32>
    %79 = vector.extract_strided_slice %56 {offsets = [0, 40], sizes = [16, 8], strides = [1, 1]} : vector<16x96xf32> to vector<16x8xf32>
    %80 = vector.extract_strided_slice %56 {offsets = [0, 72], sizes = [16, 8], strides = [1, 1]} : vector<16x96xf32> to vector<16x8xf32>
    %cst_42 = arith.constant dense<0.000000e+00> : vector<16x16xf32>
    %81 = tpu.matmul %78, %79, %cst_42 {dimension_numbers = #tpu.dot_dimension_numbers<[1], [1], [0], [0], [0, 0, 1, 0], [], []>} : vector<16x8xf32>, vector<16x8xf32>, vector<16x16xf32> -> vector<16x16xf32>
    %82 = arith.addf %81, %8 : vector<16x16xf32>
    %cst_43 = arith.constant dense<0xFF800000> : vector<16xf32>
    %83 = vector.multi_reduction <maximumf>, %82, %cst_43 [1] : vector<16x16xf32> to vector<16xf32>
    %84 = vector.shape_cast %83 : vector<16xf32> to vector<16x1xf32>
    %85 = vector.broadcast %84 : vector<16x1xf32> to vector<16x16xf32>
    %86 = arith.subf %82, %85 : vector<16x16xf32>
    %87 = math.exp %86 : vector<16x16xf32>
    %cst_44 = arith.constant dense<0.000000e+00> : vector<16xf32>
    %88 = vector.multi_reduction <add>, %87, %cst_44 [1] : vector<16x16xf32> to vector<16xf32>
    %89 = vector.shape_cast %88 : vector<16xf32> to vector<16x1xf32>
    %90 = tpu.reciprocal %89 {approx = true} : vector<16x1xf32> -> vector<16x1xf32>
    %91 = vector.broadcast %90 : vector<16x1xf32> to vector<16x16xf32>
    %92 = arith.mulf %87, %91 : vector<16x16xf32>
    %cst_45 = arith.constant dense<0.000000e+00> : vector<16x8xf32>
    %93 = tpu.matmul %92, %80, %cst_45 {dimension_numbers = #tpu.dot_dimension_numbers<[1], [0], [0], [1], [0, 0, 1, 1], [], []>} : vector<16x16xf32>, vector<16x8xf32>, vector<16x8xf32> -> vector<16x8xf32>
    %c0_46 = arith.constant 0 : index
    %c136 = arith.constant 136 : index
    %c0_47 = arith.constant 0 : index
    %94 = vector.load %arg3[%c0_46, %c136, %c0_47] : memref<2x168x128xf32, #tpu.memory_space<vmem>>, vector<1x8x32xf32>
    %95 = vector.shape_cast %94 : vector<1x8x32xf32> to vector<8x32xf32>
    %cst_48 = arith.constant dense<0.000000e+00> : vector<16x32xf32>
    %96 = tpu.matmul %93, %95, %cst_48 {dimension_numbers = #tpu.dot_dimension_numbers<[1], [0], [0], [1], [0, 0, 1, 1], [], []>} : vector<16x8xf32>, vector<8x32xf32>, vector<16x32xf32> -> vector<16x32xf32>
    %97 = arith.addf %77, %96 : vector<16x32xf32>
    %98 = vector.extract_strided_slice %56 {offsets = [0, 16], sizes = [16, 8], strides = [1, 1]} : vector<16x96xf32> to vector<16x8xf32>
    %99 = vector.extract_strided_slice %56 {offsets = [0, 48], sizes = [16, 8], strides = [1, 1]} : vector<16x96xf32> to vector<16x8xf32>
    %100 = vector.extract_strided_slice %56 {offsets = [0, 80], sizes = [16, 8], strides = [1, 1]} : vector<16x96xf32> to vector<16x8xf32>
    %cst_49 = arith.constant dense<0.000000e+00> : vector<16x16xf32>
    %101 = tpu.matmul %98, %99, %cst_49 {dimension_numbers = #tpu.dot_dimension_numbers<[1], [1], [0], [0], [0, 0, 1, 0], [], []>} : vector<16x8xf32>, vector<16x8xf32>, vector<16x16xf32> -> vector<16x16xf32>
    %102 = arith.addf %101, %8 : vector<16x16xf32>
    %cst_50 = arith.constant dense<0xFF800000> : vector<16xf32>
    %103 = vector.multi_reduction <maximumf>, %102, %cst_50 [1] : vector<16x16xf32> to vector<16xf32>
    %104 = vector.shape_cast %103 : vector<16xf32> to vector<16x1xf32>
    %105 = vector.broadcast %104 : vector<16x1xf32> to vector<16x16xf32>
    %106 = arith.subf %102, %105 : vector<16x16xf32>
    %107 = math.exp %106 : vector<16x16xf32>
    %cst_51 = arith.constant dense<0.000000e+00> : vector<16xf32>
    %108 = vector.multi_reduction <add>, %107, %cst_51 [1] : vector<16x16xf32> to vector<16xf32>
    %109 = vector.shape_cast %108 : vector<16xf32> to vector<16x1xf32>
    %110 = tpu.reciprocal %109 {approx = true} : vector<16x1xf32> -> vector<16x1xf32>
    %111 = vector.broadcast %110 : vector<16x1xf32> to vector<16x16xf32>
    %112 = arith.mulf %107, %111 : vector<16x16xf32>
    %cst_52 = arith.constant dense<0.000000e+00> : vector<16x8xf32>
    %113 = tpu.matmul %112, %100, %cst_52 {dimension_numbers = #tpu.dot_dimension_numbers<[1], [0], [0], [1], [0, 0, 1, 1], [], []>} : vector<16x16xf32>, vector<16x8xf32>, vector<16x8xf32> -> vector<16x8xf32>
    %c0_53 = arith.constant 0 : index
    %c144 = arith.constant 144 : index
    %c0_54 = arith.constant 0 : index
    %114 = vector.load %arg3[%c0_53, %c144, %c0_54] : memref<2x168x128xf32, #tpu.memory_space<vmem>>, vector<1x8x32xf32>
    %115 = vector.shape_cast %114 : vector<1x8x32xf32> to vector<8x32xf32>
    %cst_55 = arith.constant dense<0.000000e+00> : vector<16x32xf32>
    %116 = tpu.matmul %113, %115, %cst_55 {dimension_numbers = #tpu.dot_dimension_numbers<[1], [0], [0], [1], [0, 0, 1, 1], [], []>} : vector<16x8xf32>, vector<8x32xf32>, vector<16x32xf32> -> vector<16x32xf32>
    %117 = arith.addf %97, %116 : vector<16x32xf32>
    %118 = vector.extract_strided_slice %56 {offsets = [0, 24], sizes = [16, 8], strides = [1, 1]} : vector<16x96xf32> to vector<16x8xf32>
    %119 = vector.extract_strided_slice %56 {offsets = [0, 56], sizes = [16, 8], strides = [1, 1]} : vector<16x96xf32> to vector<16x8xf32>
    %120 = vector.extract_strided_slice %56 {offsets = [0, 88], sizes = [16, 8], strides = [1, 1]} : vector<16x96xf32> to vector<16x8xf32>
    %cst_56 = arith.constant dense<0.000000e+00> : vector<16x16xf32>
    %121 = tpu.matmul %118, %119, %cst_56 {dimension_numbers = #tpu.dot_dimension_numbers<[1], [1], [0], [0], [0, 0, 1, 0], [], []>} : vector<16x8xf32>, vector<16x8xf32>, vector<16x16xf32> -> vector<16x16xf32>
    %122 = arith.addf %121, %8 : vector<16x16xf32>
    %cst_57 = arith.constant dense<0xFF800000> : vector<16xf32>
    %123 = vector.multi_reduction <maximumf>, %122, %cst_57 [1] : vector<16x16xf32> to vector<16xf32>
    %124 = vector.shape_cast %123 : vector<16xf32> to vector<16x1xf32>
    %125 = vector.broadcast %124 : vector<16x1xf32> to vector<16x16xf32>
    %126 = arith.subf %122, %125 : vector<16x16xf32>
    %127 = math.exp %126 : vector<16x16xf32>
    %cst_58 = arith.constant dense<0.000000e+00> : vector<16xf32>
    %128 = vector.multi_reduction <add>, %127, %cst_58 [1] : vector<16x16xf32> to vector<16xf32>
    %129 = vector.shape_cast %128 : vector<16xf32> to vector<16x1xf32>
    %130 = tpu.reciprocal %129 {approx = true} : vector<16x1xf32> -> vector<16x1xf32>
    %131 = vector.broadcast %130 : vector<16x1xf32> to vector<16x16xf32>
    %132 = arith.mulf %127, %131 : vector<16x16xf32>
    %cst_59 = arith.constant dense<0.000000e+00> : vector<16x8xf32>
    %133 = tpu.matmul %132, %120, %cst_59 {dimension_numbers = #tpu.dot_dimension_numbers<[1], [0], [0], [1], [0, 0, 1, 1], [], []>} : vector<16x16xf32>, vector<16x8xf32>, vector<16x8xf32> -> vector<16x8xf32>
    %c0_60 = arith.constant 0 : index
    %c152 = arith.constant 152 : index
    %c0_61 = arith.constant 0 : index
    %134 = vector.load %arg3[%c0_60, %c152, %c0_61] : memref<2x168x128xf32, #tpu.memory_space<vmem>>, vector<1x8x32xf32>
    %135 = vector.shape_cast %134 : vector<1x8x32xf32> to vector<8x32xf32>
    %cst_62 = arith.constant dense<0.000000e+00> : vector<16x32xf32>
    %136 = tpu.matmul %133, %135, %cst_62 {dimension_numbers = #tpu.dot_dimension_numbers<[1], [0], [0], [1], [0, 0, 1, 1], [], []>} : vector<16x8xf32>, vector<8x32xf32>, vector<16x32xf32> -> vector<16x32xf32>
    %137 = arith.addf %117, %136 : vector<16x32xf32>
    %138 = arith.addf %0, %137 : vector<16x32xf32>
    %139 = vector.broadcast %18 : vector<1x32xf32> to vector<16x32xf32>
    %140 = arith.addf %138, %139 : vector<16x32xf32>
    %cst_63 = arith.constant dense<0.000000e+00> : vector<16xf32>
    %141 = vector.multi_reduction <add>, %140, %cst_63 [1] : vector<16x32xf32> to vector<16xf32>
    %142 = vector.shape_cast %141 : vector<16xf32> to vector<16x1xf32>
    %cst_64 = arith.constant 3.200000e+01 : f32
    %143 = vector.broadcast %cst_64 : f32 to vector<16x1xf32>
    %144 = arith.divf %142, %143 : vector<16x1xf32>
    %145 = vector.broadcast %144 : vector<16x1xf32> to vector<16x32xf32>
    %146 = arith.subf %140, %145 : vector<16x32xf32>
    %147 = arith.mulf %146, %146 : vector<16x32xf32>
    %cst_65 = arith.constant dense<0.000000e+00> : vector<16xf32>
    %148 = vector.multi_reduction <add>, %147, %cst_65 [1] : vector<16x32xf32> to vector<16xf32>
    %149 = vector.shape_cast %148 : vector<16xf32> to vector<16x1xf32>
    %cst_66 = arith.constant 0.0322580636 : f32
    %150 = vector.broadcast %cst_66 : f32 to vector<16x1xf32>
    %151 = arith.mulf %149, %150 : vector<16x1xf32>
    %152 = math.sqrt %151 : vector<16x1xf32>
    %cst_67 = arith.constant 9.99999997E-7 : f32
    %153 = vector.broadcast %cst_67 : f32 to vector<16x1xf32>
    %154 = arith.addf %152, %153 : vector<16x1xf32>
    %155 = tpu.reciprocal %154 : vector<16x1xf32> -> vector<16x1xf32>
    %156 = vector.broadcast %144 : vector<16x1xf32> to vector<16x32xf32>
    %157 = arith.subf %140, %156 : vector<16x32xf32>
    %158 = vector.broadcast %155 : vector<16x1xf32> to vector<16x32xf32>
    %159 = arith.mulf %157, %158 : vector<16x32xf32>
    %160 = vector.broadcast %28 : vector<1x32xf32> to vector<16x32xf32>
    %161 = arith.mulf %160, %159 : vector<16x32xf32>
    %162 = vector.broadcast %30 : vector<1x32xf32> to vector<16x32xf32>
    %163 = arith.addf %161, %162 : vector<16x32xf32>
    %cst_68 = arith.constant dense<0.000000e+00> : vector<16x64xf32>
    %164 = tpu.matmul %163, %12, %cst_68 {dimension_numbers = #tpu.dot_dimension_numbers<[1], [0], [0], [1], [0, 0, 1, 1], [], []>} : vector<16x32xf32>, vector<32x64xf32>, vector<16x64xf32> -> vector<16x64xf32>
    %165 = vector.broadcast %20 : vector<1x64xf32> to vector<16x64xf32>
    %166 = arith.addf %164, %165 : vector<16x64xf32>
    %cst_69 = arith.constant 0.000000e+00 : f32
    %167 = vector.broadcast %cst_69 : f32 to vector<16x64xf32>
    %168 = arith.maximumf %166, %167 : vector<16x64xf32>
    %cst_70 = arith.constant dense<0.000000e+00> : vector<16x32xf32>
    %169 = tpu.matmul %168, %14, %cst_70 {dimension_numbers = #tpu.dot_dimension_numbers<[1], [0], [0], [1], [0, 0, 1, 1], [], []>} : vector<16x64xf32>, vector<64x32xf32>, vector<16x32xf32> -> vector<16x32xf32>
    %170 = arith.addf %140, %169 : vector<16x32xf32>
    %171 = vector.broadcast %22 : vector<1x32xf32> to vector<16x32xf32>
    %172 = arith.addf %170, %171 : vector<16x32xf32>
    %c1 = arith.constant 1 : index
    %c0_71 = arith.constant 0 : index
    %c0_72 = arith.constant 0 : index
    %173 = vector.load %arg3[%c1, %c0_71, %c0_72] : memref<2x168x128xf32, #tpu.memory_space<vmem>>, vector<1x32x96xf32>
    %174 = vector.shape_cast %173 : vector<1x32x96xf32> to vector<32x96xf32>
    %c1_73 = arith.constant 1 : index
    %c32_74 = arith.constant 32 : index
    %c0_75 = arith.constant 0 : index
    %175 = vector.load %arg3[%c1_73, %c32_74, %c0_75] : memref<2x168x128xf32, #tpu.memory_space<vmem>>, vector<1x32x64xf32>
    %176 = vector.shape_cast %175 : vector<1x32x64xf32> to vector<32x64xf32>
    %c1_76 = arith.constant 1 : index
    %c64_77 = arith.constant 64 : index
    %c0_78 = arith.constant 0 : index
    %177 = vector.load %arg3[%c1_76, %c64_77, %c0_78] : memref<2x168x128xf32, #tpu.memory_space<vmem>>, vector<1x64x32xf32>
    %178 = vector.shape_cast %177 : vector<1x64x32xf32> to vector<64x32xf32>
    %c1_79 = arith.constant 1 : index
    %c160_80 = arith.constant 160 : index
    %c0_81 = arith.constant 0 : index
    %179 = vector.load %arg3[%c1_79, %c160_80, %c0_81] : memref<2x168x128xf32, #tpu.memory_space<vmem>>, vector<1x1x96xf32>
    %180 = vector.shape_cast %179 : vector<1x1x96xf32> to vector<1x96xf32>
    %c1_82 = arith.constant 1 : index
    %c161_83 = arith.constant 161 : index
    %c0_84 = arith.constant 0 : index
    %181 = vector.load %arg3[%c1_82, %c161_83, %c0_84] : memref<2x168x128xf32, #tpu.memory_space<vmem>>, vector<1x1x32xf32>
    %182 = vector.shape_cast %181 : vector<1x1x32xf32> to vector<1x32xf32>
    %c1_85 = arith.constant 1 : index
    %c162_86 = arith.constant 162 : index
    %c0_87 = arith.constant 0 : index
    %183 = vector.load %arg3[%c1_85, %c162_86, %c0_87] : memref<2x168x128xf32, #tpu.memory_space<vmem>>, vector<1x1x64xf32>
    %184 = vector.shape_cast %183 : vector<1x1x64xf32> to vector<1x64xf32>
    %c1_88 = arith.constant 1 : index
    %c163_89 = arith.constant 163 : index
    %c0_90 = arith.constant 0 : index
    %185 = vector.load %arg3[%c1_88, %c163_89, %c0_90] : memref<2x168x128xf32, #tpu.memory_space<vmem>>, vector<1x1x32xf32>
    %186 = vector.shape_cast %185 : vector<1x1x32xf32> to vector<1x32xf32>
    %c1_91 = arith.constant 1 : index
    %c164_92 = arith.constant 164 : index
    %c0_93 = arith.constant 0 : index
    %187 = vector.load %arg3[%c1_91, %c164_92, %c0_93] : memref<2x168x128xf32, #tpu.memory_space<vmem>>, vector<1x1x32xf32>
    %188 = vector.shape_cast %187 : vector<1x1x32xf32> to vector<1x32xf32>
    %c1_94 = arith.constant 1 : index
    %c165_95 = arith.constant 165 : index
    %c0_96 = arith.constant 0 : index
    %189 = vector.load %arg3[%c1_94, %c165_95, %c0_96] : memref<2x168x128xf32, #tpu.memory_space<vmem>>, vector<1x1x32xf32>
    %190 = vector.shape_cast %189 : vector<1x1x32xf32> to vector<1x32xf32>
    %c1_97 = arith.constant 1 : index
    %c166_98 = arith.constant 166 : index
    %c0_99 = arith.constant 0 : index
    %191 = vector.load %arg3[%c1_97, %c166_98, %c0_99] : memref<2x168x128xf32, #tpu.memory_space<vmem>>, vector<1x1x32xf32>
    %192 = vector.shape_cast %191 : vector<1x1x32xf32> to vector<1x32xf32>
    %c1_100 = arith.constant 1 : index
    %c167_101 = arith.constant 167 : index
    %c0_102 = arith.constant 0 : index
    %193 = vector.load %arg3[%c1_100, %c167_101, %c0_102] : memref<2x168x128xf32, #tpu.memory_space<vmem>>, vector<1x1x32xf32>
    %194 = vector.shape_cast %193 : vector<1x1x32xf32> to vector<1x32xf32>
    %cst_103 = arith.constant dense<0.000000e+00> : vector<16xf32>
    %195 = vector.multi_reduction <add>, %172, %cst_103 [1] : vector<16x32xf32> to vector<16xf32>
    %196 = vector.shape_cast %195 : vector<16xf32> to vector<16x1xf32>
    %cst_104 = arith.constant 3.200000e+01 : f32
    %197 = vector.broadcast %cst_104 : f32 to vector<16x1xf32>
    %198 = arith.divf %196, %197 : vector<16x1xf32>
    %199 = vector.broadcast %198 : vector<16x1xf32> to vector<16x32xf32>
    %200 = arith.subf %172, %199 : vector<16x32xf32>
    %201 = arith.mulf %200, %200 : vector<16x32xf32>
    %cst_105 = arith.constant dense<0.000000e+00> : vector<16xf32>
    %202 = vector.multi_reduction <add>, %201, %cst_105 [1] : vector<16x32xf32> to vector<16xf32>
    %203 = vector.shape_cast %202 : vector<16xf32> to vector<16x1xf32>
    %cst_106 = arith.constant 0.0322580636 : f32
    %204 = vector.broadcast %cst_106 : f32 to vector<16x1xf32>
    %205 = arith.mulf %203, %204 : vector<16x1xf32>
    %206 = math.sqrt %205 : vector<16x1xf32>
    %cst_107 = arith.constant 9.99999997E-7 : f32
    %207 = vector.broadcast %cst_107 : f32 to vector<16x1xf32>
    %208 = arith.addf %206, %207 : vector<16x1xf32>
    %209 = tpu.reciprocal %208 : vector<16x1xf32> -> vector<16x1xf32>
    %210 = vector.broadcast %198 : vector<16x1xf32> to vector<16x32xf32>
    %211 = arith.subf %172, %210 : vector<16x32xf32>
    %212 = vector.broadcast %209 : vector<16x1xf32> to vector<16x32xf32>
    %213 = arith.mulf %211, %212 : vector<16x32xf32>
    %214 = vector.broadcast %188 : vector<1x32xf32> to vector<16x32xf32>
    %215 = arith.mulf %214, %213 : vector<16x32xf32>
    %216 = vector.broadcast %190 : vector<1x32xf32> to vector<16x32xf32>
    %217 = arith.addf %215, %216 : vector<16x32xf32>
    %cst_108 = arith.constant dense<0.000000e+00> : vector<16x96xf32>
    %218 = tpu.matmul %217, %174, %cst_108 {dimension_numbers = #tpu.dot_dimension_numbers<[1], [0], [0], [1], [0, 0, 1, 1], [], []>} : vector<16x32xf32>, vector<32x96xf32>, vector<16x96xf32> -> vector<16x96xf32>
    %219 = vector.broadcast %180 : vector<1x96xf32> to vector<16x96xf32>
    %220 = arith.addf %218, %219 : vector<16x96xf32>
    %cst_109 = arith.constant 0.000000e+00 : f32
    %221 = vector.broadcast %cst_109 : f32 to vector<16x32xf32>
    %222 = vector.extract_strided_slice %220 {offsets = [0, 0], sizes = [16, 8], strides = [1, 1]} : vector<16x96xf32> to vector<16x8xf32>
    %223 = vector.extract_strided_slice %220 {offsets = [0, 32], sizes = [16, 8], strides = [1, 1]} : vector<16x96xf32> to vector<16x8xf32>
    %224 = vector.extract_strided_slice %220 {offsets = [0, 64], sizes = [16, 8], strides = [1, 1]} : vector<16x96xf32> to vector<16x8xf32>
    %cst_110 = arith.constant dense<0.000000e+00> : vector<16x16xf32>
    %225 = tpu.matmul %222, %223, %cst_110 {dimension_numbers = #tpu.dot_dimension_numbers<[1], [1], [0], [0], [0, 0, 1, 0], [], []>} : vector<16x8xf32>, vector<16x8xf32>, vector<16x16xf32> -> vector<16x16xf32>
    %226 = arith.addf %225, %8 : vector<16x16xf32>
    %cst_111 = arith.constant dense<0xFF800000> : vector<16xf32>
    %227 = vector.multi_reduction <maximumf>, %226, %cst_111 [1] : vector<16x16xf32> to vector<16xf32>
    %228 = vector.shape_cast %227 : vector<16xf32> to vector<16x1xf32>
    %229 = vector.broadcast %228 : vector<16x1xf32> to vector<16x16xf32>
    %230 = arith.subf %226, %229 : vector<16x16xf32>
    %231 = math.exp %230 : vector<16x16xf32>
    %cst_112 = arith.constant dense<0.000000e+00> : vector<16xf32>
    %232 = vector.multi_reduction <add>, %231, %cst_112 [1] : vector<16x16xf32> to vector<16xf32>
    %233 = vector.shape_cast %232 : vector<16xf32> to vector<16x1xf32>
    %234 = tpu.reciprocal %233 {approx = true} : vector<16x1xf32> -> vector<16x1xf32>
    %235 = vector.broadcast %234 : vector<16x1xf32> to vector<16x16xf32>
    %236 = arith.mulf %231, %235 : vector<16x16xf32>
    %cst_113 = arith.constant dense<0.000000e+00> : vector<16x8xf32>
    %237 = tpu.matmul %236, %224, %cst_113 {dimension_numbers = #tpu.dot_dimension_numbers<[1], [0], [0], [1], [0, 0, 1, 1], [], []>} : vector<16x16xf32>, vector<16x8xf32>, vector<16x8xf32> -> vector<16x8xf32>
    %c1_114 = arith.constant 1 : index
    %c128_115 = arith.constant 128 : index
    %c0_116 = arith.constant 0 : index
    %238 = vector.load %arg3[%c1_114, %c128_115, %c0_116] : memref<2x168x128xf32, #tpu.memory_space<vmem>>, vector<1x8x32xf32>
    %239 = vector.shape_cast %238 : vector<1x8x32xf32> to vector<8x32xf32>
    %cst_117 = arith.constant dense<0.000000e+00> : vector<16x32xf32>
    %240 = tpu.matmul %237, %239, %cst_117 {dimension_numbers = #tpu.dot_dimension_numbers<[1], [0], [0], [1], [0, 0, 1, 1], [], []>} : vector<16x8xf32>, vector<8x32xf32>, vector<16x32xf32> -> vector<16x32xf32>
    %241 = arith.addf %221, %240 : vector<16x32xf32>
    %242 = vector.extract_strided_slice %220 {offsets = [0, 8], sizes = [16, 8], strides = [1, 1]} : vector<16x96xf32> to vector<16x8xf32>
    %243 = vector.extract_strided_slice %220 {offsets = [0, 40], sizes = [16, 8], strides = [1, 1]} : vector<16x96xf32> to vector<16x8xf32>
    %244 = vector.extract_strided_slice %220 {offsets = [0, 72], sizes = [16, 8], strides = [1, 1]} : vector<16x96xf32> to vector<16x8xf32>
    %cst_118 = arith.constant dense<0.000000e+00> : vector<16x16xf32>
    %245 = tpu.matmul %242, %243, %cst_118 {dimension_numbers = #tpu.dot_dimension_numbers<[1], [1], [0], [0], [0, 0, 1, 0], [], []>} : vector<16x8xf32>, vector<16x8xf32>, vector<16x16xf32> -> vector<16x16xf32>
    %246 = arith.addf %245, %8 : vector<16x16xf32>
    %cst_119 = arith.constant dense<0xFF800000> : vector<16xf32>
    %247 = vector.multi_reduction <maximumf>, %246, %cst_119 [1] : vector<16x16xf32> to vector<16xf32>
    %248 = vector.shape_cast %247 : vector<16xf32> to vector<16x1xf32>
    %249 = vector.broadcast %248 : vector<16x1xf32> to vector<16x16xf32>
    %250 = arith.subf %246, %249 : vector<16x16xf32>
    %251 = math.exp %250 : vector<16x16xf32>
    %cst_120 = arith.constant dense<0.000000e+00> : vector<16xf32>
    %252 = vector.multi_reduction <add>, %251, %cst_120 [1] : vector<16x16xf32> to vector<16xf32>
    %253 = vector.shape_cast %252 : vector<16xf32> to vector<16x1xf32>
    %254 = tpu.reciprocal %253 {approx = true} : vector<16x1xf32> -> vector<16x1xf32>
    %255 = vector.broadcast %254 : vector<16x1xf32> to vector<16x16xf32>
    %256 = arith.mulf %251, %255 : vector<16x16xf32>
    %cst_121 = arith.constant dense<0.000000e+00> : vector<16x8xf32>
    %257 = tpu.matmul %256, %244, %cst_121 {dimension_numbers = #tpu.dot_dimension_numbers<[1], [0], [0], [1], [0, 0, 1, 1], [], []>} : vector<16x16xf32>, vector<16x8xf32>, vector<16x8xf32> -> vector<16x8xf32>
    %c1_122 = arith.constant 1 : index
    %c136_123 = arith.constant 136 : index
    %c0_124 = arith.constant 0 : index
    %258 = vector.load %arg3[%c1_122, %c136_123, %c0_124] : memref<2x168x128xf32, #tpu.memory_space<vmem>>, vector<1x8x32xf32>
    %259 = vector.shape_cast %258 : vector<1x8x32xf32> to vector<8x32xf32>
    %cst_125 = arith.constant dense<0.000000e+00> : vector<16x32xf32>
    %260 = tpu.matmul %257, %259, %cst_125 {dimension_numbers = #tpu.dot_dimension_numbers<[1], [0], [0], [1], [0, 0, 1, 1], [], []>} : vector<16x8xf32>, vector<8x32xf32>, vector<16x32xf32> -> vector<16x32xf32>
    %261 = arith.addf %241, %260 : vector<16x32xf32>
    %262 = vector.extract_strided_slice %220 {offsets = [0, 16], sizes = [16, 8], strides = [1, 1]} : vector<16x96xf32> to vector<16x8xf32>
    %263 = vector.extract_strided_slice %220 {offsets = [0, 48], sizes = [16, 8], strides = [1, 1]} : vector<16x96xf32> to vector<16x8xf32>
    %264 = vector.extract_strided_slice %220 {offsets = [0, 80], sizes = [16, 8], strides = [1, 1]} : vector<16x96xf32> to vector<16x8xf32>
    %cst_126 = arith.constant dense<0.000000e+00> : vector<16x16xf32>
    %265 = tpu.matmul %262, %263, %cst_126 {dimension_numbers = #tpu.dot_dimension_numbers<[1], [1], [0], [0], [0, 0, 1, 0], [], []>} : vector<16x8xf32>, vector<16x8xf32>, vector<16x16xf32> -> vector<16x16xf32>
    %266 = arith.addf %265, %8 : vector<16x16xf32>
    %cst_127 = arith.constant dense<0xFF800000> : vector<16xf32>
    %267 = vector.multi_reduction <maximumf>, %266, %cst_127 [1] : vector<16x16xf32> to vector<16xf32>
    %268 = vector.shape_cast %267 : vector<16xf32> to vector<16x1xf32>
    %269 = vector.broadcast %268 : vector<16x1xf32> to vector<16x16xf32>
    %270 = arith.subf %266, %269 : vector<16x16xf32>
    %271 = math.exp %270 : vector<16x16xf32>
    %cst_128 = arith.constant dense<0.000000e+00> : vector<16xf32>
    %272 = vector.multi_reduction <add>, %271, %cst_128 [1] : vector<16x16xf32> to vector<16xf32>
    %273 = vector.shape_cast %272 : vector<16xf32> to vector<16x1xf32>
    %274 = tpu.reciprocal %273 {approx = true} : vector<16x1xf32> -> vector<16x1xf32>
    %275 = vector.broadcast %274 : vector<16x1xf32> to vector<16x16xf32>
    %276 = arith.mulf %271, %275 : vector<16x16xf32>
    %cst_129 = arith.constant dense<0.000000e+00> : vector<16x8xf32>
    %277 = tpu.matmul %276, %264, %cst_129 {dimension_numbers = #tpu.dot_dimension_numbers<[1], [0], [0], [1], [0, 0, 1, 1], [], []>} : vector<16x16xf32>, vector<16x8xf32>, vector<16x8xf32> -> vector<16x8xf32>
    %c1_130 = arith.constant 1 : index
    %c144_131 = arith.constant 144 : index
    %c0_132 = arith.constant 0 : index
    %278 = vector.load %arg3[%c1_130, %c144_131, %c0_132] : memref<2x168x128xf32, #tpu.memory_space<vmem>>, vector<1x8x32xf32>
    %279 = vector.shape_cast %278 : vector<1x8x32xf32> to vector<8x32xf32>
    %cst_133 = arith.constant dense<0.000000e+00> : vector<16x32xf32>
    %280 = tpu.matmul %277, %279, %cst_133 {dimension_numbers = #tpu.dot_dimension_numbers<[1], [0], [0], [1], [0, 0, 1, 1], [], []>} : vector<16x8xf32>, vector<8x32xf32>, vector<16x32xf32> -> vector<16x32xf32>
    %281 = arith.addf %261, %280 : vector<16x32xf32>
    %282 = vector.extract_strided_slice %220 {offsets = [0, 24], sizes = [16, 8], strides = [1, 1]} : vector<16x96xf32> to vector<16x8xf32>
    %283 = vector.extract_strided_slice %220 {offsets = [0, 56], sizes = [16, 8], strides = [1, 1]} : vector<16x96xf32> to vector<16x8xf32>
    %284 = vector.extract_strided_slice %220 {offsets = [0, 88], sizes = [16, 8], strides = [1, 1]} : vector<16x96xf32> to vector<16x8xf32>
    %cst_134 = arith.constant dense<0.000000e+00> : vector<16x16xf32>
    %285 = tpu.matmul %282, %283, %cst_134 {dimension_numbers = #tpu.dot_dimension_numbers<[1], [1], [0], [0], [0, 0, 1, 0], [], []>} : vector<16x8xf32>, vector<16x8xf32>, vector<16x16xf32> -> vector<16x16xf32>
    %286 = arith.addf %285, %8 : vector<16x16xf32>
    %cst_135 = arith.constant dense<0xFF800000> : vector<16xf32>
    %287 = vector.multi_reduction <maximumf>, %286, %cst_135 [1] : vector<16x16xf32> to vector<16xf32>
    %288 = vector.shape_cast %287 : vector<16xf32> to vector<16x1xf32>
    %289 = vector.broadcast %288 : vector<16x1xf32> to vector<16x16xf32>
    %290 = arith.subf %286, %289 : vector<16x16xf32>
    %291 = math.exp %290 : vector<16x16xf32>
    %cst_136 = arith.constant dense<0.000000e+00> : vector<16xf32>
    %292 = vector.multi_reduction <add>, %291, %cst_136 [1] : vector<16x16xf32> to vector<16xf32>
    %293 = vector.shape_cast %292 : vector<16xf32> to vector<16x1xf32>
    %294 = tpu.reciprocal %293 {approx = true} : vector<16x1xf32> -> vector<16x1xf32>
    %295 = vector.broadcast %294 : vector<16x1xf32> to vector<16x16xf32>
    %296 = arith.mulf %291, %295 : vector<16x16xf32>
    %cst_137 = arith.constant dense<0.000000e+00> : vector<16x8xf32>
    %297 = tpu.matmul %296, %284, %cst_137 {dimension_numbers = #tpu.dot_dimension_numbers<[1], [0], [0], [1], [0, 0, 1, 1], [], []>} : vector<16x16xf32>, vector<16x8xf32>, vector<16x8xf32> -> vector<16x8xf32>
    %c1_138 = arith.constant 1 : index
    %c152_139 = arith.constant 152 : index
    %c0_140 = arith.constant 0 : index
    %298 = vector.load %arg3[%c1_138, %c152_139, %c0_140] : memref<2x168x128xf32, #tpu.memory_space<vmem>>, vector<1x8x32xf32>
    %299 = vector.shape_cast %298 : vector<1x8x32xf32> to vector<8x32xf32>
    %cst_141 = arith.constant dense<0.000000e+00> : vector<16x32xf32>
    %300 = tpu.matmul %297, %299, %cst_141 {dimension_numbers = #tpu.dot_dimension_numbers<[1], [0], [0], [1], [0, 0, 1, 1], [], []>} : vector<16x8xf32>, vector<8x32xf32>, vector<16x32xf32> -> vector<16x32xf32>
    %301 = arith.addf %281, %300 : vector<16x32xf32>
    %302 = arith.addf %172, %301 : vector<16x32xf32>
    %303 = vector.broadcast %182 : vector<1x32xf32> to vector<16x32xf32>
    %304 = arith.addf %302, %303 : vector<16x32xf32>
    %cst_142 = arith.constant dense<0.000000e+00> : vector<16xf32>
    %305 = vector.multi_reduction <add>, %304, %cst_142 [1] : vector<16x32xf32> to vector<16xf32>
    %306 = vector.shape_cast %305 : vector<16xf32> to vector<16x1xf32>
    %cst_143 = arith.constant 3.200000e+01 : f32
    %307 = vector.broadcast %cst_143 : f32 to vector<16x1xf32>
    %308 = arith.divf %306, %307 : vector<16x1xf32>
    %309 = vector.broadcast %308 : vector<16x1xf32> to vector<16x32xf32>
    %310 = arith.subf %304, %309 : vector<16x32xf32>
    %311 = arith.mulf %310, %310 : vector<16x32xf32>
    %cst_144 = arith.constant dense<0.000000e+00> : vector<16xf32>
    %312 = vector.multi_reduction <add>, %311, %cst_144 [1] : vector<16x32xf32> to vector<16xf32>
    %313 = vector.shape_cast %312 : vector<16xf32> to vector<16x1xf32>
    %cst_145 = arith.constant 0.0322580636 : f32
    %314 = vector.broadcast %cst_145 : f32 to vector<16x1xf32>
    %315 = arith.mulf %313, %314 : vector<16x1xf32>
    %316 = math.sqrt %315 : vector<16x1xf32>
    %cst_146 = arith.constant 9.99999997E-7 : f32
    %317 = vector.broadcast %cst_146 : f32 to vector<16x1xf32>
    %318 = arith.addf %316, %317 : vector<16x1xf32>
    %319 = tpu.reciprocal %318 : vector<16x1xf32> -> vector<16x1xf32>
    %320 = vector.broadcast %308 : vector<16x1xf32> to vector<16x32xf32>
    %321 = arith.subf %304, %320 : vector<16x32xf32>
    %322 = vector.broadcast %319 : vector<16x1xf32> to vector<16x32xf32>
    %323 = arith.mulf %321, %322 : vector<16x32xf32>
    %324 = vector.broadcast %192 : vector<1x32xf32> to vector<16x32xf32>
    %325 = arith.mulf %324, %323 : vector<16x32xf32>
    %326 = vector.broadcast %194 : vector<1x32xf32> to vector<16x32xf32>
    %327 = arith.addf %325, %326 : vector<16x32xf32>
    %cst_147 = arith.constant dense<0.000000e+00> : vector<16x64xf32>
    %328 = tpu.matmul %327, %176, %cst_147 {dimension_numbers = #tpu.dot_dimension_numbers<[1], [0], [0], [1], [0, 0, 1, 1], [], []>} : vector<16x32xf32>, vector<32x64xf32>, vector<16x64xf32> -> vector<16x64xf32>
    %329 = vector.broadcast %184 : vector<1x64xf32> to vector<16x64xf32>
    %330 = arith.addf %328, %329 : vector<16x64xf32>
    %cst_148 = arith.constant 0.000000e+00 : f32
    %331 = vector.broadcast %cst_148 : f32 to vector<16x64xf32>
    %332 = arith.maximumf %330, %331 : vector<16x64xf32>
    %cst_149 = arith.constant dense<0.000000e+00> : vector<16x32xf32>
    %333 = tpu.matmul %332, %178, %cst_149 {dimension_numbers = #tpu.dot_dimension_numbers<[1], [0], [0], [1], [0, 0, 1, 1], [], []>} : vector<16x64xf32>, vector<64x32xf32>, vector<16x32xf32> -> vector<16x32xf32>
    %334 = arith.addf %304, %333 : vector<16x32xf32>
    %335 = vector.broadcast %186 : vector<1x32xf32> to vector<16x32xf32>
    %336 = arith.addf %334, %335 : vector<16x32xf32>
    %c0_150 = arith.constant 0 : index
    %c0_151 = arith.constant 0 : index
    %337 = vector.load %arg4[%c0_150, %c0_151] : memref<56x128xf32, #tpu.memory_space<vmem>>, vector<32x128xf32>
    %c32_152 = arith.constant 32 : index
    %c0_153 = arith.constant 0 : index
    %338 = vector.load %arg4[%c32_152, %c0_153] : memref<56x128xf32, #tpu.memory_space<vmem>>, vector<1x128xf32>
    %c33 = arith.constant 33 : index
    %c0_154 = arith.constant 0 : index
    %339 = vector.load %arg4[%c33, %c0_154] : memref<56x128xf32, #tpu.memory_space<vmem>>, vector<1x32xf32>
    %c34 = arith.constant 34 : index
    %c0_155 = arith.constant 0 : index
    %340 = vector.load %arg4[%c34, %c0_155] : memref<56x128xf32, #tpu.memory_space<vmem>>, vector<1x32xf32>
    %cst_156 = arith.constant dense<0.000000e+00> : vector<16xf32>
    %341 = vector.multi_reduction <add>, %336, %cst_156 [1] : vector<16x32xf32> to vector<16xf32>
    %342 = vector.shape_cast %341 : vector<16xf32> to vector<16x1xf32>
    %cst_157 = arith.constant 3.200000e+01 : f32
    %343 = vector.broadcast %cst_157 : f32 to vector<16x1xf32>
    %344 = arith.divf %342, %343 : vector<16x1xf32>
    %345 = vector.broadcast %344 : vector<16x1xf32> to vector<16x32xf32>
    %346 = arith.subf %336, %345 : vector<16x32xf32>
    %347 = arith.mulf %346, %346 : vector<16x32xf32>
    %cst_158 = arith.constant dense<0.000000e+00> : vector<16xf32>
    %348 = vector.multi_reduction <add>, %347, %cst_158 [1] : vector<16x32xf32> to vector<16xf32>
    %349 = vector.shape_cast %348 : vector<16xf32> to vector<16x1xf32>
    %cst_159 = arith.constant 0.0322580636 : f32
    %350 = vector.broadcast %cst_159 : f32 to vector<16x1xf32>
    %351 = arith.mulf %349, %350 : vector<16x1xf32>
    %352 = math.sqrt %351 : vector<16x1xf32>
    %cst_160 = arith.constant 9.99999997E-7 : f32
    %353 = vector.broadcast %cst_160 : f32 to vector<16x1xf32>
    %354 = arith.addf %352, %353 : vector<16x1xf32>
    %355 = tpu.reciprocal %354 : vector<16x1xf32> -> vector<16x1xf32>
    %356 = vector.broadcast %344 : vector<16x1xf32> to vector<16x32xf32>
    %357 = arith.subf %336, %356 : vector<16x32xf32>
    %358 = vector.broadcast %355 : vector<16x1xf32> to vector<16x32xf32>
    %359 = arith.mulf %357, %358 : vector<16x32xf32>
    %360 = vector.broadcast %339 : vector<1x32xf32> to vector<16x32xf32>
    %361 = arith.mulf %360, %359 : vector<16x32xf32>
    %362 = vector.broadcast %340 : vector<1x32xf32> to vector<16x32xf32>
    %363 = arith.addf %361, %362 : vector<16x32xf32>
    %cst_161 = arith.constant dense<0.000000e+00> : vector<16x128xf32>
    %364 = tpu.matmul %363, %337, %cst_161 {dimension_numbers = #tpu.dot_dimension_numbers<[1], [0], [0], [1], [0, 0, 1, 1], [], []>} : vector<16x32xf32>, vector<32x128xf32>, vector<16x128xf32> -> vector<16x128xf32>
    %365 = vector.broadcast %338 : vector<1x128xf32> to vector<16x128xf32>
    %366 = arith.addf %364, %365 : vector<16x128xf32>
    %cst_162 = arith.constant dense<0xFF800000> : vector<16xf32>
    %367 = vector.multi_reduction <maximumf>, %366, %cst_162 [1] : vector<16x128xf32> to vector<16xf32>
    %368 = vector.shape_cast %367 : vector<16xf32> to vector<16x1xf32>
    %369 = vector.broadcast %368 : vector<16x1xf32> to vector<16x128xf32>
    %370 = arith.subf %366, %369 : vector<16x128xf32>
    %371 = math.exp %370 : vector<16x128xf32>
    %cst_163 = arith.constant dense<0.000000e+00> : vector<16xf32>
    %372 = vector.multi_reduction <add>, %371, %cst_163 [1] : vector<16x128xf32> to vector<16xf32>
    %373 = vector.shape_cast %372 : vector<16xf32> to vector<16x1xf32>
    %374 = math.log %373 : vector<16x1xf32>
    %375 = arith.addf %374, %368 : vector<16x1xf32>
    %376 = vector.broadcast %375 : vector<16x1xf32> to vector<16x128xf32>
    %377 = arith.subf %366, %376 : vector<16x128xf32>
    %c0_164 = arith.constant 0 : index
    %c0_165 = arith.constant 0 : index
    %378 = vector.load %arg5[%c0_164, %c0_165] : memref<16x128xf32, #tpu.memory_space<vmem>>, vector<16x128xf32>
    tpu.vector_store %arg5[%c0_164, %c0_165], %377 {strides = array<i32>} : memref<16x128xf32, #tpu.memory_space<vmem>>, vector<16x128xf32>,
    return
  }
  func.func @transform_0(%arg0: i32) -> (i32, i32) {
    %c0_i32 = arith.constant 0 : i32
    %c0_i32_0 = arith.constant 0 : i32
    %c0_i32_1 = arith.constant 0 : i32
    return %c0_i32, %c0_i32_0 : i32, i32
  }
  func.func @transform_1(%arg0: i32) -> (i32, i32) {
    %c0_i32 = arith.constant 0 : i32
    %c0_i32_0 = arith.constant 0 : i32
    %c0_i32_1 = arith.constant 0 : i32
    return %c0_i32, %c0_i32_0 : i32, i32
  }
  func.func @transform_2(%arg0: i32) -> (i32, i32, i32) {
    %c0_i32 = arith.constant 0 : i32
    %c0_i32_0 = arith.constant 0 : i32
    %c0_i32_1 = arith.constant 0 : i32
    %c0_i32_2 = arith.constant 0 : i32
    return %c0_i32, %c0_i32_0, %c0_i32_1 : i32, i32, i32
  }
  func.func @transform_3(%arg0: i32) -> (i32, i32) {
    %c0_i32 = arith.constant 0 : i32
    %c0_i32_0 = arith.constant 0 : i32
    %c0_i32_1 = arith.constant 0 : i32
    return %c0_i32, %c0_i32_0 : i32, i32
  }
  func.func @transform_4(%arg0: i32) -> (i32, i32) {
    %c0_i32 = arith.constant 0 : i32
    %c0_i32_0 = arith.constant 0 : i32
    %c0_i32_1 = arith.constant 0 : i32
    return %c0_i32, %c0_i32_0 : i32, i32
  }
}

</mosaic_0001>

<llo_original>
// kernel: transformer_forward.1
$region0: #{transformer_forward.1}
  #allocation0 [shape = 'u32[]', space=smem, size = 0x4, offset = 0x4, fixed_abs, tag = 'smem constant byte address 0x4 - core index']
  #allocation1 [shape = 'u32[144,128]{1,0:T(1,128)}', space=vmem, size = 0x12000, scoped, tag = 'internal scratch']
  %s0 = inlined_call_operand.vmem [shape: f32[16,32], index: 0, kind: input, shape index: {}]
  %s1 = inlined_call_operand.vmem [shape: f32[1,16], index: 1, kind: input, shape index: {}]
  %s2 = inlined_call_operand.vmem [shape: f32[2,168,128], index: 2, kind: input, shape index: {}]
  %s3 = inlined_call_operand.vmem [shape: f32[56,128], index: 3, kind: input, shape index: {}]
  %s4 = inlined_call_operand.vmem [shape: f32[16,128], index: 4, kind: output, shape index: {}]
  %s5 = sld [smem:[#allocation0]]
  $region26: #{transformer_forward.1} parent=0
    _
  %s7 = ssub.s32 1, %s5
  %s8 = scalar_select 0, %s7, %s5
  // Predicated region
  $region2: #{transformer_forward.1} parent=0 // pred_check
    _
  $region3: #{transformer_forward.1} parent=0 // pred_check_branch
    %10 = sbr.rel (0) target = $region5
  $region4: #{transformer_forward.1} parent=0 // pred_region
    _
  $region5: #{transformer_forward.1} parent=0 // pred_fallthru
    _
  // Predicated region
  $region6: #{transformer_forward.1} parent=0 // pred_check
    _
  $region7: #{transformer_forward.1} parent=0 // pred_check_branch
    %12 = sbr.rel (0) target = $region9
  $region8: #{transformer_forward.1} parent=0 // pred_region
    _
  $region9: #{transformer_forward.1} parent=0 // pred_fallthru
    _
  // Predicated region
  $region10: #{transformer_forward.1} parent=0 // pred_check
    _
  $region11: #{transformer_forward.1} parent=0 // pred_check_branch
    %14 = sbr.rel (0) target = $region13
  $region12: #{transformer_forward.1} parent=0 // pred_region
    _
  $region13: #{transformer_forward.1} parent=0 // pred_fallthru
    _
  // Predicated region
  $region14: #{transformer_forward.1} parent=0 // pred_check
    _
  $region15: #{transformer_forward.1} parent=0 // pred_check_branch
    %16 = sbr.rel (0) target = $region17
  $region16: #{transformer_forward.1} parent=0 // pred_region
    _
  $region17: #{transformer_forward.1} parent=0 // pred_fallthru
    _
  %v17 = vld [vmem:[%s0] sm:$0xff]
  %v18 = vld [vmem:[%s0 + $0x8] sm:$0xff]
  %v19 = vld [vmem:[%s3 + $0x28] sm:$0xff]
  %v20 = vld [vmem:[%s3 + $0x30] sm:$0xff]
  %v21 = vld [vmem:[%s1] sm:$0x1]
  %vm22 = vcmp.ne.f32.partialorder %v21, 0.0
  %v23 = vsel %vm22, 1, 0
  %v24 = vlaneseq
  %v25 = vshrl.u32 %v24, 7
  %v26 = vsub.s32 0, %v25
  %v27 = vrot.slane %v23, %v26
  %vm28 = vcmp.eq.s32.totalorder %v27, 1
  %v29 = vsel %vm28, %v19, -1e+09
  %v30 = vsel %vm28, %v20, -1e+09
  %v31 = vld [vmem:[%s2] sm:$0xff]
  %v32 = vld [vmem:[%s2 + $0x8] sm:$0xff]
  %v33 = vld [vmem:[%s2 + $0x10] sm:$0xff]
  %v34 = vld [vmem:[%s2 + $0x18] sm:$0xff]
  %v35 = vld [vmem:[%s2 + $0x20] sm:$0xff]
  %v36 = vld [vmem:[%s2 + $0x28] sm:$0xff]
  %v37 = vld [vmem:[%s2 + $0x30] sm:$0xff]
  %v38 = vld [vmem:[%s2 + $0x38] sm:$0xff]
  %v39 = vld [vmem:[%s2 + $0x40] sm:$0xff]
  %v40 = vld [vmem:[%s2 + $0x48] sm:$0xff]
  %v41 = vld [vmem:[%s2 + $0x50] sm:$0xff]
  %v42 = vld [vmem:[%s2 + $0x58] sm:$0xff]
  %v43 = vld [vmem:[%s2 + $0x60] sm:$0xff]
  %v44 = vld [vmem:[%s2 + $0x68] sm:$0xff]
  %v45 = vld [vmem:[%s2 + $0x70] sm:$0xff]
  %v46 = vld [vmem:[%s2 + $0x78] sm:$0xff]
  %v47 = vld [vmem:[%s2 + $0xa0] sm:$0x1]
  %v48 = vld [vmem:[%s2 + $0xa1] sm:$0x1]
  %v49 = vld [vmem:[%s2 + $0xa2] sm:$0x1]
  %v50 = vld [vmem:[%s2 + $0xa3] sm:$0x1]
  %v51 = vld [vmem:[%s2 + $0xa4] sm:$0x1]
  %v52 = vld [vmem:[%s2 + $0xa5] sm:$0x1]
  %v53 = vld [vmem:[%s2 + $0xa6] sm:$0x1]
  %v54 = vld [vmem:[%s2 + $0xa7] sm:$0x1]
  %vm55 = vcmask 261120
  %v56 = vsel %vm55, %v17, 0.0
  %57 = vadd.xlane.f32.xlu0 %v56
  %v58 = vpop.xlane.xlu0 %57
  %v59 = vsel %vm55, %v18, 0.0
  %60 = vadd.xlane.f32.xlu0 %v59
  %v61 = vpop.xlane.xlu0 %60
  %v62 = vrcp.pop 32.0
  %v63 = vmul.f32 %v58, %v62
  %v64 = vmul.f32 %v61, %v62
  %v65 = vsub.f32 %v17, %v63
  %v66 = vsub.f32 %v18, %v64
  %v67 = vmul.f32 %v65, %v65
  %v68 = vmul.f32 %v66, %v66
  %v69 = vsel %vm55, %v67, 0.0
  %70 = vadd.xlane.f32.xlu0 %v69
  %v71 = vpop.xlane.xlu0 %70
  %v72 = vsel %vm55, %v68, 0.0
  %73 = vadd.xlane.f32.xlu0 %v72
  %v74 = vpop.xlane.xlu0 %73
  %v75 = vmul.f32 %v71, 0.032258064
  %v76 = vmul.f32 %v74, 0.032258064
  %v77 = vrsqrt.pop %v75
  %v78 = vmul.f32 %v75, %v77
  %vm79 = vcmp.eq.f32.partialorder %v75, inf
  %v80 = vsel %vm79, %v75, %v78
  %vm81 = vcmp.eq.f32.partialorder %v75, 0.0
  %v82 = vand.u32 %v75, 2147483648
  %v83 = vsel %vm81, %v82, %v80
  %v84 = vrsqrt.pop %v76
  %v85 = vmul.f32 %v76, %v84
  %vm86 = vcmp.eq.f32.partialorder %v76, inf
  %v87 = vsel %vm86, %v76, %v85
  %vm88 = vcmp.eq.f32.partialorder %v76, 0.0
  %v89 = vand.u32 %v76, 2147483648
  %v90 = vsel %vm88, %v89, %v87
  %v91 = vadd.f32 %v83, 1e-06
  %v92 = vadd.f32 %v90, 1e-06
  %v93 = vrcp.pop %v91
  %v94 = vrcp.pop %v92
  %v95 = vmul.f32 %v65, %v93
  %v96 = vmul.f32 %v66, %v94
  %v97 = vlaneseq
  %v98 = vshrl.u32 %v97, 7
  %v99 = vsub.s32 0, %v98
  %v100 = vrot.slane %v51, %v99
  %v101 = vmul.f32 %v100, %v95
  %v102 = vmul.f32 %v100, %v96
  %v103 = vlaneseq
  %v104 = vshrl.u32 %v103, 7
  %v105 = vsub.s32 0, %v104
  %v106 = vrot.slane %v52, %v105
  %v107 = vadd.f32 %v101, %v106
  %v108 = vadd.f32 %v102, %v106
  %v109 = vlaneseq
  %v110 = vshrl.u32 %v109, 7
  %v111 = vsub.s32 0, %v110
  %v112 = vrot.slane %v47, %v111
  %v114 = vsel %vm55, %v107, 0
  %v117 = vsel %vm55, %v108, 0
  %119 = vmatprep.subr.mxu0 0.0
  %120 = vmatpush1.msra.mxu0 %v31
  %121 = vmatprep.subr.mxu0 0.0
  %122 = vmatpush1.msra.mxu0 %v32
  %123 = vmatprep.subr.mxu0 0.0
  %124 = vmatpush1.msra.mxu0 %v33
  %125 = vmatprep.subr.mxu0 0.0
  %126 = vmatpush1.msra.mxu0 %v34
  %127 = vmatprep.subr.mxu0 0.0
  %128 = vmatpush1.msra.mxu0 0.0
  %129 = vmatprep.subr.mxu0 0.0
  %130 = vmatpush1.msra.mxu0 0.0
  %131 = vmatprep.subr.mxu0 0.0
  %132 = vmatpush1.msra.mxu0 0.0
  %133 = vmatprep.subr.mxu0 0.0
  %134 = vmatpush1.msra.mxu0 0.0
  %135 = vmatprep.subr.mxu0 0.0
  %136 = vmatpush1.msra.mxu0 0.0
  %137 = vmatprep.subr.mxu0 0.0
  %138 = vmatpush1.msra.mxu0 0.0
  %139 = vmatprep.subr.mxu0 0.0
  %140 = vmatpush1.msra.mxu0 0.0
  %141 = vmatprep.subr.mxu0 0.0
  %142 = vmatpush1.msra.mxu0 0.0
  %143 = vmatprep.subr.mxu0 0.0
  %144 = vmatpush1.msra.mxu0 0.0
  %145 = vmatprep.subr.mxu0 0.0
  %146 = vmatpush1.msra.mxu0 0.0
  %147 = vmatprep.subr.mxu0 0.0
  %148 = vmatpush1.msra.mxu0 0.0
  %149 = vmatprep.subr.mxu0 0.0
  %150 = vmatpush1.msra.mxu0 0.0
  %151 = vmatprep.subr.mxu0 0.0
  %152 = vmatpush1.msra.mxu0 0.0
  %153 = vmatprep.subr.mxu0 0.0
  %154 = vmatpush1.msra.mxu0 0.0
  %155 = vmatprep.subr.mxu0 0.0
  %156 = vmatpush1.msra.mxu0 0.0
  %157 = vmatprep.subr.mxu0 0.0
  %158 = vmatpush1.msra.mxu0 0.0
  %159 = vmatprep.subr.mxu0 0.0
  %160 = vmatpush1.msra.mxu0 0.0
  %161 = vmatprep.subr.mxu0 0.0
  %162 = vmatpush1.msra.mxu0 0.0
  %163 = vmatprep.subr.mxu0 0.0
  %164 = vmatpush1.msra.mxu0 0.0
  %165 = vmatprep.subr.mxu0 0.0
  %166 = vmatpush1.msra.mxu0 0.0
  %167 = vmatprep.subr.mxu0 0.0
  %168 = vmatpush1.msra.mxu0 0.0
  %169 = vmatprep.subr.mxu0 0.0
  %170 = vmatpush1.msra.mxu0 0.0
  %171 = vmatprep.subr.mxu0 0.0
  %172 = vmatpush1.msra.mxu0 0.0
  %173 = vmatprep.subr.mxu0 0.0
  %174 = vmatpush1.msra.mxu0 0.0
  %175 = vmatprep.subr.mxu0 0.0
  %176 = vmatpush1.msra.mxu0 0.0
  %177 = vmatprep.subr.mxu0 0.0
  %178 = vmatpush1.msra.mxu0 0.0
  %179 = vmatprep.subr.mxu0 0.0
  %180 = vmatpush1.msra.mxu0 0.0
  %181 = vmatprep.subr.mxu0 0.0
  %182 = vmatpush1.msra.mxu0 0.0
  %183 = vmatprep.mubr.f32.mxu0 0.0
  %184 = vmatmul.mubr.f32.gmra.mrb[0].mxu0 %v114
  %v185 = vpop.f32.mrb[0].mxu0
  %v186 = vadd.f32 %v112, %v185
  %v187 = vpop.f32.mrb[0].mxu0
  %188 = vmatprep.mubr.f32.mxu0 0.0
  %189 = vmatmul.mubr.f32.gmra.mrb[0].mxu0 %v117
  %v190 = vpop.f32.mrb[0].mxu0
  %v191 = vadd.f32 %v112, %v190
  %v192 = vpop.f32.mrb[0].mxu0
  %193 = vdwg.mxu0
  %196 = vrot.lane.b32.xlu0 %v186, 96
  %v197 = vpop.permute.xlu0 %196
  %198 = vrot.lane.b32.xlu0 %v191, 96
  %v199 = vpop.permute.xlu0 %198
  %vm200 = vcmask 64512
  %v201 = vsel %vm200, %v186, 0
  %v203 = vsel %vm200, %v191, 0
  %v205 = vsel %vm200, %v197, 0
  %v207 = vsel %vm200, %v199, 0
  %209 = vmatprep.subr.mxu0 0.0
  %210 = vmatpush1.xpose.msra.mxu0 %v205
  %211 = vmatprep.subr.mxu0 0.0
  %212 = vmatpush1.xpose.msra.mxu0 %v207
  %213 = vmatprep.subr.mxu0 0.0
  %214 = vmatpush1.xpose.msra.mxu0 0.0
  %215 = vmatprep.subr.mxu0 0.0
  %216 = vmatpush1.xpose.msra.mxu0 0.0
  %217 = vmatprep.subr.mxu0 0.0
  %218 = vmatpush1.xpose.msra.mxu0 0.0
  %219 = vmatprep.subr.mxu0 0.0
  %220 = vmatpush1.xpose.msra.mxu0 0.0
  %221 = vmatprep.subr.mxu0 0.0
  %222 = vmatpush1.xpose.msra.mxu0 0.0
  %223 = vmatprep.subr.mxu0 0.0
  %224 = vmatpush1.xpose.msra.mxu0 0.0
  %225 = vmatprep.subr.mxu0 0.0
  %226 = vmatpush1.xpose.msra.mxu0 0.0
  %227 = vmatprep.subr.mxu0 0.0
  %228 = vmatpush1.xpose.msra.mxu0 0.0
  %229 = vmatprep.subr.mxu0 0.0
  %230 = vmatpush1.xpose.msra.mxu0 0.0
  %231 = vmatprep.subr.mxu0 0.0
  %232 = vmatpush1.xpose.msra.mxu0 0.0
  %233 = vmatprep.subr.mxu0 0.0
  %234 = vmatpush1.xpose.msra.mxu0 0.0
  %235 = vmatprep.subr.mxu0 0.0
  %236 = vmatpush1.xpose.msra.mxu0 0.0
  %237 = vmatprep.subr.mxu0 0.0
  %238 = vmatpush1.xpose.msra.mxu0 0.0
  %239 = vmatprep.subr.mxu0 0.0
  %240 = vmatpush1.xpose.msra.mxu0 0.0
  %241 = vmatprep.subr.mxu0 0.0
  %242 = vmatpush1.xpose.msra.mxu0 0.0
  %243 = vmatprep.subr.mxu0 0.0
  %244 = vmatpush1.xpose.msra.mxu0 0.0
  %245 = vmatprep.subr.mxu0 0.0
  %246 = vmatpush1.xpose.msra.mxu0 0.0
  %247 = vmatprep.subr.mxu0 0.0
  %248 = vmatpush1.xpose.msra.mxu0 0.0
  %249 = vmatprep.subr.mxu0 0.0
  %250 = vmatpush1.xpose.msra.mxu0 0.0
  %251 = vmatprep.subr.mxu0 0.0
  %252 = vmatpush1.xpose.msra.mxu0 0.0
  %253 = vmatprep.subr.mxu0 0.0
  %254 = vmatpush1.xpose.msra.mxu0 0.0
  %255 = vmatprep.subr.mxu0 0.0
  %256 = vmatpush1.xpose.msra.mxu0 0.0
  %257 = vmatprep.subr.mxu0 0.0
  %258 = vmatpush1.xpose.msra.mxu0 0.0
  %259 = vmatprep.subr.mxu0 0.0
  %260 = vmatpush1.xpose.msra.mxu0 0.0
  %261 = vmatprep.subr.mxu0 0.0
  %262 = vmatpush1.xpose.msra.mxu0 0.0
  %263 = vmatprep.subr.mxu0 0.0
  %264 = vmatpush1.xpose.msra.mxu0 0.0
  %265 = vmatprep.subr.mxu0 0.0
  %266 = vmatpush1.xpose.msra.mxu0 0.0
  %267 = vmatprep.subr.mxu0 0.0
  %268 = vmatpush1.xpose.msra.mxu0 0.0
  %269 = vmatprep.subr.mxu0 0.0
  %270 = vmatpush1.xpose.msra.mxu0 0.0
  %271 = vmatprep.subr.mxu0 0.0
  %272 = vmatpush1.xpose.msra.mxu0 0.0
  %273 = vmatprep.mubr.f32.mxu0 0.0
  %274 = vmatmul.mubr.f32.gmra.mrb[0].mxu0 %v201
  %v275 = vpop.f32.mrb[0].mxu0
  %v276 = vadd.f32 %v29, %v275
  %v277 = vpop.f32.mrb[0].mxu0
  %278 = vmatprep.mubr.f32.mxu0 0.0
  %279 = vmatmul.mubr.f32.gmra.mrb[0].mxu0 %v203
  %v280 = vpop.f32.mrb[0].mxu0
  %v281 = vadd.f32 %v30, %v280
  %v282 = vpop.f32.mrb[0].mxu0
  %283 = vdwg.mxu0
  %vm284 = vcmask 130048
  %v285 = vsel %vm284, %v276, -inf
  %286 = vmax.xlane.f32.xlu0 %v285
  %v287 = vpop.xlane.xlu0 %286
  %v288 = vsel %vm284, %v281, -inf
  %289 = vmax.xlane.f32.xlu0 %v288
  %v290 = vpop.xlane.xlu0 %289
  %v291 = vsub.f32 %v276, %v287
  %v292 = vsub.f32 %v281, %v290
  %v293 = vmul.f32 %v291, 1.442695
  %v294 = vpow.pop %v293
  %v295 = vmul.f32 %v292, 1.442695
  %v296 = vpow.pop %v295
  %v297 = vsel %vm284, %v294, 0.0
  %298 = vadd.xlane.f32.xlu0 %v297
  %v299 = vpop.xlane.xlu0 %298
  %v300 = vsel %vm284, %v296, 0.0
  %301 = vadd.xlane.f32.xlu0 %v300
  %v302 = vpop.xlane.xlu0 %301
  %v303 = vrcp.pop %v299
  %v304 = vrcp.pop %v302
  %v305 = vmul.f32 %v294, %v303
  %v306 = vmul.f32 %v296, %v304
  %307 = vrot.lane.b32.xlu0 %v186, 64
  %v308 = vpop.permute.xlu0 %307
  %309 = vrot.lane.b32.xlu0 %v191, 64
  %v310 = vpop.permute.xlu0 %309
  %v314 = vsel %vm284, %v305, 0
  %v317 = vsel %vm284, %v306, 0
  %319 = vmatprep.subr.mxu0 0.0
  %320 = vmatpush1.msra.mxu0 %v308
  %321 = vmatprep.subr.mxu0 0.0
  %322 = vmatpush1.msra.mxu0 %v310
  %323 = vmatprep.subr.mxu0 0.0
  %324 = vmatpush1.msra.mxu0 0.0
  %325 = vmatprep.subr.mxu0 0.0
  %326 = vmatpush1.msra.mxu0 0.0
  %327 = vmatprep.subr.mxu0 0.0
  %328 = vmatpush1.msra.mxu0 0.0
  %329 = vmatprep.subr.mxu0 0.0
  %330 = vmatpush1.msra.mxu0 0.0
  %331 = vmatprep.subr.mxu0 0.0
  %332 = vmatpush1.msra.mxu0 0.0
  %333 = vmatprep.subr.mxu0 0.0
  %334 = vmatpush1.msra.mxu0 0.0
  %335 = vmatprep.subr.mxu0 0.0
  %336 = vmatpush1.msra.mxu0 0.0
  %337 = vmatprep.subr.mxu0 0.0
  %338 = vmatpush1.msra.mxu0 0.0
  %339 = vmatprep.subr.mxu0 0.0
  %340 = vmatpush1.msra.mxu0 0.0
  %341 = vmatprep.subr.mxu0 0.0
  %342 = vmatpush1.msra.mxu0 0.0
  %343 = vmatprep.subr.mxu0 0.0
  %344 = vmatpush1.msra.mxu0 0.0
  %345 = vmatprep.subr.mxu0 0.0
  %346 = vmatpush1.msra.mxu0 0.0
  %347 = vmatprep.subr.mxu0 0.0
  %348 = vmatpush1.msra.mxu0 0.0
  %349 = vmatprep.subr.mxu0 0.0
  %350 = vmatpush1.msra.mxu0 0.0
  %351 = vmatprep.subr.mxu0 0.0
  %352 = vmatpush1.msra.mxu0 0.0
  %353 = vmatprep.subr.mxu0 0.0
  %354 = vmatpush1.msra.mxu0 0.0
  %355 = vmatprep.subr.mxu0 0.0
  %356 = vmatpush1.msra.mxu0 0.0
  %357 = vmatprep.subr.mxu0 0.0
  %358 = vmatpush1.msra.mxu0 0.0
  %359 = vmatprep.subr.mxu0 0.0
  %360 = vmatpush1.msra.mxu0 0.0
  %361 = vmatprep.subr.mxu0 0.0
  %362 = vmatpush1.msra.mxu0 0.0
  %363 = vmatprep.subr.mxu0 0.0
  %364 = vmatpush1.msra.mxu0 0.0
  %365 = vmatprep.subr.mxu0 0.0
  %366 = vmatpush1.msra.mxu0 0.0
  %367 = vmatprep.subr.mxu0 0.0
  %368 = vmatpush1.msra.mxu0 0.0
  %369 = vmatprep.subr.mxu0 0.0
  %370 = vmatpush1.msra.mxu0 0.0
  %371 = vmatprep.subr.mxu0 0.0
  %372 = vmatpush1.msra.mxu0 0.0
  %373 = vmatprep.subr.mxu0 0.0
  %374 = vmatpush1.msra.mxu0 0.0
  %375 = vmatprep.subr.mxu0 0.0
  %376 = vmatpush1.msra.mxu0 0.0
  %377 = vmatprep.subr.mxu0 0.0
  %378 = vmatpush1.msra.mxu0 0.0
  %379 = vmatprep.subr.mxu0 0.0
  %380 = vmatpush1.msra.mxu0 0.0
  %381 = vmatprep.subr.mxu0 0.0
  %382 = vmatpush1.msra.mxu0 0.0
  %383 = vmatprep.mubr.f32.mxu0 0.0
  %384 = vmatmul.mubr.f32.gmra.mrb[0].mxu0 %v314
  %v385 = vpop.f32.mrb[0].mxu0
  %v386 = vadd.f32 0.0, %v385
  %v387 = vpop.f32.mrb[0].mxu0
  %388 = vmatprep.mubr.f32.mxu0 0.0
  %389 = vmatmul.mubr.f32.gmra.mrb[0].mxu0 %v317
  %v390 = vpop.f32.mrb[0].mxu0
  %v391 = vadd.f32 0.0, %v390
  %v392 = vpop.f32.mrb[0].mxu0
  %393 = vdwg.mxu0
  %v394 = vld [vmem:[%s2 + $0x80] sm:$0xff]
  %395 = vrot.lane.b32.xlu0 %v186, 120
  %v396 = vpop.permute.xlu0 %395
  %397 = vrot.lane.b32.xlu0 %v191, 120
  %v398 = vpop.permute.xlu0 %397
  %399 = vrot.lane.b32.xlu0 %v186, 88
  %v400 = vpop.permute.xlu0 %399
  %401 = vrot.lane.b32.xlu0 %v191, 88
  %v402 = vpop.permute.xlu0 %401
  %v403 = vsel %vm200, %v396, 0
  %v405 = vsel %vm200, %v398, 0
  %v407 = vsel %vm200, %v400, 0
  %v409 = vsel %vm200, %v402, 0
  %411 = vmatprep.subr.mxu0 0.0
  %412 = vmatpush1.xpose.msra.mxu0 %v407
  %413 = vmatprep.subr.mxu0 0.0
  %414 = vmatpush1.xpose.msra.mxu0 %v409
  %415 = vmatprep.subr.mxu0 0.0
  %416 = vmatpush1.xpose.msra.mxu0 0.0
  %417 = vmatprep.subr.mxu0 0.0
  %418 = vmatpush1.xpose.msra.mxu0 0.0
  %419 = vmatprep.subr.mxu0 0.0
  %420 = vmatpush1.xpose.msra.mxu0 0.0
  %421 = vmatprep.subr.mxu0 0.0
  %422 = vmatpush1.xpose.msra.mxu0 0.0
  %423 = vmatprep.subr.mxu0 0.0
  %424 = vmatpush1.xpose.msra.mxu0 0.0
  %425 = vmatprep.subr.mxu0 0.0
  %426 = vmatpush1.xpose.msra.mxu0 0.0
  %427 = vmatprep.subr.mxu0 0.0
  %428 = vmatpush1.xpose.msra.mxu0 0.0
  %429 = vmatprep.subr.mxu0 0.0
  %430 = vmatpush1.xpose.msra.mxu0 0.0
  %431 = vmatprep.subr.mxu0 0.0
  %432 = vmatpush1.xpose.msra.mxu0 0.0
  %433 = vmatprep.subr.mxu0 0.0
  %434 = vmatpush1.xpose.msra.mxu0 0.0
  %435 = vmatprep.subr.mxu0 0.0
  %436 = vmatpush1.xpose.msra.mxu0 0.0
  %437 = vmatprep.subr.mxu0 0.0
  %438 = vmatpush1.xpose.msra.mxu0 0.0
  %439 = vmatprep.subr.mxu0 0.0
  %440 = vmatpush1.xpose.msra.mxu0 0.0
  %441 = vmatprep.subr.mxu0 0.0
  %442 = vmatpush1.xpose.msra.mxu0 0.0
  %443 = vmatprep.subr.mxu0 0.0
  %444 = vmatpush1.xpose.msra.mxu0 0.0
  %445 = vmatprep.subr.mxu0 0.0
  %446 = vmatpush1.xpose.msra.mxu0 0.0
  %447 = vmatprep.subr.mxu0 0.0
  %448 = vmatpush1.xpose.msra.mxu0 0.0
  %449 = vmatprep.subr.mxu0 0.0
  %450 = vmatpush1.xpose.msra.mxu0 0.0
  %451 = vmatprep.subr.mxu0 0.0
  %452 = vmatpush1.xpose.msra.mxu0 0.0
  %453 = vmatprep.subr.mxu0 0.0
  %454 = vmatpush1.xpose.msra.mxu0 0.0
  %455 = vmatprep.subr.mxu0 0.0
  %456 = vmatpush1.xpose.msra.mxu0 0.0
  %457 = vmatprep.subr.mxu0 0.0
  %458 = vmatpush1.xpose.msra.mxu0 0.0
  %459 = vmatprep.subr.mxu0 0.0
  %460 = vmatpush1.xpose.msra.mxu0 0.0
  %461 = vmatprep.subr.mxu0 0.0
  %462 = vmatpush1.xpose.msra.mxu0 0.0
  %463 = vmatprep.subr.mxu0 0.0
  %464 = vmatpush1.xpose.msra.mxu0 0.0
  %465 = vmatprep.subr.mxu0 0.0
  %466 = vmatpush1.xpose.msra.mxu0 0.0
  %467 = vmatprep.subr.mxu0 0.0
  %468 = vmatpush1.xpose.msra.mxu0 0.0
  %469 = vmatprep.subr.mxu0 0.0
  %470 = vmatpush1.xpose.msra.mxu0 0.0
  %471 = vmatprep.subr.mxu0 0.0
  %472 = vmatpush1.xpose.msra.mxu0 0.0
  %473 = vmatprep.subr.mxu0 0.0
  %474 = vmatpush1.xpose.msra.mxu0 0.0
  %475 = vmatprep.mubr.f32.mxu0 0.0
  %476 = vmatmul.mubr.f32.gmra.mrb[0].mxu0 %v403
  %v477 = vpop.f32.mrb[0].mxu0
  %v478 = vadd.f32 %v29, %v477
  %v479 = vpop.f32.mrb[0].mxu0
  %480 = vmatprep.mubr.f32.mxu0 0.0
  %481 = vmatmul.mubr.f32.gmra.mrb[0].mxu0 %v405
  %v482 = vpop.f32.mrb[0].mxu0
  %v483 = vadd.f32 %v30, %v482
  %v484 = vpop.f32.mrb[0].mxu0
  %485 = vdwg.mxu0
  %v486 = vsel %vm284, %v478, -inf
  %487 = vmax.xlane.f32.xlu0 %v486
  %v488 = vpop.xlane.xlu0 %487
  %v489 = vsel %vm284, %v483, -inf
  %490 = vmax.xlane.f32.xlu0 %v489
  %v491 = vpop.xlane.xlu0 %490
  %v492 = vsub.f32 %v478, %v488
  %v493 = vsub.f32 %v483, %v491
  %v494 = vmul.f32 %v492, 1.442695
  %v495 = vpow.pop %v494
  %v496 = vmul.f32 %v493, 1.442695
  %v497 = vpow.pop %v496
  %v498 = vsel %vm284, %v495, 0.0
  %499 = vadd.xlane.f32.xlu0 %v498
  %v500 = vpop.xlane.xlu0 %499
  %v501 = vsel %vm284, %v497, 0.0
  %502 = vadd.xlane.f32.xlu0 %v501
  %v503 = vpop.xlane.xlu0 %502
  %v504 = vrcp.pop %v500
  %v505 = vrcp.pop %v503
  %v506 = vmul.f32 %v495, %v504
  %v507 = vmul.f32 %v497, %v505
  %508 = vrot.lane.b32.xlu0 %v186, 56
  %v509 = vpop.permute.xlu0 %508
  %510 = vrot.lane.b32.xlu0 %v191, 56
  %v511 = vpop.permute.xlu0 %510
  %v515 = vsel %vm284, %v506, 0
  %v518 = vsel %vm284, %v507, 0
  %520 = vmatprep.subr.mxu0 0.0
  %521 = vmatpush1.msra.mxu0 %v509
  %522 = vmatprep.subr.mxu0 0.0
  %523 = vmatpush1.msra.mxu0 %v511
  %524 = vmatprep.subr.mxu0 0.0
  %525 = vmatpush1.msra.mxu0 0.0
  %526 = vmatprep.subr.mxu0 0.0
  %527 = vmatpush1.msra.mxu0 0.0
  %528 = vmatprep.subr.mxu0 0.0
  %529 = vmatpush1.msra.mxu0 0.0
  %530 = vmatprep.subr.mxu0 0.0
  %531 = vmatpush1.msra.mxu0 0.0
  %532 = vmatprep.subr.mxu0 0.0
  %533 = vmatpush1.msra.mxu0 0.0
  %534 = vmatprep.subr.mxu0 0.0
  %535 = vmatpush1.msra.mxu0 0.0
  %536 = vmatprep.subr.mxu0 0.0
  %537 = vmatpush1.msra.mxu0 0.0
  %538 = vmatprep.subr.mxu0 0.0
  %539 = vmatpush1.msra.mxu0 0.0
  %540 = vmatprep.subr.mxu0 0.0
  %541 = vmatpush1.msra.mxu0 0.0
  %542 = vmatprep.subr.mxu0 0.0
  %543 = vmatpush1.msra.mxu0 0.0
  %544 = vmatprep.subr.mxu0 0.0
  %545 = vmatpush1.msra.mxu0 0.0
  %546 = vmatprep.subr.mxu0 0.0
  %547 = vmatpush1.msra.mxu0 0.0
  %548 = vmatprep.subr.mxu0 0.0
  %549 = vmatpush1.msra.mxu0 0.0
  %550 = vmatprep.subr.mxu0 0.0
  %551 = vmatpush1.msra.mxu0 0.0
  %552 = vmatprep.subr.mxu0 0.0
  %553 = vmatpush1.msra.mxu0 0.0
  %554 = vmatprep.subr.mxu0 0.0
  %555 = vmatpush1.msra.mxu0 0.0
  %556 = vmatprep.subr.mxu0 0.0
  %557 = vmatpush1.msra.mxu0 0.0
  %558 = vmatprep.subr.mxu0 0.0
  %559 = vmatpush1.msra.mxu0 0.0
  %560 = vmatprep.subr.mxu0 0.0
  %561 = vmatpush1.msra.mxu0 0.0
  %562 = vmatprep.subr.mxu0 0.0
  %563 = vmatpush1.msra.mxu0 0.0
  %564 = vmatprep.subr.mxu0 0.0
  %565 = vmatpush1.msra.mxu0 0.0
  %566 = vmatprep.subr.mxu0 0.0
  %567 = vmatpush1.msra.mxu0 0.0
  %568 = vmatprep.subr.mxu0 0.0
  %569 = vmatpush1.msra.mxu0 0.0
  %570 = vmatprep.subr.mxu0 0.0
  %571 = vmatpush1.msra.mxu0 0.0
  %572 = vmatprep.subr.mxu0 0.0
  %573 = vmatpush1.msra.mxu0 0.0
  %574 = vmatprep.subr.mxu0 0.0
  %575 = vmatpush1.msra.mxu0 0.0
  %576 = vmatprep.subr.mxu0 0.0
  %577 = vmatpush1.msra.mxu0 0.0
  %578 = vmatprep.subr.mxu0 0.0
  %579 = vmatpush1.msra.mxu0 0.0
  %580 = vmatprep.subr.mxu0 0.0
  %581 = vmatpush1.msra.mxu0 0.0
  %582 = vmatprep.subr.mxu0 0.0
  %583 = vmatpush1.msra.mxu0 0.0
  %584 = vmatprep.mubr.f32.mxu0 0.0
  %585 = vmatmul.mubr.f32.gmra.mrb[0].mxu0 %v515
  %v586 = vpop.f32.mrb[0].mxu0
  %v587 = vadd.f32 0.0, %v586
  %v588 = vpop.f32.mrb[0].mxu0
  %589 = vmatprep.mubr.f32.mxu0 0.0
  %590 = vmatmul.mubr.f32.gmra.mrb[0].mxu0 %v518
  %v591 = vpop.f32.mrb[0].mxu0
  %v592 = vadd.f32 0.0, %v591
  %v593 = vpop.f32.mrb[0].mxu0
  %594 = vdwg.mxu0
  %v595 = vld [vmem:[%s2 + $0x88] sm:$0xff]
  %v597 = vsel %vm200, %v587, 0
  %v600 = vsel %vm200, %v592, 0
  %602 = vmatprep.subr.mxu0 0.0
  %603 = vmatpush1.msra.mxu0 %v595
  %604 = vmatprep.subr.mxu0 0.0
  %605 = vmatpush1.msra.mxu0 0.0
  %606 = vmatprep.subr.mxu0 0.0
  %607 = vmatpush1.msra.mxu0 0.0
  %608 = vmatprep.subr.mxu0 0.0
  %609 = vmatpush1.msra.mxu0 0.0
  %610 = vmatprep.subr.mxu0 0.0
  %611 = vmatpush1.msra.mxu0 0.0
  %612 = vmatprep.subr.mxu0 0.0
  %613 = vmatpush1.msra.mxu0 0.0
  %614 = vmatprep.subr.mxu0 0.0
  %615 = vmatpush1.msra.mxu0 0.0
  %616 = vmatprep.subr.mxu0 0.0
  %617 = vmatpush1.msra.mxu0 0.0
  %618 = vmatprep.subr.mxu0 0.0
  %619 = vmatpush1.msra.mxu0 0.0
  %620 = vmatprep.subr.mxu0 0.0
  %621 = vmatpush1.msra.mxu0 0.0
  %622 = vmatprep.subr.mxu0 0.0
  %623 = vmatpush1.msra.mxu0 0.0
  %624 = vmatprep.subr.mxu0 0.0
  %625 = vmatpush1.msra.mxu0 0.0
  %626 = vmatprep.subr.mxu0 0.0
  %627 = vmatpush1.msra.mxu0 0.0
  %628 = vmatprep.subr.mxu0 0.0
  %629 = vmatpush1.msra.mxu0 0.0
  %630 = vmatprep.subr.mxu0 0.0
  %631 = vmatpush1.msra.mxu0 0.0
  %632 = vmatprep.subr.mxu0 0.0
  %633 = vmatpush1.msra.mxu0 0.0
  %634 = vmatprep.subr.mxu0 0.0
  %635 = vmatpush1.msra.mxu0 0.0
  %636 = vmatprep.subr.mxu0 0.0
  %637 = vmatpush1.msra.mxu0 0.0
  %638 = vmatprep.subr.mxu0 0.0
  %639 = vmatpush1.msra.mxu0 0.0
  %640 = vmatprep.subr.mxu0 0.0
  %641 = vmatpush1.msra.mxu0 0.0
  %642 = vmatprep.subr.mxu0 0.0
  %643 = vmatpush1.msra.mxu0 0.0
  %644 = vmatprep.subr.mxu0 0.0
  %645 = vmatpush1.msra.mxu0 0.0
  %646 = vmatprep.subr.mxu0 0.0
  %647 = vmatpush1.msra.mxu0 0.0
  %648 = vmatprep.subr.mxu0 0.0
  %649 = vmatpush1.msra.mxu0 0.0
  %650 = vmatprep.subr.mxu0 0.0
  %651 = vmatpush1.msra.mxu0 0.0
  %652 = vmatprep.subr.mxu0 0.0
  %653 = vmatpush1.msra.mxu0 0.0
  %654 = vmatprep.subr.mxu0 0.0
  %655 = vmatpush1.msra.mxu0 0.0
  %656 = vmatprep.subr.mxu0 0.0
  %657 = vmatpush1.msra.mxu0 0.0
  %658 = vmatprep.subr.mxu0 0.0
  %659 = vmatpush1.msra.mxu0 0.0
  %660 = vmatprep.subr.mxu0 0.0
  %661 = vmatpush1.msra.mxu0 0.0
  %662 = vmatprep.subr.mxu0 0.0
  %663 = vmatpush1.msra.mxu0 0.0
  %664 = vmatprep.subr.mxu0 0.0
  %665 = vmatpush1.msra.mxu0 0.0
  %666 = vmatprep.mubr.f32.mxu0 0.0
  %667 = vmatmul.mubr.f32.gmra.mrb[0].mxu0 %v597
  %v668 = vpop.f32.mrb[0].mxu0
  %v669 = vadd.f32 0.0, %v668
  %v670 = vpop.f32.mrb[0].mxu0
  %671 = vmatprep.mubr.f32.mxu0 0.0
  %672 = vmatmul.mubr.f32.gmra.mrb[0].mxu0 %v600
  %v673 = vpop.f32.mrb[0].mxu0
  %v674 = vadd.f32 0.0, %v673
  %v675 = vpop.f32.mrb[0].mxu0
  %676 = vdwg.mxu0
  %v678 = vsel %vm200, %v386, 0
  %v681 = vsel %vm200, %v391, 0
  %683 = vmatprep.subr.mxu0 0.0
  %684 = vmatpush1.msra.mxu0 %v394
  %685 = vmatprep.subr.mxu0 0.0
  %686 = vmatpush1.msra.mxu0 0.0
  %687 = vmatprep.subr.mxu0 0.0
  %688 = vmatpush1.msra.mxu0 0.0
  %689 = vmatprep.subr.mxu0 0.0
  %690 = vmatpush1.msra.mxu0 0.0
  %691 = vmatprep.subr.mxu0 0.0
  %692 = vmatpush1.msra.mxu0 0.0
  %693 = vmatprep.subr.mxu0 0.0
  %694 = vmatpush1.msra.mxu0 0.0
  %695 = vmatprep.subr.mxu0 0.0
  %696 = vmatpush1.msra.mxu0 0.0
  %697 = vmatprep.subr.mxu0 0.0
  %698 = vmatpush1.msra.mxu0 0.0
  %699 = vmatprep.subr.mxu0 0.0
  %700 = vmatpush1.msra.mxu0 0.0
  %701 = vmatprep.subr.mxu0 0.0
  %702 = vmatpush1.msra.mxu0 0.0
  %703 = vmatprep.subr.mxu0 0.0
  %704 = vmatpush1.msra.mxu0 0.0
  %705 = vmatprep.subr.mxu0 0.0
  %706 = vmatpush1.msra.mxu0 0.0
  %707 = vmatprep.subr.mxu0 0.0
  %708 = vmatpush1.msra.mxu0 0.0
  %709 = vmatprep.subr.mxu0 0.0
  %710 = vmatpush1.msra.mxu0 0.0
  %711 = vmatprep.subr.mxu0 0.0
  %712 = vmatpush1.msra.mxu0 0.0
  %713 = vmatprep.subr.mxu0 0.0
  %714 = vmatpush1.msra.mxu0 0.0
  %715 = vmatprep.subr.mxu0 0.0
  %716 = vmatpush1.msra.mxu0 0.0
  %717 = vmatprep.subr.mxu0 0.0
  %718 = vmatpush1.msra.mxu0 0.0
  %719 = vmatprep.subr.mxu0 0.0
  %720 = vmatpush1.msra.mxu0 0.0
  %721 = vmatprep.subr.mxu0 0.0
  %722 = vmatpush1.msra.mxu0 0.0
  %723 = vmatprep.subr.mxu0 0.0
  %724 = vmatpush1.msra.mxu0 0.0
  %725 = vmatprep.subr.mxu0 0.0
  %726 = vmatpush1.msra.mxu0 0.0
  %727 = vmatprep.subr.mxu0 0.0
  %728 = vmatpush1.msra.mxu0 0.0
  %729 = vmatprep.subr.mxu0 0.0
  %730 = vmatpush1.msra.mxu0 0.0
  %731 = vmatprep.subr.mxu0 0.0
  %732 = vmatpush1.msra.mxu0 0.0
  %733 = vmatprep.subr.mxu0 0.0
  %734 = vmatpush1.msra.mxu0 0.0
  %735 = vmatprep.subr.mxu0 0.0
  %736 = vmatpush1.msra.mxu0 0.0
  %737 = vmatprep.subr.mxu0 0.0
  %738 = vmatpush1.msra.mxu0 0.0
  %739 = vmatprep.subr.mxu0 0.0
  %740 = vmatpush1.msra.mxu0 0.0
  %741 = vmatprep.subr.mxu0 0.0
  %742 = vmatpush1.msra.mxu0 0.0
  %743 = vmatprep.subr.mxu0 0.0
  %744 = vmatpush1.msra.mxu0 0.0
  %745 = vmatprep.subr.mxu0 0.0
  %746 = vmatpush1.msra.mxu0 0.0
  %747 = vmatprep.mubr.f32.mxu0 0.0
  %748 = vmatmul.mubr.f32.gmra.mrb[0].mxu0 %v678
  %v749 = vpop.f32.mrb[0].mxu0
  %v750 = vadd.f32 %v669, %v749
  %v751 = vpop.f32.mrb[0].mxu0
  %752 = vmatprep.mubr.f32.mxu0 0.0
  %753 = vmatmul.mubr.f32.gmra.mrb[0].mxu0 %v681
  %v754 = vpop.f32.mrb[0].mxu0
  %v755 = vadd.f32 %v674, %v754
  %v756 = vpop.f32.mrb[0].mxu0
  %757 = vdwg.mxu0
  %758 = vrot.lane.b32.xlu0 %v186, 112
  %v759 = vpop.permute.xlu0 %758
  %760 = vrot.lane.b32.xlu0 %v191, 112
  %v761 = vpop.permute.xlu0 %760
  %762 = vrot.lane.b32.xlu0 %v186, 80
  %v763 = vpop.permute.xlu0 %762
  %764 = vrot.lane.b32.xlu0 %v191, 80
  %v765 = vpop.permute.xlu0 %764
  %v766 = vsel %vm200, %v759, 0
  %v768 = vsel %vm200, %v761, 0
  %v770 = vsel %vm200, %v763, 0
  %v772 = vsel %vm200, %v765, 0
  %774 = vmatprep.subr.mxu0 0.0
  %775 = vmatpush1.xpose.msra.mxu0 %v770
  %776 = vmatprep.subr.mxu0 0.0
  %777 = vmatpush1.xpose.msra.mxu0 %v772
  %778 = vmatprep.subr.mxu0 0.0
  %779 = vmatpush1.xpose.msra.mxu0 0.0
  %780 = vmatprep.subr.mxu0 0.0
  %781 = vmatpush1.xpose.msra.mxu0 0.0
  %782 = vmatprep.subr.mxu0 0.0
  %783 = vmatpush1.xpose.msra.mxu0 0.0
  %784 = vmatprep.subr.mxu0 0.0
  %785 = vmatpush1.xpose.msra.mxu0 0.0
  %786 = vmatprep.subr.mxu0 0.0
  %787 = vmatpush1.xpose.msra.mxu0 0.0
  %788 = vmatprep.subr.mxu0 0.0
  %789 = vmatpush1.xpose.msra.mxu0 0.0
  %790 = vmatprep.subr.mxu0 0.0
  %791 = vmatpush1.xpose.msra.mxu0 0.0
  %792 = vmatprep.subr.mxu0 0.0
  %793 = vmatpush1.xpose.msra.mxu0 0.0
  %794 = vmatprep.subr.mxu0 0.0
  %795 = vmatpush1.xpose.msra.mxu0 0.0
  %796 = vmatprep.subr.mxu0 0.0
  %797 = vmatpush1.xpose.msra.mxu0 0.0
  %798 = vmatprep.subr.mxu0 0.0
  %799 = vmatpush1.xpose.msra.mxu0 0.0
  %800 = vmatprep.subr.mxu0 0.0
  %801 = vmatpush1.xpose.msra.mxu0 0.0
  %802 = vmatprep.subr.mxu0 0.0
  %803 = vmatpush1.xpose.msra.mxu0 0.0
  %804 = vmatprep.subr.mxu0 0.0
  %805 = vmatpush1.xpose.msra.mxu0 0.0
  %806 = vmatprep.subr.mxu0 0.0
  %807 = vmatpush1.xpose.msra.mxu0 0.0
  %808 = vmatprep.subr.mxu0 0.0
  %809 = vmatpush1.xpose.msra.mxu0 0.0
  %810 = vmatprep.subr.mxu0 0.0
  %811 = vmatpush1.xpose.msra.mxu0 0.0
  %812 = vmatprep.subr.mxu0 0.0
  %813 = vmatpush1.xpose.msra.mxu0 0.0
  %814 = vmatprep.subr.mxu0 0.0
  %815 = vmatpush1.xpose.msra.mxu0 0.0
  %816 = vmatprep.subr.mxu0 0.0
  %817 = vmatpush1.xpose.msra.mxu0 0.0
  %818 = vmatprep.subr.mxu0 0.0
  %819 = vmatpush1.xpose.msra.mxu0 0.0
  %820 = vmatprep.subr.mxu0 0.0
  %821 = vmatpush1.xpose.msra.mxu0 0.0
  %822 = vmatprep.subr.mxu0 0.0
  %823 = vmatpush1.xpose.msra.mxu0 0.0
  %824 = vmatprep.subr.mxu0 0.0
  %825 = vmatpush1.xpose.msra.mxu0 0.0
  %826 = vmatprep.subr.mxu0 0.0
  %827 = vmatpush1.xpose.msra.mxu0 0.0
  %828 = vmatprep.subr.mxu0 0.0
  %829 = vmatpush1.xpose.msra.mxu0 0.0
  %830 = vmatprep.subr.mxu0 0.0
  %831 = vmatpush1.xpose.msra.mxu0 0.0
  %832 = vmatprep.subr.mxu0 0.0
  %833 = vmatpush1.xpose.msra.mxu0 0.0
  %834 = vmatprep.subr.mxu0 0.0
  %835 = vmatpush1.xpose.msra.mxu0 0.0
  %836 = vmatprep.subr.mxu0 0.0
  %837 = vmatpush1.xpose.msra.mxu0 0.0
  %838 = vmatprep.mubr.f32.mxu0 0.0
  %839 = vmatmul.mubr.f32.gmra.mrb[0].mxu0 %v766
  %v840 = vpop.f32.mrb[0].mxu0
  %v841 = vadd.f32 %v29, %v840
  %v842 = vpop.f32.mrb[0].mxu0
  %843 = vmatprep.mubr.f32.mxu0 0.0
  %844 = vmatmul.mubr.f32.gmra.mrb[0].mxu0 %v768
  %v845 = vpop.f32.mrb[0].mxu0
  %v846 = vadd.f32 %v30, %v845
  %v847 = vpop.f32.mrb[0].mxu0
  %848 = vdwg.mxu0
  %v849 = vsel %vm284, %v841, -inf
  %850 = vmax.xlane.f32.xlu0 %v849
  %v851 = vpop.xlane.xlu0 %850
  %v852 = vsel %vm284, %v846, -inf
  %853 = vmax.xlane.f32.xlu0 %v852
  %v854 = vpop.xlane.xlu0 %853
  %v855 = vsub.f32 %v841, %v851
  %v856 = vsub.f32 %v846, %v854
  %v857 = vmul.f32 %v855, 1.442695
  %v858 = vpow.pop %v857
  %v859 = vmul.f32 %v856, 1.442695
  %v860 = vpow.pop %v859
  %v861 = vsel %vm284, %v858, 0.0
  %862 = vadd.xlane.f32.xlu0 %v861
  %v863 = vpop.xlane.xlu0 %862
  %v864 = vsel %vm284, %v860, 0.0
  %865 = vadd.xlane.f32.xlu0 %v864
  %v866 = vpop.xlane.xlu0 %865
  %v867 = vrcp.pop %v863
  %v868 = vrcp.pop %v866
  %v869 = vmul.f32 %v858, %v867
  %v870 = vmul.f32 %v860, %v868
  %871 = vrot.lane.b32.xlu0 %v186, 48
  %v872 = vpop.permute.xlu0 %871
  %873 = vrot.lane.b32.xlu0 %v191, 48
  %v874 = vpop.permute.xlu0 %873
  %v878 = vsel %vm284, %v869, 0
  %v881 = vsel %vm284, %v870, 0
  %883 = vmatprep.subr.mxu0 0.0
  %884 = vmatpush1.msra.mxu0 %v872
  %885 = vmatprep.subr.mxu0 0.0
  %886 = vmatpush1.msra.mxu0 %v874
  %887 = vmatprep.subr.mxu0 0.0
  %888 = vmatpush1.msra.mxu0 0.0
  %889 = vmatprep.subr.mxu0 0.0
  %890 = vmatpush1.msra.mxu0 0.0
  %891 = vmatprep.subr.mxu0 0.0
  %892 = vmatpush1.msra.mxu0 0.0
  %893 = vmatprep.subr.mxu0 0.0
  %894 = vmatpush1.msra.mxu0 0.0
  %895 = vmatprep.subr.mxu0 0.0
  %896 = vmatpush1.msra.mxu0 0.0
  %897 = vmatprep.subr.mxu0 0.0
  %898 = vmatpush1.msra.mxu0 0.0
  %899 = vmatprep.subr.mxu0 0.0
  %900 = vmatpush1.msra.mxu0 0.0
  %901 = vmatprep.subr.mxu0 0.0
  %902 = vmatpush1.msra.mxu0 0.0
  %903 = vmatprep.subr.mxu0 0.0
  %904 = vmatpush1.msra.mxu0 0.0
  %905 = vmatprep.subr.mxu0 0.0
  %906 = vmatpush1.msra.mxu0 0.0
  %907 = vmatprep.subr.mxu0 0.0
  %908 = vmatpush1.msra.mxu0 0.0
  %909 = vmatprep.subr.mxu0 0.0
  %910 = vmatpush1.msra.mxu0 0.0
  %911 = vmatprep.subr.mxu0 0.0
  %912 = vmatpush1.msra.mxu0 0.0
  %913 = vmatprep.subr.mxu0 0.0
  %914 = vmatpush1.msra.mxu0 0.0
  %915 = vmatprep.subr.mxu0 0.0
  %916 = vmatpush1.msra.mxu0 0.0
  %917 = vmatprep.subr.mxu0 0.0
  %918 = vmatpush1.msra.mxu0 0.0
  %919 = vmatprep.subr.mxu0 0.0
  %920 = vmatpush1.msra.mxu0 0.0
  %921 = vmatprep.subr.mxu0 0.0
  %922 = vmatpush1.msra.mxu0 0.0
  %923 = vmatprep.subr.mxu0 0.0
  %924 = vmatpush1.msra.mxu0 0.0
  %925 = vmatprep.subr.mxu0 0.0
  %926 = vmatpush1.msra.mxu0 0.0
  %927 = vmatprep.subr.mxu0 0.0
  %928 = vmatpush1.msra.mxu0 0.0
  %929 = vmatprep.subr.mxu0 0.0
  %930 = vmatpush1.msra.mxu0 0.0
  %931 = vmatprep.subr.mxu0 0.0
  %932 = vmatpush1.msra.mxu0 0.0
  %933 = vmatprep.subr.mxu0 0.0
  %934 = vmatpush1.msra.mxu0 0.0
  %935 = vmatprep.subr.mxu0 0.0
  %936 = vmatpush1.msra.mxu0 0.0
  %937 = vmatprep.subr.mxu0 0.0
  %938 = vmatpush1.msra.mxu0 0.0
  %939 = vmatprep.subr.mxu0 0.0
  %940 = vmatpush1.msra.mxu0 0.0
  %941 = vmatprep.subr.mxu0 0.0
  %942 = vmatpush1.msra.mxu0 0.0
  %943 = vmatprep.subr.mxu0 0.0
  %944 = vmatpush1.msra.mxu0 0.0
  %945 = vmatprep.subr.mxu0 0.0
  %946 = vmatpush1.msra.mxu0 0.0
  %947 = vmatprep.mubr.f32.mxu0 0.0
  %948 = vmatmul.mubr.f32.gmra.mrb[0].mxu0 %v878
  %v949 = vpop.f32.mrb[0].mxu0
  %v950 = vadd.f32 0.0, %v949
  %v951 = vpop.f32.mrb[0].mxu0
  %952 = vmatprep.mubr.f32.mxu0 0.0
  %953 = vmatmul.mubr.f32.gmra.mrb[0].mxu0 %v881
  %v954 = vpop.f32.mrb[0].mxu0
  %v955 = vadd.f32 0.0, %v954
  %v956 = vpop.f32.mrb[0].mxu0
  %957 = vdwg.mxu0
  %v958 = vld [vmem:[%s2 + $0x90] sm:$0xff]
  %v960 = vsel %vm200, %v950, 0
  %v963 = vsel %vm200, %v955, 0
  %965 = vmatprep.subr.mxu0 0.0
  %966 = vmatpush1.msra.mxu0 %v958
  %967 = vmatprep.subr.mxu0 0.0
  %968 = vmatpush1.msra.mxu0 0.0
  %969 = vmatprep.subr.mxu0 0.0
  %970 = vmatpush1.msra.mxu0 0.0
  %971 = vmatprep.subr.mxu0 0.0
  %972 = vmatpush1.msra.mxu0 0.0
  %973 = vmatprep.subr.mxu0 0.0
  %974 = vmatpush1.msra.mxu0 0.0
  %975 = vmatprep.subr.mxu0 0.0
  %976 = vmatpush1.msra.mxu0 0.0
  %977 = vmatprep.subr.mxu0 0.0
  %978 = vmatpush1.msra.mxu0 0.0
  %979 = vmatprep.subr.mxu0 0.0
  %980 = vmatpush1.msra.mxu0 0.0
  %981 = vmatprep.subr.mxu0 0.0
  %982 = vmatpush1.msra.mxu0 0.0
  %983 = vmatprep.subr.mxu0 0.0
  %984 = vmatpush1.msra.mxu0 0.0
  %985 = vmatprep.subr.mxu0 0.0
  %986 = vmatpush1.msra.mxu0 0.0
  %987 = vmatprep.subr.mxu0 0.0
  %988 = vmatpush1.msra.mxu0 0.0
  %989 = vmatprep.subr.mxu0 0.0
  %990 = vmatpush1.msra.mxu0 0.0
  %991 = vmatprep.subr.mxu0 0.0
  %992 = vmatpush1.msra.mxu0 0.0
  %993 = vmatprep.subr.mxu0 0.0
  %994 = vmatpush1.msra.mxu0 0.0
  %995 = vmatprep.subr.mxu0 0.0
  %996 = vmatpush1.msra.mxu0 0.0
  %997 = vmatprep.subr.mxu0 0.0
  %998 = vmatpush1.msra.mxu0 0.0
  %999 = vmatprep.subr.mxu0 0.0
  %1000 = vmatpush1.msra.mxu0 0.0
  %1001 = vmatprep.subr.mxu0 0.0
  %1002 = vmatpush1.msra.mxu0 0.0
  %1003 = vmatprep.subr.mxu0 0.0
  %1004 = vmatpush1.msra.mxu0 0.0
  %1005 = vmatprep.subr.mxu0 0.0
  %1006 = vmatpush1.msra.mxu0 0.0
  %1007 = vmatprep.subr.mxu0 0.0
  %1008 = vmatpush1.msra.mxu0 0.0
  %1009 = vmatprep.subr.mxu0 0.0
  %1010 = vmatpush1.msra.mxu0 0.0
  %1011 = vmatprep.subr.mxu0 0.0
  %1012 = vmatpush1.msra.mxu0 0.0
  %1013 = vmatprep.subr.mxu0 0.0
  %1014 = vmatpush1.msra.mxu0 0.0
  %1015 = vmatprep.subr.mxu0 0.0
  %1016 = vmatpush1.msra.mxu0 0.0
  %1017 = vmatprep.subr.mxu0 0.0
  %1018 = vmatpush1.msra.mxu0 0.0
  %1019 = vmatprep.subr.mxu0 0.0
  %1020 = vmatpush1.msra.mxu0 0.0
  %1021 = vmatprep.subr.mxu0 0.0
  %1022 = vmatpush1.msra.mxu0 0.0
  %1023 = vmatprep.subr.mxu0 0.0
  %1024 = vmatpush1.msra.mxu0 0.0
  %1025 = vmatprep.subr.mxu0 0.0
  %1026 = vmatpush1.msra.mxu0 0.0
  %1027 = vmatprep.subr.mxu0 0.0
  %1028 = vmatpush1.msra.mxu0 0.0
  %1029 = vmatprep.mubr.f32.mxu0 0.0
  %1030 = vmatmul.mubr.f32.gmra.mrb[0].mxu0 %v960
  %v1031 = vpop.f32.mrb[0].mxu0
  %v1032 = vadd.f32 0.0, %v1031
  %v1033 = vpop.f32.mrb[0].mxu0
  %1034 = vmatprep.mubr.f32.mxu0 0.0
  %1035 = vmatmul.mubr.f32.gmra.mrb[0].mxu0 %v963
  %v1036 = vpop.f32.mrb[0].mxu0
  %v1037 = vadd.f32 0.0, %v1036
  %v1038 = vpop.f32.mrb[0].mxu0
  %1039 = vdwg.mxu0
  %v1040 = vadd.f32 %v750, %v1032
  %v1041 = vadd.f32 %v755, %v1037
  %1042 = vrot.lane.b32.xlu0 %v186, 104
  %v1043 = vpop.permute.xlu0 %1042
  %1044 = vrot.lane.b32.xlu0 %v191, 104
  %v1045 = vpop.permute.xlu0 %1044
  %1046 = vrot.lane.b32.xlu0 %v186, 72
  %v1047 = vpop.permute.xlu0 %1046
  %1048 = vrot.lane.b32.xlu0 %v191, 72
  %v1049 = vpop.permute.xlu0 %1048
  %v1050 = vsel %vm200, %v1043, 0
  %v1052 = vsel %vm200, %v1045, 0
  %v1054 = vsel %vm200, %v1047, 0
  %v1056 = vsel %vm200, %v1049, 0
  %1058 = vmatprep.subr.mxu0 0.0
  %1059 = vmatpush1.xpose.msra.mxu0 %v1054
  %1060 = vmatprep.subr.mxu0 0.0
  %1061 = vmatpush1.xpose.msra.mxu0 %v1056
  %1062 = vmatprep.subr.mxu0 0.0
  %1063 = vmatpush1.xpose.msra.mxu0 0.0
  %1064 = vmatprep.subr.mxu0 0.0
  %1065 = vmatpush1.xpose.msra.mxu0 0.0
  %1066 = vmatprep.subr.mxu0 0.0
  %1067 = vmatpush1.xpose.msra.mxu0 0.0
  %1068 = vmatprep.subr.mxu0 0.0
  %1069 = vmatpush1.xpose.msra.mxu0 0.0
  %1070 = vmatprep.subr.mxu0 0.0
  %1071 = vmatpush1.xpose.msra.mxu0 0.0
  %1072 = vmatprep.subr.mxu0 0.0
  %1073 = vmatpush1.xpose.msra.mxu0 0.0
  %1074 = vmatprep.subr.mxu0 0.0
  %1075 = vmatpush1.xpose.msra.mxu0 0.0
  %1076 = vmatprep.subr.mxu0 0.0
  %1077 = vmatpush1.xpose.msra.mxu0 0.0
  %1078 = vmatprep.subr.mxu0 0.0
  %1079 = vmatpush1.xpose.msra.mxu0 0.0
  %1080 = vmatprep.subr.mxu0 0.0
  %1081 = vmatpush1.xpose.msra.mxu0 0.0
  %1082 = vmatprep.subr.mxu0 0.0
  %1083 = vmatpush1.xpose.msra.mxu0 0.0
  %1084 = vmatprep.subr.mxu0 0.0
  %1085 = vmatpush1.xpose.msra.mxu0 0.0
  %1086 = vmatprep.subr.mxu0 0.0
  %1087 = vmatpush1.xpose.msra.mxu0 0.0
  %1088 = vmatprep.subr.mxu0 0.0
  %1089 = vmatpush1.xpose.msra.mxu0 0.0
  %1090 = vmatprep.subr.mxu0 0.0
  %1091 = vmatpush1.xpose.msra.mxu0 0.0
  %1092 = vmatprep.subr.mxu0 0.0
  %1093 = vmatpush1.xpose.msra.mxu0 0.0
  %1094 = vmatprep.subr.mxu0 0.0
  %1095 = vmatpush1.xpose.msra.mxu0 0.0
  %1096 = vmatprep.subr.mxu0 0.0
  %1097 = vmatpush1.xpose.msra.mxu0 0.0
  %1098 = vmatprep.subr.mxu0 0.0
  %1099 = vmatpush1.xpose.msra.mxu0 0.0
  %1100 = vmatprep.subr.mxu0 0.0
  %1101 = vmatpush1.xpose.msra.mxu0 0.0
  %1102 = vmatprep.subr.mxu0 0.0
  %1103 = vmatpush1.xpose.msra.mxu0 0.0
  %1104 = vmatprep.subr.mxu0 0.0
  %1105 = vmatpush1.xpose.msra.mxu0 0.0
  %1106 = vmatprep.subr.mxu0 0.0
  %1107 = vmatpush1.xpose.msra.mxu0 0.0
  %1108 = vmatprep.subr.mxu0 0.0
  %1109 = vmatpush1.xpose.msra.mxu0 0.0
  %1110 = vmatprep.subr.mxu0 0.0
  %1111 = vmatpush1.xpose.msra.mxu0 0.0
  %1112 = vmatprep.subr.mxu0 0.0
  %1113 = vmatpush1.xpose.msra.mxu0 0.0
  %1114 = vmatprep.subr.mxu0 0.0
  %1115 = vmatpush1.xpose.msra.mxu0 0.0
  %1116 = vmatprep.subr.mxu0 0.0
  %1117 = vmatpush1.xpose.msra.mxu0 0.0
  %1118 = vmatprep.subr.mxu0 0.0
  %1119 = vmatpush1.xpose.msra.mxu0 0.0
  %1120 = vmatprep.subr.mxu0 0.0
  %1121 = vmatpush1.xpose.msra.mxu0 0.0
  %1122 = vmatprep.mubr.f32.mxu0 0.0
  %1123 = vmatmul.mubr.f32.gmra.mrb[0].mxu0 %v1050
  %v1124 = vpop.f32.mrb[0].mxu0
  %v1125 = vadd.f32 %v29, %v1124
  %v1126 = vpop.f32.mrb[0].mxu0
  %1127 = vmatprep.mubr.f32.mxu0 0.0
  %1128 = vmatmul.mubr.f32.gmra.mrb[0].mxu0 %v1052
  %v1129 = vpop.f32.mrb[0].mxu0
  %v1130 = vadd.f32 %v30, %v1129
  %v1131 = vpop.f32.mrb[0].mxu0
  %1132 = vdwg.mxu0
  %v1133 = vsel %vm284, %v1125, -inf
  %1134 = vmax.xlane.f32.xlu0 %v1133
  %v1135 = vpop.xlane.xlu0 %1134
  %v1136 = vsel %vm284, %v1130, -inf
  %1137 = vmax.xlane.f32.xlu0 %v1136
  %v1138 = vpop.xlane.xlu0 %1137
  %v1139 = vsub.f32 %v1125, %v1135
  %v1140 = vsub.f32 %v1130, %v1138
  %v1141 = vmul.f32 %v1139, 1.442695
  %v1142 = vpow.pop %v1141
  %v1143 = vmul.f32 %v1140, 1.442695
  %v1144 = vpow.pop %v1143
  %v1145 = vsel %vm284, %v1142, 0.0
  %1146 = vadd.xlane.f32.xlu0 %v1145
  %v1147 = vpop.xlane.xlu0 %1146
  %v1148 = vsel %vm284, %v1144, 0.0
  %1149 = vadd.xlane.f32.xlu0 %v1148
  %v1150 = vpop.xlane.xlu0 %1149
  %v1151 = vrcp.pop %v1147
  %v1152 = vrcp.pop %v1150
  %v1153 = vmul.f32 %v1142, %v1151
  %v1154 = vmul.f32 %v1144, %v1152
  %1155 = vrot.lane.b32.xlu0 %v186, 40
  %v1156 = vpop.permute.xlu0 %1155
  %1157 = vrot.lane.b32.xlu0 %v191, 40
  %v1158 = vpop.permute.xlu0 %1157
  %v1162 = vsel %vm284, %v1153, 0
  %v1165 = vsel %vm284, %v1154, 0
  %1167 = vmatprep.subr.mxu0 0.0
  %1168 = vmatpush1.msra.mxu0 %v1156
  %1169 = vmatprep.subr.mxu0 0.0
  %1170 = vmatpush1.msra.mxu0 %v1158
  %1171 = vmatprep.subr.mxu0 0.0
  %1172 = vmatpush1.msra.mxu0 0.0
  %1173 = vmatprep.subr.mxu0 0.0
  %1174 = vmatpush1.msra.mxu0 0.0
  %1175 = vmatprep.subr.mxu0 0.0
  %1176 = vmatpush1.msra.mxu0 0.0
  %1177 = vmatprep.subr.mxu0 0.0
  %1178 = vmatpush1.msra.mxu0 0.0
  %1179 = vmatprep.subr.mxu0 0.0
  %1180 = vmatpush1.msra.mxu0 0.0
  %1181 = vmatprep.subr.mxu0 0.0
  %1182 = vmatpush1.msra.mxu0 0.0
  %1183 = vmatprep.subr.mxu0 0.0
  %1184 = vmatpush1.msra.mxu0 0.0
  %1185 = vmatprep.subr.mxu0 0.0
  %1186 = vmatpush1.msra.mxu0 0.0
  %1187 = vmatprep.subr.mxu0 0.0
  %1188 = vmatpush1.msra.mxu0 0.0
  %1189 = vmatprep.subr.mxu0 0.0
  %1190 = vmatpush1.msra.mxu0 0.0
  %1191 = vmatprep.subr.mxu0 0.0
  %1192 = vmatpush1.msra.mxu0 0.0
  %1193 = vmatprep.subr.mxu0 0.0
  %1194 = vmatpush1.msra.mxu0 0.0
  %1195 = vmatprep.subr.mxu0 0.0
  %1196 = vmatpush1.msra.mxu0 0.0
  %1197 = vmatprep.subr.mxu0 0.0
  %1198 = vmatpush1.msra.mxu0 0.0
  %1199 = vmatprep.subr.mxu0 0.0
  %1200 = vmatpush1.msra.mxu0 0.0
  %1201 = vmatprep.subr.mxu0 0.0
  %1202 = vmatpush1.msra.mxu0 0.0
  %1203 = vmatprep.subr.mxu0 0.0
  %1204 = vmatpush1.msra.mxu0 0.0
  %1205 = vmatprep.subr.mxu0 0.0
  %1206 = vmatpush1.msra.mxu0 0.0
  %1207 = vmatprep.subr.mxu0 0.0
  %1208 = vmatpush1.msra.mxu0 0.0
  %1209 = vmatprep.subr.mxu0 0.0
  %1210 = vmatpush1.msra.mxu0 0.0
  %1211 = vmatprep.subr.mxu0 0.0
  %1212 = vmatpush1.msra.mxu0 0.0
  %1213 = vmatprep.subr.mxu0 0.0
  %1214 = vmatpush1.msra.mxu0 0.0
  %1215 = vmatprep.subr.mxu0 0.0
  %1216 = vmatpush1.msra.mxu0 0.0
  %1217 = vmatprep.subr.mxu0 0.0
  %1218 = vmatpush1.msra.mxu0 0.0
  %1219 = vmatprep.subr.mxu0 0.0
  %1220 = vmatpush1.msra.mxu0 0.0
  %1221 = vmatprep.subr.mxu0 0.0
  %1222 = vmatpush1.msra.mxu0 0.0
  %1223 = vmatprep.subr.mxu0 0.0
  %1224 = vmatpush1.msra.mxu0 0.0
  %1225 = vmatprep.subr.mxu0 0.0
  %1226 = vmatpush1.msra.mxu0 0.0
  %1227 = vmatprep.subr.mxu0 0.0
  %1228 = vmatpush1.msra.mxu0 0.0
  %1229 = vmatprep.subr.mxu0 0.0
  %1230 = vmatpush1.msra.mxu0 0.0
  %1231 = vmatprep.mubr.f32.mxu0 0.0
  %1232 = vmatmul.mubr.f32.gmra.mrb[0].mxu0 %v1162
  %v1233 = vpop.f32.mrb[0].mxu0
  %v1234 = vadd.f32 0.0, %v1233
  %v1235 = vpop.f32.mrb[0].mxu0
  %1236 = vmatprep.mubr.f32.mxu0 0.0
  %1237 = vmatmul.mubr.f32.gmra.mrb[0].mxu0 %v1165
  %v1238 = vpop.f32.mrb[0].mxu0
  %v1239 = vadd.f32 0.0, %v1238
  %v1240 = vpop.f32.mrb[0].mxu0
  %1241 = vdwg.mxu0
  %v1242 = vld [vmem:[%s2 + $0x98] sm:$0xff]
  %v1244 = vsel %vm200, %v1234, 0
  %v1247 = vsel %vm200, %v1239, 0
  %1249 = vmatprep.subr.mxu0 0.0
  %1250 = vmatpush1.msra.mxu0 %v1242
  %1251 = vmatprep.subr.mxu0 0.0
  %1252 = vmatpush1.msra.mxu0 0.0
  %1253 = vmatprep.subr.mxu0 0.0
  %1254 = vmatpush1.msra.mxu0 0.0
  %1255 = vmatprep.subr.mxu0 0.0
  %1256 = vmatpush1.msra.mxu0 0.0
  %1257 = vmatprep.subr.mxu0 0.0
  %1258 = vmatpush1.msra.mxu0 0.0
  %1259 = vmatprep.subr.mxu0 0.0
  %1260 = vmatpush1.msra.mxu0 0.0
  %1261 = vmatprep.subr.mxu0 0.0
  %1262 = vmatpush1.msra.mxu0 0.0
  %1263 = vmatprep.subr.mxu0 0.0
  %1264 = vmatpush1.msra.mxu0 0.0
  %1265 = vmatprep.subr.mxu0 0.0
  %1266 = vmatpush1.msra.mxu0 0.0
  %1267 = vmatprep.subr.mxu0 0.0
  %1268 = vmatpush1.msra.mxu0 0.0
  %1269 = vmatprep.subr.mxu0 0.0
  %1270 = vmatpush1.msra.mxu0 0.0
  %1271 = vmatprep.subr.mxu0 0.0
  %1272 = vmatpush1.msra.mxu0 0.0
  %1273 = vmatprep.subr.mxu0 0.0
  %1274 = vmatpush1.msra.mxu0 0.0
  %1275 = vmatprep.subr.mxu0 0.0
  %1276 = vmatpush1.msra.mxu0 0.0
  %1277 = vmatprep.subr.mxu0 0.0
  %1278 = vmatpush1.msra.mxu0 0.0
  %1279 = vmatprep.subr.mxu0 0.0
  %1280 = vmatpush1.msra.mxu0 0.0
  %1281 = vmatprep.subr.mxu0 0.0
  %1282 = vmatpush1.msra.mxu0 0.0
  %1283 = vmatprep.subr.mxu0 0.0
  %1284 = vmatpush1.msra.mxu0 0.0
  %1285 = vmatprep.subr.mxu0 0.0
  %1286 = vmatpush1.msra.mxu0 0.0
  %1287 = vmatprep.subr.mxu0 0.0
  %1288 = vmatpush1.msra.mxu0 0.0
  %1289 = vmatprep.subr.mxu0 0.0
  %1290 = vmatpush1.msra.mxu0 0.0
  %1291 = vmatprep.subr.mxu0 0.0
  %1292 = vmatpush1.msra.mxu0 0.0
  %1293 = vmatprep.subr.mxu0 0.0
  %1294 = vmatpush1.msra.mxu0 0.0
  %1295 = vmatprep.subr.mxu0 0.0
  %1296 = vmatpush1.msra.mxu0 0.0
  %1297 = vmatprep.subr.mxu0 0.0
  %1298 = vmatpush1.msra.mxu0 0.0
  %1299 = vmatprep.subr.mxu0 0.0
  %1300 = vmatpush1.msra.mxu0 0.0
  %1301 = vmatprep.subr.mxu0 0.0
  %1302 = vmatpush1.msra.mxu0 0.0
  %1303 = vmatprep.subr.mxu0 0.0
  %1304 = vmatpush1.msra.mxu0 0.0
  %1305 = vmatprep.subr.mxu0 0.0
  %1306 = vmatpush1.msra.mxu0 0.0
  %1307 = vmatprep.subr.mxu0 0.0
  %1308 = vmatpush1.msra.mxu0 0.0
  %1309 = vmatprep.subr.mxu0 0.0
  %1310 = vmatpush1.msra.mxu0 0.0
  %1311 = vmatprep.subr.mxu0 0.0
  %1312 = vmatpush1.msra.mxu0 0.0
  %1313 = vmatprep.mubr.f32.mxu0 0.0
  %1314 = vmatmul.mubr.f32.gmra.mrb[0].mxu0 %v1244
  %v1315 = vpop.f32.mrb[0].mxu0
  %v1316 = vadd.f32 0.0, %v1315
  %v1317 = vpop.f32.mrb[0].mxu0
  %1318 = vmatprep.mubr.f32.mxu0 0.0
  %1319 = vmatmul.mubr.f32.gmra.mrb[0].mxu0 %v1247
  %v1320 = vpop.f32.mrb[0].mxu0
  %v1321 = vadd.f32 0.0, %v1320
  %v1322 = vpop.f32.mrb[0].mxu0
  %1323 = vdwg.mxu0
  %v1324 = vadd.f32 %v1040, %v1316
  %v1325 = vadd.f32 %v1041, %v1321
  %v1326 = vadd.f32 %v17, %v1324
  %v1327 = vadd.f32 %v18, %v1325
  %v1328 = vlaneseq
  %v1329 = vshrl.u32 %v1328, 7
  %v1330 = vsub.s32 0, %v1329
  %v1331 = vrot.slane %v48, %v1330
  %v1332 = vadd.f32 %v1326, %v1331
  %v1333 = vadd.f32 %v1327, %v1331
  %v1334 = vsel %vm55, %v1332, 0.0
  %1335 = vadd.xlane.f32.xlu0 %v1334
  %v1336 = vpop.xlane.xlu0 %1335
  %v1337 = vsel %vm55, %v1333, 0.0
  %1338 = vadd.xlane.f32.xlu0 %v1337
  %v1339 = vpop.xlane.xlu0 %1338
  %v1340 = vmul.f32 %v1336, %v62
  %v1341 = vmul.f32 %v1339, %v62
  %v1342 = vsub.f32 %v1332, %v1340
  %v1343 = vsub.f32 %v1333, %v1341
  %v1344 = vmul.f32 %v1342, %v1342
  %v1345 = vmul.f32 %v1343, %v1343
  %v1346 = vsel %vm55, %v1344, 0.0
  %1347 = vadd.xlane.f32.xlu0 %v1346
  %v1348 = vpop.xlane.xlu0 %1347
  %v1349 = vsel %vm55, %v1345, 0.0
  %1350 = vadd.xlane.f32.xlu0 %v1349
  %v1351 = vpop.xlane.xlu0 %1350
  %v1352 = vmul.f32 %v1348, 0.032258064
  %v1353 = vmul.f32 %v1351, 0.032258064
  %v1354 = vrsqrt.pop %v1352
  %v1355 = vmul.f32 %v1352, %v1354
  %vm1356 = vcmp.eq.f32.partialorder %v1352, inf
  %v1357 = vsel %vm1356, %v1352, %v1355
  %vm1358 = vcmp.eq.f32.partialorder %v1352, 0.0
  %v1359 = vand.u32 %v1352, 2147483648
  %v1360 = vsel %vm1358, %v1359, %v1357
  %v1361 = vrsqrt.pop %v1353
  %v1362 = vmul.f32 %v1353, %v1361
  %vm1363 = vcmp.eq.f32.partialorder %v1353, inf
  %v1364 = vsel %vm1363, %v1353, %v1362
  %vm1365 = vcmp.eq.f32.partialorder %v1353, 0.0
  %v1366 = vand.u32 %v1353, 2147483648
  %v1367 = vsel %vm1365, %v1366, %v1364
  %v1368 = vadd.f32 %v1360, 1e-06
  %v1369 = vadd.f32 %v1367, 1e-06
  %v1370 = vrcp.pop %v1368
  %v1371 = vrcp.pop %v1369
  %v1372 = vmul.f32 %v1342, %v1370
  %v1373 = vmul.f32 %v1343, %v1371
  %v1374 = vlaneseq
  %v1375 = vshrl.u32 %v1374, 7
  %v1376 = vsub.s32 0, %v1375
  %v1377 = vrot.slane %v53, %v1376
  %v1378 = vmul.f32 %v1377, %v1372
  %v1379 = vmul.f32 %v1377, %v1373
  %v1380 = vlaneseq
  %v1381 = vshrl.u32 %v1380, 7
  %v1382 = vsub.s32 0, %v1381
  %v1383 = vrot.slane %v54, %v1382
  %v1384 = vadd.f32 %v1378, %v1383
  %v1385 = vadd.f32 %v1379, %v1383
  %v1386 = vlaneseq
  %v1387 = vshrl.u32 %v1386, 7
  %v1388 = vsub.s32 0, %v1387
  %v1389 = vrot.slane %v49, %v1388
  %v1391 = vsel %vm55, %v1384, 0
  %v1394 = vsel %vm55, %v1385, 0
  %1396 = vmatprep.subr.mxu0 0.0
  %1397 = vmatpush1.msra.mxu0 %v35
  %1398 = vmatprep.subr.mxu0 0.0
  %1399 = vmatpush1.msra.mxu0 %v36
  %1400 = vmatprep.subr.mxu0 0.0
  %1401 = vmatpush1.msra.mxu0 %v37
  %1402 = vmatprep.subr.mxu0 0.0
  %1403 = vmatpush1.msra.mxu0 %v38
  %1404 = vmatprep.subr.mxu0 0.0
  %1405 = vmatpush1.msra.mxu0 0.0
  %1406 = vmatprep.subr.mxu0 0.0
  %1407 = vmatpush1.msra.mxu0 0.0
  %1408 = vmatprep.subr.mxu0 0.0
  %1409 = vmatpush1.msra.mxu0 0.0
  %1410 = vmatprep.subr.mxu0 0.0
  %1411 = vmatpush1.msra.mxu0 0.0
  %1412 = vmatprep.subr.mxu0 0.0
  %1413 = vmatpush1.msra.mxu0 0.0
  %1414 = vmatprep.subr.mxu0 0.0
  %1415 = vmatpush1.msra.mxu0 0.0
  %1416 = vmatprep.subr.mxu0 0.0
  %1417 = vmatpush1.msra.mxu0 0.0
  %1418 = vmatprep.subr.mxu0 0.0
  %1419 = vmatpush1.msra.mxu0 0.0
  %1420 = vmatprep.subr.mxu0 0.0
  %1421 = vmatpush1.msra.mxu0 0.0
  %1422 = vmatprep.subr.mxu0 0.0
  %1423 = vmatpush1.msra.mxu0 0.0
  %1424 = vmatprep.subr.mxu0 0.0
  %1425 = vmatpush1.msra.mxu0 0.0
  %1426 = vmatprep.subr.mxu0 0.0
  %1427 = vmatpush1.msra.mxu0 0.0
  %1428 = vmatprep.subr.mxu0 0.0
  %1429 = vmatpush1.msra.mxu0 0.0
  %1430 = vmatprep.subr.mxu0 0.0
  %1431 = vmatpush1.msra.mxu0 0.0
  %1432 = vmatprep.subr.mxu0 0.0
  %1433 = vmatpush1.msra.mxu0 0.0
  %1434 = vmatprep.subr.mxu0 0.0
  %1435 = vmatpush1.msra.mxu0 0.0
  %1436 = vmatprep.subr.mxu0 0.0
  %1437 = vmatpush1.msra.mxu0 0.0
  %1438 = vmatprep.subr.mxu0 0.0
  %1439 = vmatpush1.msra.mxu0 0.0
  %1440 = vmatprep.subr.mxu0 0.0
  %1441 = vmatpush1.msra.mxu0 0.0
  %1442 = vmatprep.subr.mxu0 0.0
  %1443 = vmatpush1.msra.mxu0 0.0
  %1444 = vmatprep.subr.mxu0 0.0
  %1445 = vmatpush1.msra.mxu0 0.0
  %1446 = vmatprep.subr.mxu0 0.0
  %1447 = vmatpush1.msra.mxu0 0.0
  %1448 = vmatprep.subr.mxu0 0.0
  %1449 = vmatpush1.msra.mxu0 0.0
  %1450 = vmatprep.subr.mxu0 0.0
  %1451 = vmatpush1.msra.mxu0 0.0
  %1452 = vmatprep.subr.mxu0 0.0
  %1453 = vmatpush1.msra.mxu0 0.0
  %1454 = vmatprep.subr.mxu0 0.0
  %1455 = vmatpush1.msra.mxu0 0.0
  %1456 = vmatprep.subr.mxu0 0.0
  %1457 = vmatpush1.msra.mxu0 0.0
  %1458 = vmatprep.subr.mxu0 0.0
  %1459 = vmatpush1.msra.mxu0 0.0
  %1460 = vmatprep.mubr.f32.mxu0 0.0
  %1461 = vmatmul.mubr.f32.gmra.mrb[0].mxu0 %v1391
  %v1462 = vpop.f32.mrb[0].mxu0
  %v1463 = vadd.f32 %v1389, %v1462
  %v1464 = vpop.f32.mrb[0].mxu0
  %1465 = vmatprep.mubr.f32.mxu0 0.0
  %1466 = vmatmul.mubr.f32.gmra.mrb[0].mxu0 %v1394
  %v1467 = vpop.f32.mrb[0].mxu0
  %v1468 = vadd.f32 %v1389, %v1467
  %v1469 = vpop.f32.mrb[0].mxu0
  %1470 = vdwg.mxu0
  %v1471 = vmax.f32 %v1463, 0.0
  %v1472 = vmax.f32 %v1468, 0.0
  %vm1473 = vcmask 523264
  %v1475 = vsel %vm1473, %v1471, 0
  %v1478 = vsel %vm1473, %v1472, 0
  %1480 = vmatprep.subr.mxu0 0.0
  %1481 = vmatpush1.msra.mxu0 %v39
  %1482 = vmatprep.subr.mxu0 0.0
  %1483 = vmatpush1.msra.mxu0 %v40
  %1484 = vmatprep.subr.mxu0 0.0
  %1485 = vmatpush1.msra.mxu0 %v41
  %1486 = vmatprep.subr.mxu0 0.0
  %1487 = vmatpush1.msra.mxu0 %v42
  %1488 = vmatprep.subr.mxu0 0.0
  %1489 = vmatpush1.msra.mxu0 %v43
  %1490 = vmatprep.subr.mxu0 0.0
  %1491 = vmatpush1.msra.mxu0 %v44
  %1492 = vmatprep.subr.mxu0 0.0
  %1493 = vmatpush1.msra.mxu0 %v45
  %1494 = vmatprep.subr.mxu0 0.0
  %1495 = vmatpush1.msra.mxu0 %v46
  %1496 = vmatprep.subr.mxu0 0.0
  %1497 = vmatpush1.msra.mxu0 0.0
  %1498 = vmatprep.subr.mxu0 0.0
  %1499 = vmatpush1.msra.mxu0 0.0
  %1500 = vmatprep.subr.mxu0 0.0
  %1501 = vmatpush1.msra.mxu0 0.0
  %1502 = vmatprep.subr.mxu0 0.0
  %1503 = vmatpush1.msra.mxu0 0.0
  %1504 = vmatprep.subr.mxu0 0.0
  %1505 = vmatpush1.msra.mxu0 0.0
  %1506 = vmatprep.subr.mxu0 0.0
  %1507 = vmatpush1.msra.mxu0 0.0
  %1508 = vmatprep.subr.mxu0 0.0
  %1509 = vmatpush1.msra.mxu0 0.0
  %1510 = vmatprep.subr.mxu0 0.0
  %1511 = vmatpush1.msra.mxu0 0.0
  %1512 = vmatprep.subr.mxu0 0.0
  %1513 = vmatpush1.msra.mxu0 0.0
  %1514 = vmatprep.subr.mxu0 0.0
  %1515 = vmatpush1.msra.mxu0 0.0
  %1516 = vmatprep.subr.mxu0 0.0
  %1517 = vmatpush1.msra.mxu0 0.0
  %1518 = vmatprep.subr.mxu0 0.0
  %1519 = vmatpush1.msra.mxu0 0.0
  %1520 = vmatprep.subr.mxu0 0.0
  %1521 = vmatpush1.msra.mxu0 0.0
  %1522 = vmatprep.subr.mxu0 0.0
  %1523 = vmatpush1.msra.mxu0 0.0
  %1524 = vmatprep.subr.mxu0 0.0
  %1525 = vmatpush1.msra.mxu0 0.0
  %1526 = vmatprep.subr.mxu0 0.0
  %1527 = vmatpush1.msra.mxu0 0.0
  %1528 = vmatprep.subr.mxu0 0.0
  %1529 = vmatpush1.msra.mxu0 0.0
  %1530 = vmatprep.subr.mxu0 0.0
  %1531 = vmatpush1.msra.mxu0 0.0
  %1532 = vmatprep.subr.mxu0 0.0
  %1533 = vmatpush1.msra.mxu0 0.0
  %1534 = vmatprep.subr.mxu0 0.0
  %1535 = vmatpush1.msra.mxu0 0.0
  %1536 = vmatprep.subr.mxu0 0.0
  %1537 = vmatpush1.msra.mxu0 0.0
  %1538 = vmatprep.subr.mxu0 0.0
  %1539 = vmatpush1.msra.mxu0 0.0
  %1540 = vmatprep.subr.mxu0 0.0
  %1541 = vmatpush1.msra.mxu0 0.0
  %1542 = vmatprep.subr.mxu0 0.0
  %1543 = vmatpush1.msra.mxu0 0.0
  %1544 = vmatprep.mubr.f32.mxu0 0.0
  %1545 = vmatmul.mubr.f32.gmra.mrb[0].mxu0 %v1475
  %v1546 = vpop.f32.mrb[0].mxu0
  %v1547 = vadd.f32 0.0, %v1546
  %v1548 = vpop.f32.mrb[0].mxu0
  %1549 = vmatprep.mubr.f32.mxu0 0.0
  %1550 = vmatmul.mubr.f32.gmra.mrb[0].mxu0 %v1478
  %v1551 = vpop.f32.mrb[0].mxu0
  %v1552 = vadd.f32 0.0, %v1551
  %v1553 = vpop.f32.mrb[0].mxu0
  %1554 = vdwg.mxu0
  %v1555 = vadd.f32 %v1332, %v1547
  %v1556 = vadd.f32 %v1333, %v1552
  %v1557 = vlaneseq
  %v1558 = vshrl.u32 %v1557, 7
  %v1559 = vsub.s32 0, %v1558
  %v1560 = vrot.slane %v50, %v1559
  %v1561 = vadd.f32 %v1555, %v1560
  %v1562 = vadd.f32 %v1556, %v1560
  %s1563 = scalar_lea.vmem %s2, 168
  %v1564 = vld [vmem:[%s1563] sm:$0xff]
  %v1565 = vld [vmem:[%s1563 + $0x8] sm:$0xff]
  %v1566 = vld [vmem:[%s1563 + $0x10] sm:$0xff]
  %v1567 = vld [vmem:[%s1563 + $0x18] sm:$0xff]
  %v1568 = vld [vmem:[%s1563 + $0x20] sm:$0xff]
  %v1569 = vld [vmem:[%s1563 + $0x28] sm:$0xff]
  %v1570 = vld [vmem:[%s1563 + $0x30] sm:$0xff]
  %v1571 = vld [vmem:[%s1563 + $0x38] sm:$0xff]
  %v1572 = vld [vmem:[%s1563 + $0x40] sm:$0xff]
  %v1573 = vld [vmem:[%s1563 + $0x48] sm:$0xff]
  %v1574 = vld [vmem:[%s1563 + $0x50] sm:$0xff]
  %v1575 = vld [vmem:[%s1563 + $0x58] sm:$0xff]
  %v1576 = vld [vmem:[%s1563 + $0x60] sm:$0xff]
  %v1577 = vld [vmem:[%s1563 + $0x68] sm:$0xff]
  %v1578 = vld [vmem:[%s1563 + $0x70] sm:$0xff]
  %v1579 = vld [vmem:[%s1563 + $0x78] sm:$0xff]
  %v1580 = vld [vmem:[%s1563 + $0xa0] sm:$0x1]
  %v1581 = vld [vmem:[%s1563 + $0xa1] sm:$0x1]
  %v1582 = vld [vmem:[%s1563 + $0xa2] sm:$0x1]
  %v1583 = vld [vmem:[%s1563 + $0xa3] sm:$0x1]
  %v1584 = vld [vmem:[%s1563 + $0xa4] sm:$0x1]
  %v1585 = vld [vmem:[%s1563 + $0xa5] sm:$0x1]
  %v1586 = vld [vmem:[%s1563 + $0xa6] sm:$0x1]
  %v1587 = vld [vmem:[%s1563 + $0xa7] sm:$0x1]
  %v1588 = vsel %vm55, %v1561, 0.0
  %1589 = vadd.xlane.f32.xlu0 %v1588
  %v1590 = vpop.xlane.xlu0 %1589
  %v1591 = vsel %vm55, %v1562, 0.0
  %1592 = vadd.xlane.f32.xlu0 %v1591
  %v1593 = vpop.xlane.xlu0 %1592
  %v1594 = vmul.f32 %v1590, %v62
  %v1595 = vmul.f32 %v1593, %v62
  %v1596 = vsub.f32 %v1561, %v1594
  %v1597 = vsub.f32 %v1562, %v1595
  %v1598 = vmul.f32 %v1596, %v1596
  %v1599 = vmul.f32 %v1597, %v1597
  %v1600 = vsel %vm55, %v1598, 0.0
  %1601 = vadd.xlane.f32.xlu0 %v1600
  %v1602 = vpop.xlane.xlu0 %1601
  %v1603 = vsel %vm55, %v1599, 0.0
  %1604 = vadd.xlane.f32.xlu0 %v1603
  %v1605 = vpop.xlane.xlu0 %1604
  %v1606 = vmul.f32 %v1602, 0.032258064
  %v1607 = vmul.f32 %v1605, 0.032258064
  %v1608 = vrsqrt.pop %v1606
  %v1609 = vmul.f32 %v1606, %v1608
  %vm1610 = vcmp.eq.f32.partialorder %v1606, inf
  %v1611 = vsel %vm1610, %v1606, %v1609
  %vm1612 = vcmp.eq.f32.partialorder %v1606, 0.0
  %v1613 = vand.u32 %v1606, 2147483648
  %v1614 = vsel %vm1612, %v1613, %v1611
  %v1615 = vrsqrt.pop %v1607
  %v1616 = vmul.f32 %v1607, %v1615
  %vm1617 = vcmp.eq.f32.partialorder %v1607, inf
  %v1618 = vsel %vm1617, %v1607, %v1616
  %vm1619 = vcmp.eq.f32.partialorder %v1607, 0.0
  %v1620 = vand.u32 %v1607, 2147483648
  %v1621 = vsel %vm1619, %v1620, %v1618
  %v1622 = vadd.f32 %v1614, 1e-06
  %v1623 = vadd.f32 %v1621, 1e-06
  %v1624 = vrcp.pop %v1622
  %v1625 = vrcp.pop %v1623
  %v1626 = vmul.f32 %v1596, %v1624
  %v1627 = vmul.f32 %v1597, %v1625
  %v1628 = vlaneseq
  %v1629 = vshrl.u32 %v1628, 7
  %v1630 = vsub.s32 0, %v1629
  %v1631 = vrot.slane %v1584, %v1630
  %v1632 = vmul.f32 %v1631, %v1626
  %v1633 = vmul.f32 %v1631, %v1627
  %v1634 = vlaneseq
  %v1635 = vshrl.u32 %v1634, 7
  %v1636 = vsub.s32 0, %v1635
  %v1637 = vrot.slane %v1585, %v1636
  %v1638 = vadd.f32 %v1632, %v1637
  %v1639 = vadd.f32 %v1633, %v1637
  %v1640 = vlaneseq
  %v1641 = vshrl.u32 %v1640, 7
  %v1642 = vsub.s32 0, %v1641
  %v1643 = vrot.slane %v1580, %v1642
  %v1645 = vsel %vm55, %v1638, 0
  %v1648 = vsel %vm55, %v1639, 0
  %1650 = vmatprep.subr.mxu0 0.0
  %1651 = vmatpush1.msra.mxu0 %v1564
  %1652 = vmatprep.subr.mxu0 0.0
  %1653 = vmatpush1.msra.mxu0 %v1565
  %1654 = vmatprep.subr.mxu0 0.0
  %1655 = vmatpush1.msra.mxu0 %v1566
  %1656 = vmatprep.subr.mxu0 0.0
  %1657 = vmatpush1.msra.mxu0 %v1567
  %1658 = vmatprep.subr.mxu0 0.0
  %1659 = vmatpush1.msra.mxu0 0.0
  %1660 = vmatprep.subr.mxu0 0.0
  %1661 = vmatpush1.msra.mxu0 0.0
  %1662 = vmatprep.subr.mxu0 0.0
  %1663 = vmatpush1.msra.mxu0 0.0
  %1664 = vmatprep.subr.mxu0 0.0
  %1665 = vmatpush1.msra.mxu0 0.0
  %1666 = vmatprep.subr.mxu0 0.0
  %1667 = vmatpush1.msra.mxu0 0.0
  %1668 = vmatprep.subr.mxu0 0.0
  %1669 = vmatpush1.msra.mxu0 0.0
  %1670 = vmatprep.subr.mxu0 0.0
  %1671 = vmatpush1.msra.mxu0 0.0
  %1672 = vmatprep.subr.mxu0 0.0
  %1673 = vmatpush1.msra.mxu0 0.0
  %1674 = vmatprep.subr.mxu0 0.0
  %1675 = vmatpush1.msra.mxu0 0.0
  %1676 = vmatprep.subr.mxu0 0.0
  %1677 = vmatpush1.msra.mxu0 0.0
  %1678 = vmatprep.subr.mxu0 0.0
  %1679 = vmatpush1.msra.mxu0 0.0
  %1680 = vmatprep.subr.mxu0 0.0
  %1681 = vmatpush1.msra.mxu0 0.0
  %1682 = vmatprep.subr.mxu0 0.0
  %1683 = vmatpush1.msra.mxu0 0.0
  %1684 = vmatprep.subr.mxu0 0.0
  %1685 = vmatpush1.msra.mxu0 0.0
  %1686 = vmatprep.subr.mxu0 0.0
  %1687 = vmatpush1.msra.mxu0 0.0
  %1688 = vmatprep.subr.mxu0 0.0
  %1689 = vmatpush1.msra.mxu0 0.0
  %1690 = vmatprep.subr.mxu0 0.0
  %1691 = vmatpush1.msra.mxu0 0.0
  %1692 = vmatprep.subr.mxu0 0.0
  %1693 = vmatpush1.msra.mxu0 0.0
  %1694 = vmatprep.subr.mxu0 0.0
  %1695 = vmatpush1.msra.mxu0 0.0
  %1696 = vmatprep.subr.mxu0 0.0
  %1697 = vmatpush1.msra.mxu0 0.0
  %1698 = vmatprep.subr.mxu0 0.0
  %1699 = vmatpush1.msra.mxu0 0.0
  %1700 = vmatprep.subr.mxu0 0.0
  %1701 = vmatpush1.msra.mxu0 0.0
  %1702 = vmatprep.subr.mxu0 0.0
  %1703 = vmatpush1.msra.mxu0 0.0
  %1704 = vmatprep.subr.mxu0 0.0
  %1705 = vmatpush1.msra.mxu0 0.0
  %1706 = vmatprep.subr.mxu0 0.0
  %1707 = vmatpush1.msra.mxu0 0.0
  %1708 = vmatprep.subr.mxu0 0.0
  %1709 = vmatpush1.msra.mxu0 0.0
  %1710 = vmatprep.subr.mxu0 0.0
  %1711 = vmatpush1.msra.mxu0 0.0
  %1712 = vmatprep.subr.mxu0 0.0
  %1713 = vmatpush1.msra.mxu0 0.0
  %1714 = vmatprep.mubr.f32.mxu0 0.0
  %1715 = vmatmul.mubr.f32.gmra.mrb[0].mxu0 %v1645
  %v1716 = vpop.f32.mrb[0].mxu0
  %v1717 = vadd.f32 %v1643, %v1716
  %v1718 = vpop.f32.mrb[0].mxu0
  %1719 = vmatprep.mubr.f32.mxu0 0.0
  %1720 = vmatmul.mubr.f32.gmra.mrb[0].mxu0 %v1648
  %v1721 = vpop.f32.mrb[0].mxu0
  %v1722 = vadd.f32 %v1643, %v1721
  %v1723 = vpop.f32.mrb[0].mxu0
  %1724 = vdwg.mxu0
  %1727 = vrot.lane.b32.xlu0 %v1717, 96
  %v1728 = vpop.permute.xlu0 %1727
  %1729 = vrot.lane.b32.xlu0 %v1722, 96
  %v1730 = vpop.permute.xlu0 %1729
  %v1731 = vsel %vm200, %v1717, 0
  %v1733 = vsel %vm200, %v1722, 0
  %v1735 = vsel %vm200, %v1728, 0
  %v1737 = vsel %vm200, %v1730, 0
  %1739 = vmatprep.subr.mxu0 0.0
  %1740 = vmatpush1.xpose.msra.mxu0 %v1735
  %1741 = vmatprep.subr.mxu0 0.0
  %1742 = vmatpush1.xpose.msra.mxu0 %v1737
  %1743 = vmatprep.subr.mxu0 0.0
  %1744 = vmatpush1.xpose.msra.mxu0 0.0
  %1745 = vmatprep.subr.mxu0 0.0
  %1746 = vmatpush1.xpose.msra.mxu0 0.0
  %1747 = vmatprep.subr.mxu0 0.0
  %1748 = vmatpush1.xpose.msra.mxu0 0.0
  %1749 = vmatprep.subr.mxu0 0.0
  %1750 = vmatpush1.xpose.msra.mxu0 0.0
  %1751 = vmatprep.subr.mxu0 0.0
  %1752 = vmatpush1.xpose.msra.mxu0 0.0
  %1753 = vmatprep.subr.mxu0 0.0
  %1754 = vmatpush1.xpose.msra.mxu0 0.0
  %1755 = vmatprep.subr.mxu0 0.0
  %1756 = vmatpush1.xpose.msra.mxu0 0.0
  %1757 = vmatprep.subr.mxu0 0.0
  %1758 = vmatpush1.xpose.msra.mxu0 0.0
  %1759 = vmatprep.subr.mxu0 0.0
  %1760 = vmatpush1.xpose.msra.mxu0 0.0
  %1761 = vmatprep.subr.mxu0 0.0
  %1762 = vmatpush1.xpose.msra.mxu0 0.0
  %1763 = vmatprep.subr.mxu0 0.0
  %1764 = vmatpush1.xpose.msra.mxu0 0.0
  %1765 = vmatprep.subr.mxu0 0.0
  %1766 = vmatpush1.xpose.msra.mxu0 0.0
  %1767 = vmatprep.subr.mxu0 0.0
  %1768 = vmatpush1.xpose.msra.mxu0 0.0
  %1769 = vmatprep.subr.mxu0 0.0
  %1770 = vmatpush1.xpose.msra.mxu0 0.0
  %1771 = vmatprep.subr.mxu0 0.0
  %1772 = vmatpush1.xpose.msra.mxu0 0.0
  %1773 = vmatprep.subr.mxu0 0.0
  %1774 = vmatpush1.xpose.msra.mxu0 0.0
  %1775 = vmatprep.subr.mxu0 0.0
  %1776 = vmatpush1.xpose.msra.mxu0 0.0
  %1777 = vmatprep.subr.mxu0 0.0
  %1778 = vmatpush1.xpose.msra.mxu0 0.0
  %1779 = vmatprep.subr.mxu0 0.0
  %1780 = vmatpush1.xpose.msra.mxu0 0.0
  %1781 = vmatprep.subr.mxu0 0.0
  %1782 = vmatpush1.xpose.msra.mxu0 0.0
  %1783 = vmatprep.subr.mxu0 0.0
  %1784 = vmatpush1.xpose.msra.mxu0 0.0
  %1785 = vmatprep.subr.mxu0 0.0
  %1786 = vmatpush1.xpose.msra.mxu0 0.0
  %1787 = vmatprep.subr.mxu0 0.0
  %1788 = vmatpush1.xpose.msra.mxu0 0.0
  %1789 = vmatprep.subr.mxu0 0.0
  %1790 = vmatpush1.xpose.msra.mxu0 0.0
  %1791 = vmatprep.subr.mxu0 0.0
  %1792 = vmatpush1.xpose.msra.mxu0 0.0
  %1793 = vmatprep.subr.mxu0 0.0
  %1794 = vmatpush1.xpose.msra.mxu0 0.0
  %1795 = vmatprep.subr.mxu0 0.0
  %1796 = vmatpush1.xpose.msra.mxu0 0.0
  %1797 = vmatprep.subr.mxu0 0.0
  %1798 = vmatpush1.xpose.msra.mxu0 0.0
  %1799 = vmatprep.subr.mxu0 0.0
  %1800 = vmatpush1.xpose.msra.mxu0 0.0
  %1801 = vmatprep.subr.mxu0 0.0
  %1802 = vmatpush1.xpose.msra.mxu0 0.0
  %1803 = vmatprep.mubr.f32.mxu0 0.0
  %1804 = vmatmul.mubr.f32.gmra.mrb[0].mxu0 %v1731
  %v1805 = vpop.f32.mrb[0].mxu0
  %v1806 = vadd.f32 %v29, %v1805
  %v1807 = vpop.f32.mrb[0].mxu0
  %1808 = vmatprep.mubr.f32.mxu0 0.0
  %1809 = vmatmul.mubr.f32.gmra.mrb[0].mxu0 %v1733
  %v1810 = vpop.f32.mrb[0].mxu0
  %v1811 = vadd.f32 %v30, %v1810
  %v1812 = vpop.f32.mrb[0].mxu0
  %1813 = vdwg.mxu0
  %v1814 = vsel %vm284, %v1806, -inf
  %1815 = vmax.xlane.f32.xlu0 %v1814
  %v1816 = vpop.xlane.xlu0 %1815
  %v1817 = vsel %vm284, %v1811, -inf
  %1818 = vmax.xlane.f32.xlu0 %v1817
  %v1819 = vpop.xlane.xlu0 %1818
  %v1820 = vsub.f32 %v1806, %v1816
  %v1821 = vsub.f32 %v1811, %v1819
  %v1822 = vmul.f32 %v1820, 1.442695
  %v1823 = vpow.pop %v1822
  %v1824 = vmul.f32 %v1821, 1.442695
  %v1825 = vpow.pop %v1824
  %v1826 = vsel %vm284, %v1823, 0.0
  %1827 = vadd.xlane.f32.xlu0 %v1826
  %v1828 = vpop.xlane.xlu0 %1827
  %v1829 = vsel %vm284, %v1825, 0.0
  %1830 = vadd.xlane.f32.xlu0 %v1829
  %v1831 = vpop.xlane.xlu0 %1830
  %v1832 = vrcp.pop %v1828
  %v1833 = vrcp.pop %v1831
  %v1834 = vmul.f32 %v1823, %v1832
  %v1835 = vmul.f32 %v1825, %v1833
  %1836 = vrot.lane.b32.xlu0 %v1717, 64
  %v1837 = vpop.permute.xlu0 %1836
  %1838 = vrot.lane.b32.xlu0 %v1722, 64
  %v1839 = vpop.permute.xlu0 %1838
  %v1843 = vsel %vm284, %v1834, 0
  %v1846 = vsel %vm284, %v1835, 0
  %1848 = vmatprep.subr.mxu0 0.0
  %1849 = vmatpush1.msra.mxu0 %v1837
  %1850 = vmatprep.subr.mxu0 0.0
  %1851 = vmatpush1.msra.mxu0 %v1839
  %1852 = vmatprep.subr.mxu0 0.0
  %1853 = vmatpush1.msra.mxu0 0.0
  %1854 = vmatprep.subr.mxu0 0.0
  %1855 = vmatpush1.msra.mxu0 0.0
  %1856 = vmatprep.subr.mxu0 0.0
  %1857 = vmatpush1.msra.mxu0 0.0
  %1858 = vmatprep.subr.mxu0 0.0
  %1859 = vmatpush1.msra.mxu0 0.0
  %1860 = vmatprep.subr.mxu0 0.0
  %1861 = vmatpush1.msra.mxu0 0.0
  %1862 = vmatprep.subr.mxu0 0.0
  %1863 = vmatpush1.msra.mxu0 0.0
  %1864 = vmatprep.subr.mxu0 0.0
  %1865 = vmatpush1.msra.mxu0 0.0
  %1866 = vmatprep.subr.mxu0 0.0
  %1867 = vmatpush1.msra.mxu0 0.0
  %1868 = vmatprep.subr.mxu0 0.0
  %1869 = vmatpush1.msra.mxu0 0.0
  %1870 = vmatprep.subr.mxu0 0.0
  %1871 = vmatpush1.msra.mxu0 0.0
  %1872 = vmatprep.subr.mxu0 0.0
  %1873 = vmatpush1.msra.mxu0 0.0
  %1874 = vmatprep.subr.mxu0 0.0
  %1875 = vmatpush1.msra.mxu0 0.0
  %1876 = vmatprep.subr.mxu0 0.0
  %1877 = vmatpush1.msra.mxu0 0.0
  %1878 = vmatprep.subr.mxu0 0.0
  %1879 = vmatpush1.msra.mxu0 0.0
  %1880 = vmatprep.subr.mxu0 0.0
  %1881 = vmatpush1.msra.mxu0 0.0
  %1882 = vmatprep.subr.mxu0 0.0
  %1883 = vmatpush1.msra.mxu0 0.0
  %1884 = vmatprep.subr.mxu0 0.0
  %1885 = vmatpush1.msra.mxu0 0.0
  %1886 = vmatprep.subr.mxu0 0.0
  %1887 = vmatpush1.msra.mxu0 0.0
  %1888 = vmatprep.subr.mxu0 0.0
  %1889 = vmatpush1.msra.mxu0 0.0
  %1890 = vmatprep.subr.mxu0 0.0
  %1891 = vmatpush1.msra.mxu0 0.0
  %1892 = vmatprep.subr.mxu0 0.0
  %1893 = vmatpush1.msra.mxu0 0.0
  %1894 = vmatprep.subr.mxu0 0.0
  %1895 = vmatpush1.msra.mxu0 0.0
  %1896 = vmatprep.subr.mxu0 0.0
  %1897 = vmatpush1.msra.mxu0 0.0
  %1898 = vmatprep.subr.mxu0 0.0
  %1899 = vmatpush1.msra.mxu0 0.0
  %1900 = vmatprep.subr.mxu0 0.0
  %1901 = vmatpush1.msra.mxu0 0.0
  %1902 = vmatprep.subr.mxu0 0.0
  %1903 = vmatpush1.msra.mxu0 0.0
  %1904 = vmatprep.subr.mxu0 0.0
  %1905 = vmatpush1.msra.mxu0 0.0
  %1906 = vmatprep.subr.mxu0 0.0
  %1907 = vmatpush1.msra.mxu0 0.0
  %1908 = vmatprep.subr.mxu0 0.0
  %1909 = vmatpush1.msra.mxu0 0.0
  %1910 = vmatprep.subr.mxu0 0.0
  %1911 = vmatpush1.msra.mxu0 0.0
  %1912 = vmatprep.mubr.f32.mxu0 0.0
  %1913 = vmatmul.mubr.f32.gmra.mrb[0].mxu0 %v1843
  %v1914 = vpop.f32.mrb[0].mxu0
  %v1915 = vadd.f32 0.0, %v1914
  %v1916 = vpop.f32.mrb[0].mxu0
  %1917 = vmatprep.mubr.f32.mxu0 0.0
  %1918 = vmatmul.mubr.f32.gmra.mrb[0].mxu0 %v1846
  %v1919 = vpop.f32.mrb[0].mxu0
  %v1920 = vadd.f32 0.0, %v1919
  %v1921 = vpop.f32.mrb[0].mxu0
  %1922 = vdwg.mxu0
  %v1923 = vld [vmem:[%s1563 + $0x80] sm:$0xff]
  %1924 = vrot.lane.b32.xlu0 %v1717, 120
  %v1925 = vpop.permute.xlu0 %1924
  %1926 = vrot.lane.b32.xlu0 %v1722, 120
  %v1927 = vpop.permute.xlu0 %1926
  %1928 = vrot.lane.b32.xlu0 %v1717, 88
  %v1929 = vpop.permute.xlu0 %1928
  %1930 = vrot.lane.b32.xlu0 %v1722, 88
  %v1931 = vpop.permute.xlu0 %1930
  %v1932 = vsel %vm200, %v1925, 0
  %v1934 = vsel %vm200, %v1927, 0
  %v1936 = vsel %vm200, %v1929, 0
  %v1938 = vsel %vm200, %v1931, 0
  %1940 = vmatprep.subr.mxu0 0.0
  %1941 = vmatpush1.xpose.msra.mxu0 %v1936
  %1942 = vmatprep.subr.mxu0 0.0
  %1943 = vmatpush1.xpose.msra.mxu0 %v1938
  %1944 = vmatprep.subr.mxu0 0.0
  %1945 = vmatpush1.xpose.msra.mxu0 0.0
  %1946 = vmatprep.subr.mxu0 0.0
  %1947 = vmatpush1.xpose.msra.mxu0 0.0
  %1948 = vmatprep.subr.mxu0 0.0
  %1949 = vmatpush1.xpose.msra.mxu0 0.0
  %1950 = vmatprep.subr.mxu0 0.0
  %1951 = vmatpush1.xpose.msra.mxu0 0.0
  %1952 = vmatprep.subr.mxu0 0.0
  %1953 = vmatpush1.xpose.msra.mxu0 0.0
  %1954 = vmatprep.subr.mxu0 0.0
  %1955 = vmatpush1.xpose.msra.mxu0 0.0
  %1956 = vmatprep.subr.mxu0 0.0
  %1957 = vmatpush1.xpose.msra.mxu0 0.0
  %1958 = vmatprep.subr.mxu0 0.0
  %1959 = vmatpush1.xpose.msra.mxu0 0.0
  %1960 = vmatprep.subr.mxu0 0.0
  %1961 = vmatpush1.xpose.msra.mxu0 0.0
  %1962 = vmatprep.subr.mxu0 0.0
  %1963 = vmatpush1.xpose.msra.mxu0 0.0
  %1964 = vmatprep.subr.mxu0 0.0
  %1965 = vmatpush1.xpose.msra.mxu0 0.0
  %1966 = vmatprep.subr.mxu0 0.0
  %1967 = vmatpush1.xpose.msra.mxu0 0.0
  %1968 = vmatprep.subr.mxu0 0.0
  %1969 = vmatpush1.xpose.msra.mxu0 0.0
  %1970 = vmatprep.subr.mxu0 0.0
  %1971 = vmatpush1.xpose.msra.mxu0 0.0
  %1972 = vmatprep.subr.mxu0 0.0
  %1973 = vmatpush1.xpose.msra.mxu0 0.0
  %1974 = vmatprep.subr.mxu0 0.0
  %1975 = vmatpush1.xpose.msra.mxu0 0.0
  %1976 = vmatprep.subr.mxu0 0.0
  %1977 = vmatpush1.xpose.msra.mxu0 0.0
  %1978 = vmatprep.subr.mxu0 0.0
  %1979 = vmatpush1.xpose.msra.mxu0 0.0
  %1980 = vmatprep.subr.mxu0 0.0
  %1981 = vmatpush1.xpose.msra.mxu0 0.0
  %1982 = vmatprep.subr.mxu0 0.0
  %1983 = vmatpush1.xpose.msra.mxu0 0.0
  %1984 = vmatprep.subr.mxu0 0.0
  %1985 = vmatpush1.xpose.msra.mxu0 0.0
  %1986 = vmatprep.subr.mxu0 0.0
  %1987 = vmatpush1.xpose.msra.mxu0 0.0
  %1988 = vmatprep.subr.mxu0 0.0
  %1989 = vmatpush1.xpose.msra.mxu0 0.0
  %1990 = vmatprep.subr.mxu0 0.0
  %1991 = vmatpush1.xpose.msra.mxu0 0.0
  %1992 = vmatprep.subr.mxu0 0.0
  %1993 = vmatpush1.xpose.msra.mxu0 0.0
  %1994 = vmatprep.subr.mxu0 0.0
  %1995 = vmatpush1.xpose.msra.mxu0 0.0
  %1996 = vmatprep.subr.mxu0 0.0
  %1997 = vmatpush1.xpose.msra.mxu0 0.0
  %1998 = vmatprep.subr.mxu0 0.0
  %1999 = vmatpush1.xpose.msra.mxu0 0.0
  %2000 = vmatprep.subr.mxu0 0.0
  %2001 = vmatpush1.xpose.msra.mxu0 0.0
  %2002 = vmatprep.subr.mxu0 0.0
  %2003 = vmatpush1.xpose.msra.mxu0 0.0
  %2004 = vmatprep.mubr.f32.mxu0 0.0
  %2005 = vmatmul.mubr.f32.gmra.mrb[0].mxu0 %v1932
  %v2006 = vpop.f32.mrb[0].mxu0
  %v2007 = vadd.f32 %v29, %v2006
  %v2008 = vpop.f32.mrb[0].mxu0
  %2009 = vmatprep.mubr.f32.mxu0 0.0
  %2010 = vmatmul.mubr.f32.gmra.mrb[0].mxu0 %v1934
  %v2011 = vpop.f32.mrb[0].mxu0
  %v2012 = vadd.f32 %v30, %v2011
  %v2013 = vpop.f32.mrb[0].mxu0
  %2014 = vdwg.mxu0
  %v2015 = vsel %vm284, %v2007, -inf
  %2016 = vmax.xlane.f32.xlu0 %v2015
  %v2017 = vpop.xlane.xlu0 %2016
  %v2018 = vsel %vm284, %v2012, -inf
  %2019 = vmax.xlane.f32.xlu0 %v2018
  %v2020 = vpop.xlane.xlu0 %2019
  %v2021 = vsub.f32 %v2007, %v2017
  %v2022 = vsub.f32 %v2012, %v2020
  %v2023 = vmul.f32 %v2021, 1.442695
  %v2024 = vpow.pop %v2023
  %v2025 = vmul.f32 %v2022, 1.442695
  %v2026 = vpow.pop %v2025
  %v2027 = vsel %vm284, %v2024, 0.0
  %2028 = vadd.xlane.f32.xlu0 %v2027
  %v2029 = vpop.xlane.xlu0 %2028
  %v2030 = vsel %vm284, %v2026, 0.0
  %2031 = vadd.xlane.f32.xlu0 %v2030
  %v2032 = vpop.xlane.xlu0 %2031
  %v2033 = vrcp.pop %v2029
  %v2034 = vrcp.pop %v2032
  %v2035 = vmul.f32 %v2024, %v2033
  %v2036 = vmul.f32 %v2026, %v2034
  %2037 = vrot.lane.b32.xlu0 %v1717, 56
  %v2038 = vpop.permute.xlu0 %2037
  %2039 = vrot.lane.b32.xlu0 %v1722, 56
  %v2040 = vpop.permute.xlu0 %2039
  %v2044 = vsel %vm284, %v2035, 0
  %v2047 = vsel %vm284, %v2036, 0
  %2049 = vmatprep.subr.mxu0 0.0
  %2050 = vmatpush1.msra.mxu0 %v2038
  %2051 = vmatprep.subr.mxu0 0.0
  %2052 = vmatpush1.msra.mxu0 %v2040
  %2053 = vmatprep.subr.mxu0 0.0
  %2054 = vmatpush1.msra.mxu0 0.0
  %2055 = vmatprep.subr.mxu0 0.0
  %2056 = vmatpush1.msra.mxu0 0.0
  %2057 = vmatprep.subr.mxu0 0.0
  %2058 = vmatpush1.msra.mxu0 0.0
  %2059 = vmatprep.subr.mxu0 0.0
  %2060 = vmatpush1.msra.mxu0 0.0
  %2061 = vmatprep.subr.mxu0 0.0
  %2062 = vmatpush1.msra.mxu0 0.0
  %2063 = vmatprep.subr.mxu0 0.0
  %2064 = vmatpush1.msra.mxu0 0.0
  %2065 = vmatprep.subr.mxu0 0.0
  %2066 = vmatpush1.msra.mxu0 0.0
  %2067 = vmatprep.subr.mxu0 0.0
  %2068 = vmatpush1.msra.mxu0 0.0
  %2069 = vmatprep.subr.mxu0 0.0
  %2070 = vmatpush1.msra.mxu0 0.0
  %2071 = vmatprep.subr.mxu0 0.0
  %2072 = vmatpush1.msra.mxu0 0.0
  %2073 = vmatprep.subr.mxu0 0.0
  %2074 = vmatpush1.msra.mxu0 0.0
  %2075 = vmatprep.subr.mxu0 0.0
  %2076 = vmatpush1.msra.mxu0 0.0
  %2077 = vmatprep.subr.mxu0 0.0
  %2078 = vmatpush1.msra.mxu0 0.0
  %2079 = vmatprep.subr.mxu0 0.0
  %2080 = vmatpush1.msra.mxu0 0.0
  %2081 = vmatprep.subr.mxu0 0.0
  %2082 = vmatpush1.msra.mxu0 0.0
  %2083 = vmatprep.subr.mxu0 0.0
  %2084 = vmatpush1.msra.mxu0 0.0
  %2085 = vmatprep.subr.mxu0 0.0
  %2086 = vmatpush1.msra.mxu0 0.0
  %2087 = vmatprep.subr.mxu0 0.0
  %2088 = vmatpush1.msra.mxu0 0.0
  %2089 = vmatprep.subr.mxu0 0.0
  %2090 = vmatpush1.msra.mxu0 0.0
  %2091 = vmatprep.subr.mxu0 0.0
  %2092 = vmatpush1.msra.mxu0 0.0
  %2093 = vmatprep.subr.mxu0 0.0
  %2094 = vmatpush1.msra.mxu0 0.0
  %2095 = vmatprep.subr.mxu0 0.0
  %2096 = vmatpush1.msra.mxu0 0.0
  %2097 = vmatprep.subr.mxu0 0.0
  %2098 = vmatpush1.msra.mxu0 0.0
  %2099 = vmatprep.subr.mxu0 0.0
  %2100 = vmatpush1.msra.mxu0 0.0
  %2101 = vmatprep.subr.mxu0 0.0
  %2102 = vmatpush1.msra.mxu0 0.0
  %2103 = vmatprep.subr.mxu0 0.0
  %2104 = vmatpush1.msra.mxu0 0.0
  %2105 = vmatprep.subr.mxu0 0.0
  %2106 = vmatpush1.msra.mxu0 0.0
  %2107 = vmatprep.subr.mxu0 0.0
  %2108 = vmatpush1.msra.mxu0 0.0
  %2109 = vmatprep.subr.mxu0 0.0
  %2110 = vmatpush1.msra.mxu0 0.0
  %2111 = vmatprep.subr.mxu0 0.0
  %2112 = vmatpush1.msra.mxu0 0.0
  %2113 = vmatprep.mubr.f32.mxu0 0.0
  %2114 = vmatmul.mubr.f32.gmra.mrb[0].mxu0 %v2044
  %v2115 = vpop.f32.mrb[0].mxu0
  %v2116 = vadd.f32 0.0, %v2115
  %v2117 = vpop.f32.mrb[0].mxu0
  %2118 = vmatprep.mubr.f32.mxu0 0.0
  %2119 = vmatmul.mubr.f32.gmra.mrb[0].mxu0 %v2047
  %v2120 = vpop.f32.mrb[0].mxu0
  %v2121 = vadd.f32 0.0, %v2120
  %v2122 = vpop.f32.mrb[0].mxu0
  %2123 = vdwg.mxu0
  %v2124 = vld [vmem:[%s1563 + $0x88] sm:$0xff]
  %v2126 = vsel %vm200, %v2116, 0
  %v2129 = vsel %vm200, %v2121, 0
  %2131 = vmatprep.subr.mxu0 0.0
  %2132 = vmatpush1.msra.mxu0 %v2124
  %2133 = vmatprep.subr.mxu0 0.0
  %2134 = vmatpush1.msra.mxu0 0.0
  %2135 = vmatprep.subr.mxu0 0.0
  %2136 = vmatpush1.msra.mxu0 0.0
  %2137 = vmatprep.subr.mxu0 0.0
  %2138 = vmatpush1.msra.mxu0 0.0
  %2139 = vmatprep.subr.mxu0 0.0
  %2140 = vmatpush1.msra.mxu0 0.0
  %2141 = vmatprep.subr.mxu0 0.0
  %2142 = vmatpush1.msra.mxu0 0.0
  %2143 = vmatprep.subr.mxu0 0.0
  %2144 = vmatpush1.msra.mxu0 0.0
  %2145 = vmatprep.subr.mxu0 0.0
  %2146 = vmatpush1.msra.mxu0 0.0
  %2147 = vmatprep.subr.mxu0 0.0
  %2148 = vmatpush1.msra.mxu0 0.0
  %2149 = vmatprep.subr.mxu0 0.0
  %2150 = vmatpush1.msra.mxu0 0.0
  %2151 = vmatprep.subr.mxu0 0.0
  %2152 = vmatpush1.msra.mxu0 0.0
  %2153 = vmatprep.subr.mxu0 0.0
  %2154 = vmatpush1.msra.mxu0 0.0
  %2155 = vmatprep.subr.mxu0 0.0
  %2156 = vmatpush1.msra.mxu0 0.0
  %2157 = vmatprep.subr.mxu0 0.0
  %2158 = vmatpush1.msra.mxu0 0.0
  %2159 = vmatprep.subr.mxu0 0.0
  %2160 = vmatpush1.msra.mxu0 0.0
  %2161 = vmatprep.subr.mxu0 0.0
  %2162 = vmatpush1.msra.mxu0 0.0
  %2163 = vmatprep.subr.mxu0 0.0
  %2164 = vmatpush1.msra.mxu0 0.0
  %2165 = vmatprep.subr.mxu0 0.0
  %2166 = vmatpush1.msra.mxu0 0.0
  %2167 = vmatprep.subr.mxu0 0.0
  %2168 = vmatpush1.msra.mxu0 0.0
  %2169 = vmatprep.subr.mxu0 0.0
  %2170 = vmatpush1.msra.mxu0 0.0
  %2171 = vmatprep.subr.mxu0 0.0
  %2172 = vmatpush1.msra.mxu0 0.0
  %2173 = vmatprep.subr.mxu0 0.0
  %2174 = vmatpush1.msra.mxu0 0.0
  %2175 = vmatprep.subr.mxu0 0.0
  %2176 = vmatpush1.msra.mxu0 0.0
  %2177 = vmatprep.subr.mxu0 0.0
  %2178 = vmatpush1.msra.mxu0 0.0
  %2179 = vmatprep.subr.mxu0 0.0
  %2180 = vmatpush1.msra.mxu0 0.0
  %2181 = vmatprep.subr.mxu0 0.0
  %2182 = vmatpush1.msra.mxu0 0.0
  %2183 = vmatprep.subr.mxu0 0.0
  %2184 = vmatpush1.msra.mxu0 0.0
  %2185 = vmatprep.subr.mxu0 0.0
  %2186 = vmatpush1.msra.mxu0 0.0
  %2187 = vmatprep.subr.mxu0 0.0
  %2188 = vmatpush1.msra.mxu0 0.0
  %2189 = vmatprep.subr.mxu0 0.0
  %2190 = vmatpush1.msra.mxu0 0.0
  %2191 = vmatprep.subr.mxu0 0.0
  %2192 = vmatpush1.msra.mxu0 0.0
  %2193 = vmatprep.subr.mxu0 0.0
  %2194 = vmatpush1.msra.mxu0 0.0
  %2195 = vmatprep.mubr.f32.mxu0 0.0
  %2196 = vmatmul.mubr.f32.gmra.mrb[0].mxu0 %v2126
  %v2197 = vpop.f32.mrb[0].mxu0
  %v2198 = vadd.f32 0.0, %v2197
  %v2199 = vpop.f32.mrb[0].mxu0
  %2200 = vmatprep.mubr.f32.mxu0 0.0
  %2201 = vmatmul.mubr.f32.gmra.mrb[0].mxu0 %v2129
  %v2202 = vpop.f32.mrb[0].mxu0
  %v2203 = vadd.f32 0.0, %v2202
  %v2204 = vpop.f32.mrb[0].mxu0
  %2205 = vdwg.mxu0
  %v2207 = vsel %vm200, %v1915, 0
  %v2210 = vsel %vm200, %v1920, 0
  %2212 = vmatprep.subr.mxu0 0.0
  %2213 = vmatpush1.msra.mxu0 %v1923
  %2214 = vmatprep.subr.mxu0 0.0
  %2215 = vmatpush1.msra.mxu0 0.0
  %2216 = vmatprep.subr.mxu0 0.0
  %2217 = vmatpush1.msra.mxu0 0.0
  %2218 = vmatprep.subr.mxu0 0.0
  %2219 = vmatpush1.msra.mxu0 0.0
  %2220 = vmatprep.subr.mxu0 0.0
  %2221 = vmatpush1.msra.mxu0 0.0
  %2222 = vmatprep.subr.mxu0 0.0
  %2223 = vmatpush1.msra.mxu0 0.0
  %2224 = vmatprep.subr.mxu0 0.0
  %2225 = vmatpush1.msra.mxu0 0.0
  %2226 = vmatprep.subr.mxu0 0.0
  %2227 = vmatpush1.msra.mxu0 0.0
  %2228 = vmatprep.subr.mxu0 0.0
  %2229 = vmatpush1.msra.mxu0 0.0
  %2230 = vmatprep.subr.mxu0 0.0
  %2231 = vmatpush1.msra.mxu0 0.0
  %2232 = vmatprep.subr.mxu0 0.0
  %2233 = vmatpush1.msra.mxu0 0.0
  %2234 = vmatprep.subr.mxu0 0.0
  %2235 = vmatpush1.msra.mxu0 0.0
  %2236 = vmatprep.subr.mxu0 0.0
  %2237 = vmatpush1.msra.mxu0 0.0
  %2238 = vmatprep.subr.mxu0 0.0
  %2239 = vmatpush1.msra.mxu0 0.0
  %2240 = vmatprep.subr.mxu0 0.0
  %2241 = vmatpush1.msra.mxu0 0.0
  %2242 = vmatprep.subr.mxu0 0.0
  %2243 = vmatpush1.msra.mxu0 0.0
  %2244 = vmatprep.subr.mxu0 0.0
  %2245 = vmatpush1.msra.mxu0 0.0
  %2246 = vmatprep.subr.mxu0 0.0
  %2247 = vmatpush1.msra.mxu0 0.0
  %2248 = vmatprep.subr.mxu0 0.0
  %2249 = vmatpush1.msra.mxu0 0.0
  %2250 = vmatprep.subr.mxu0 0.0
  %2251 = vmatpush1.msra.mxu0 0.0
  %2252 = vmatprep.subr.mxu0 0.0
  %2253 = vmatpush1.msra.mxu0 0.0
  %2254 = vmatprep.subr.mxu0 0.0
  %2255 = vmatpush1.msra.mxu0 0.0
  %2256 = vmatprep.subr.mxu0 0.0
  %2257 = vmatpush1.msra.mxu0 0.0
  %2258 = vmatprep.subr.mxu0 0.0
  %2259 = vmatpush1.msra.mxu0 0.0
  %2260 = vmatprep.subr.mxu0 0.0
  %2261 = vmatpush1.msra.mxu0 0.0
  %2262 = vmatprep.subr.mxu0 0.0
  %2263 = vmatpush1.msra.mxu0 0.0
  %2264 = vmatprep.subr.mxu0 0.0
  %2265 = vmatpush1.msra.mxu0 0.0
  %2266 = vmatprep.subr.mxu0 0.0
  %2267 = vmatpush1.msra.mxu0 0.0
  %2268 = vmatprep.subr.mxu0 0.0
  %2269 = vmatpush1.msra.mxu0 0.0
  %2270 = vmatprep.subr.mxu0 0.0
  %2271 = vmatpush1.msra.mxu0 0.0
  %2272 = vmatprep.subr.mxu0 0.0
  %2273 = vmatpush1.msra.mxu0 0.0
  %2274 = vmatprep.subr.mxu0 0.0
  %2275 = vmatpush1.msra.mxu0 0.0
  %2276 = vmatprep.mubr.f32.mxu0 0.0
  %2277 = vmatmul.mubr.f32.gmra.mrb[0].mxu0 %v2207
  %v2278 = vpop.f32.mrb[0].mxu0
  %v2279 = vadd.f32 %v2198, %v2278
  %v2280 = vpop.f32.mrb[0].mxu0
  %2281 = vmatprep.mubr.f32.mxu0 0.0
  %2282 = vmatmul.mubr.f32.gmra.mrb[0].mxu0 %v2210
  %v2283 = vpop.f32.mrb[0].mxu0
  %v2284 = vadd.f32 %v2203, %v2283
  %v2285 = vpop.f32.mrb[0].mxu0
  %2286 = vdwg.mxu0
  %2287 = vrot.lane.b32.xlu0 %v1717, 112
  %v2288 = vpop.permute.xlu0 %2287
  %2289 = vrot.lane.b32.xlu0 %v1722, 112
  %v2290 = vpop.permute.xlu0 %2289
  %2291 = vrot.lane.b32.xlu0 %v1717, 80
  %v2292 = vpop.permute.xlu0 %2291
  %2293 = vrot.lane.b32.xlu0 %v1722, 80
  %v2294 = vpop.permute.xlu0 %2293
  %v2295 = vsel %vm200, %v2288, 0
  %v2297 = vsel %vm200, %v2290, 0
  %v2299 = vsel %vm200, %v2292, 0
  %v2301 = vsel %vm200, %v2294, 0
  %2303 = vmatprep.subr.mxu0 0.0
  %2304 = vmatpush1.xpose.msra.mxu0 %v2299
  %2305 = vmatprep.subr.mxu0 0.0
  %2306 = vmatpush1.xpose.msra.mxu0 %v2301
  %2307 = vmatprep.subr.mxu0 0.0
  %2308 = vmatpush1.xpose.msra.mxu0 0.0
  %2309 = vmatprep.subr.mxu0 0.0
  %2310 = vmatpush1.xpose.msra.mxu0 0.0
  %2311 = vmatprep.subr.mxu0 0.0
  %2312 = vmatpush1.xpose.msra.mxu0 0.0
  %2313 = vmatprep.subr.mxu0 0.0
  %2314 = vmatpush1.xpose.msra.mxu0 0.0
  %2315 = vmatprep.subr.mxu0 0.0
  %2316 = vmatpush1.xpose.msra.mxu0 0.0
  %2317 = vmatprep.subr.mxu0 0.0
  %2318 = vmatpush1.xpose.msra.mxu0 0.0
  %2319 = vmatprep.subr.mxu0 0.0
  %2320 = vmatpush1.xpose.msra.mxu0 0.0
  %2321 = vmatprep.subr.mxu0 0.0
  %2322 = vmatpush1.xpose.msra.mxu0 0.0
  %2323 = vmatprep.subr.mxu0 0.0
  %2324 = vmatpush1.xpose.msra.mxu0 0.0
  %2325 = vmatprep.subr.mxu0 0.0
  %2326 = vmatpush1.xpose.msra.mxu0 0.0
  %2327 = vmatprep.subr.mxu0 0.0
  %2328 = vmatpush1.xpose.msra.mxu0 0.0
  %2329 = vmatprep.subr.mxu0 0.0
  %2330 = vmatpush1.xpose.msra.mxu0 0.0
  %2331 = vmatprep.subr.mxu0 0.0
  %2332 = vmatpush1.xpose.msra.mxu0 0.0
  %2333 = vmatprep.subr.mxu0 0.0
  %2334 = vmatpush1.xpose.msra.mxu0 0.0
  %2335 = vmatprep.subr.mxu0 0.0
  %2336 = vmatpush1.xpose.msra.mxu0 0.0
  %2337 = vmatprep.subr.mxu0 0.0
  %2338 = vmatpush1.xpose.msra.mxu0 0.0
  %2339 = vmatprep.subr.mxu0 0.0
  %2340 = vmatpush1.xpose.msra.mxu0 0.0
  %2341 = vmatprep.subr.mxu0 0.0
  %2342 = vmatpush1.xpose.msra.mxu0 0.0
  %2343 = vmatprep.subr.mxu0 0.0
  %2344 = vmatpush1.xpose.msra.mxu0 0.0
  %2345 = vmatprep.subr.mxu0 0.0
  %2346 = vmatpush1.xpose.msra.mxu0 0.0
  %2347 = vmatprep.subr.mxu0 0.0
  %2348 = vmatpush1.xpose.msra.mxu0 0.0
  %2349 = vmatprep.subr.mxu0 0.0
  %2350 = vmatpush1.xpose.msra.mxu0 0.0
  %2351 = vmatprep.subr.mxu0 0.0
  %2352 = vmatpush1.xpose.msra.mxu0 0.0
  %2353 = vmatprep.subr.mxu0 0.0
  %2354 = vmatpush1.xpose.msra.mxu0 0.0
  %2355 = vmatprep.subr.mxu0 0.0
  %2356 = vmatpush1.xpose.msra.mxu0 0.0
  %2357 = vmatprep.subr.mxu0 0.0
  %2358 = vmatpush1.xpose.msra.mxu0 0.0
  %2359 = vmatprep.subr.mxu0 0.0
  %2360 = vmatpush1.xpose.msra.mxu0 0.0
  %2361 = vmatprep.subr.mxu0 0.0
  %2362 = vmatpush1.xpose.msra.mxu0 0.0
  %2363 = vmatprep.subr.mxu0 0.0
  %2364 = vmatpush1.xpose.msra.mxu0 0.0
  %2365 = vmatprep.subr.mxu0 0.0
  %2366 = vmatpush1.xpose.msra.mxu0 0.0
  %2367 = vmatprep.mubr.f32.mxu0 0.0
  %2368 = vmatmul.mubr.f32.gmra.mrb[0].mxu0 %v2295
  %v2369 = vpop.f32.mrb[0].mxu0
  %v2370 = vadd.f32 %v29, %v2369
  %v2371 = vpop.f32.mrb[0].mxu0
  %2372 = vmatprep.mubr.f32.mxu0 0.0
  %2373 = vmatmul.mubr.f32.gmra.mrb[0].mxu0 %v2297
  %v2374 = vpop.f32.mrb[0].mxu0
  %v2375 = vadd.f32 %v30, %v2374
  %v2376 = vpop.f32.mrb[0].mxu0
  %2377 = vdwg.mxu0
  %v2378 = vsel %vm284, %v2370, -inf
  %2379 = vmax.xlane.f32.xlu0 %v2378
  %v2380 = vpop.xlane.xlu0 %2379
  %v2381 = vsel %vm284, %v2375, -inf
  %2382 = vmax.xlane.f32.xlu0 %v2381
  %v2383 = vpop.xlane.xlu0 %2382
  %v2384 = vsub.f32 %v2370, %v2380
  %v2385 = vsub.f32 %v2375, %v2383
  %v2386 = vmul.f32 %v2384, 1.442695
  %v2387 = vpow.pop %v2386
  %v2388 = vmul.f32 %v2385, 1.442695
  %v2389 = vpow.pop %v2388
  %v2390 = vsel %vm284, %v2387, 0.0
  %2391 = vadd.xlane.f32.xlu0 %v2390
  %v2392 = vpop.xlane.xlu0 %2391
  %v2393 = vsel %vm284, %v2389, 0.0
  %2394 = vadd.xlane.f32.xlu0 %v2393
  %v2395 = vpop.xlane.xlu0 %2394
  %v2396 = vrcp.pop %v2392
  %v2397 = vrcp.pop %v2395
  %v2398 = vmul.f32 %v2387, %v2396
  %v2399 = vmul.f32 %v2389, %v2397
  %2400 = vrot.lane.b32.xlu0 %v1717, 48
  %v2401 = vpop.permute.xlu0 %2400
  %2402 = vrot.lane.b32.xlu0 %v1722, 48
  %v2403 = vpop.permute.xlu0 %2402
  %v2407 = vsel %vm284, %v2398, 0
  %v2410 = vsel %vm284, %v2399, 0
  %2412 = vmatprep.subr.mxu0 0.0
  %2413 = vmatpush1.msra.mxu0 %v2401
  %2414 = vmatprep.subr.mxu0 0.0
  %2415 = vmatpush1.msra.mxu0 %v2403
  %2416 = vmatprep.subr.mxu0 0.0
  %2417 = vmatpush1.msra.mxu0 0.0
  %2418 = vmatprep.subr.mxu0 0.0
  %2419 = vmatpush1.msra.mxu0 0.0
  %2420 = vmatprep.subr.mxu0 0.0
  %2421 = vmatpush1.msra.mxu0 0.0
  %2422 = vmatprep.subr.mxu0 0.0
  %2423 = vmatpush1.msra.mxu0 0.0
  %2424 = vmatprep.subr.mxu0 0.0
  %2425 = vmatpush1.msra.mxu0 0.0
  %2426 = vmatprep.subr.mxu0 0.0
  %2427 = vmatpush1.msra.mxu0 0.0
  %2428 = vmatprep.subr.mxu0 0.0
  %2429 = vmatpush1.msra.mxu0 0.0
  %2430 = vmatprep.subr.mxu0 0.0
  %2431 = vmatpush1.msra.mxu0 0.0
  %2432 = vmatprep.subr.mxu0 0.0
  %2433 = vmatpush1.msra.mxu0 0.0
  %2434 = vmatprep.subr.mxu0 0.0
  %2435 = vmatpush1.msra.mxu0 0.0
  %2436 = vmatprep.subr.mxu0 0.0
  %2437 = vmatpush1.msra.mxu0 0.0
  %2438 = vmatprep.subr.mxu0 0.0
  %2439 = vmatpush1.msra.mxu0 0.0
  %2440 = vmatprep.subr.mxu0 0.0
  %2441 = vmatpush1.msra.mxu0 0.0
  %2442 = vmatprep.subr.mxu0 0.0
  %2443 = vmatpush1.msra.mxu0 0.0
  %2444 = vmatprep.subr.mxu0 0.0
  %2445 = vmatpush1.msra.mxu0 0.0
  %2446 = vmatprep.subr.mxu0 0.0
  %2447 = vmatpush1.msra.mxu0 0.0
  %2448 = vmatprep.subr.mxu0 0.0
  %2449 = vmatpush1.msra.mxu0 0.0
  %2450 = vmatprep.subr.mxu0 0.0
  %2451 = vmatpush1.msra.mxu0 0.0
  %2452 = vmatprep.subr.mxu0 0.0
  %2453 = vmatpush1.msra.mxu0 0.0
  %2454 = vmatprep.subr.mxu0 0.0
  %2455 = vmatpush1.msra.mxu0 0.0
  %2456 = vmatprep.subr.mxu0 0.0
  %2457 = vmatpush1.msra.mxu0 0.0
  %2458 = vmatprep.subr.mxu0 0.0
  %2459 = vmatpush1.msra.mxu0 0.0
  %2460 = vmatprep.subr.mxu0 0.0
  %2461 = vmatpush1.msra.mxu0 0.0
  %2462 = vmatprep.subr.mxu0 0.0
  %2463 = vmatpush1.msra.mxu0 0.0
  %2464 = vmatprep.subr.mxu0 0.0
  %2465 = vmatpush1.msra.mxu0 0.0
  %2466 = vmatprep.subr.mxu0 0.0
  %2467 = vmatpush1.msra.mxu0 0.0
  %2468 = vmatprep.subr.mxu0 0.0
  %2469 = vmatpush1.msra.mxu0 0.0
  %2470 = vmatprep.subr.mxu0 0.0
  %2471 = vmatpush1.msra.mxu0 0.0
  %2472 = vmatprep.subr.mxu0 0.0
  %2473 = vmatpush1.msra.mxu0 0.0
  %2474 = vmatprep.subr.mxu0 0.0
  %2475 = vmatpush1.msra.mxu0 0.0
  %2476 = vmatprep.mubr.f32.mxu0 0.0
  %2477 = vmatmul.mubr.f32.gmra.mrb[0].mxu0 %v2407
  %v2478 = vpop.f32.mrb[0].mxu0
  %v2479 = vadd.f32 0.0, %v2478
  %v2480 = vpop.f32.mrb[0].mxu0
  %2481 = vmatprep.mubr.f32.mxu0 0.0
  %2482 = vmatmul.mubr.f32.gmra.mrb[0].mxu0 %v2410
  %v2483 = vpop.f32.mrb[0].mxu0
  %v2484 = vadd.f32 0.0, %v2483
  %v2485 = vpop.f32.mrb[0].mxu0
  %2486 = vdwg.mxu0
  %v2487 = vld [vmem:[%s1563 + $0x90] sm:$0xff]
  %v2489 = vsel %vm200, %v2479, 0
  %v2492 = vsel %vm200, %v2484, 0
  %2494 = vmatprep.subr.mxu0 0.0
  %2495 = vmatpush1.msra.mxu0 %v2487
  %2496 = vmatprep.subr.mxu0 0.0
  %2497 = vmatpush1.msra.mxu0 0.0
  %2498 = vmatprep.subr.mxu0 0.0
  %2499 = vmatpush1.msra.mxu0 0.0
  %2500 = vmatprep.subr.mxu0 0.0
  %2501 = vmatpush1.msra.mxu0 0.0
  %2502 = vmatprep.subr.mxu0 0.0
  %2503 = vmatpush1.msra.mxu0 0.0
  %2504 = vmatprep.subr.mxu0 0.0
  %2505 = vmatpush1.msra.mxu0 0.0
  %2506 = vmatprep.subr.mxu0 0.0
  %2507 = vmatpush1.msra.mxu0 0.0
  %2508 = vmatprep.subr.mxu0 0.0
  %2509 = vmatpush1.msra.mxu0 0.0
  %2510 = vmatprep.subr.mxu0 0.0
  %2511 = vmatpush1.msra.mxu0 0.0
  %2512 = vmatprep.subr.mxu0 0.0
  %2513 = vmatpush1.msra.mxu0 0.0
  %2514 = vmatprep.subr.mxu0 0.0
  %2515 = vmatpush1.msra.mxu0 0.0
  %2516 = vmatprep.subr.mxu0 0.0
  %2517 = vmatpush1.msra.mxu0 0.0
  %2518 = vmatprep.subr.mxu0 0.0
  %2519 = vmatpush1.msra.mxu0 0.0
  %2520 = vmatprep.subr.mxu0 0.0
  %2521 = vmatpush1.msra.mxu0 0.0
  %2522 = vmatprep.subr.mxu0 0.0
  %2523 = vmatpush1.msra.mxu0 0.0
  %2524 = vmatprep.subr.mxu0 0.0
  %2525 = vmatpush1.msra.mxu0 0.0
  %2526 = vmatprep.subr.mxu0 0.0
  %2527 = vmatpush1.msra.mxu0 0.0
  %2528 = vmatprep.subr.mxu0 0.0
  %2529 = vmatpush1.msra.mxu0 0.0
  %2530 = vmatprep.subr.mxu0 0.0
  %2531 = vmatpush1.msra.mxu0 0.0
  %2532 = vmatprep.subr.mxu0 0.0
  %2533 = vmatpush1.msra.mxu0 0.0
  %2534 = vmatprep.subr.mxu0 0.0
  %2535 = vmatpush1.msra.mxu0 0.0
  %2536 = vmatprep.subr.mxu0 0.0
  %2537 = vmatpush1.msra.mxu0 0.0
  %2538 = vmatprep.subr.mxu0 0.0
  %2539 = vmatpush1.msra.mxu0 0.0
  %2540 = vmatprep.subr.mxu0 0.0
  %2541 = vmatpush1.msra.mxu0 0.0
  %2542 = vmatprep.subr.mxu0 0.0
  %2543 = vmatpush1.msra.mxu0 0.0
  %2544 = vmatprep.subr.mxu0 0.0
  %2545 = vmatpush1.msra.mxu0 0.0
  %2546 = vmatprep.subr.mxu0 0.0
  %2547 = vmatpush1.msra.mxu0 0.0
  %2548 = vmatprep.subr.mxu0 0.0
  %2549 = vmatpush1.msra.mxu0 0.0
  %2550 = vmatprep.subr.mxu0 0.0
  %2551 = vmatpush1.msra.mxu0 0.0
  %2552 = vmatprep.subr.mxu0 0.0
  %2553 = vmatpush1.msra.mxu0 0.0
  %2554 = vmatprep.subr.mxu0 0.0
  %2555 = vmatpush1.msra.mxu0 0.0
  %2556 = vmatprep.subr.mxu0 0.0
  %2557 = vmatpush1.msra.mxu0 0.0
  %2558 = vmatprep.mubr.f32.mxu0 0.0
  %2559 = vmatmul.mubr.f32.gmra.mrb[0].mxu0 %v2489
  %v2560 = vpop.f32.mrb[0].mxu0
  %v2561 = vadd.f32 0.0, %v2560
  %v2562 = vpop.f32.mrb[0].mxu0
  %2563 = vmatprep.mubr.f32.mxu0 0.0
  %2564 = vmatmul.mubr.f32.gmra.mrb[0].mxu0 %v2492
  %v2565 = vpop.f32.mrb[0].mxu0
  %v2566 = vadd.f32 0.0, %v2565
  %v2567 = vpop.f32.mrb[0].mxu0
  %2568 = vdwg.mxu0
  %v2569 = vadd.f32 %v2279, %v2561
  %v2570 = vadd.f32 %v2284, %v2566
  %2571 = vrot.lane.b32.xlu0 %v1717, 104
  %v2572 = vpop.permute.xlu0 %2571
  %2573 = vrot.lane.b32.xlu0 %v1722, 104
  %v2574 = vpop.permute.xlu0 %2573
  %2575 = vrot.lane.b32.xlu0 %v1717, 72
  %v2576 = vpop.permute.xlu0 %2575
  %2577 = vrot.lane.b32.xlu0 %v1722, 72
  %v2578 = vpop.permute.xlu0 %2577
  %v2579 = vsel %vm200, %v2572, 0
  %v2581 = vsel %vm200, %v2574, 0
  %v2583 = vsel %vm200, %v2576, 0
  %v2585 = vsel %vm200, %v2578, 0
  %2587 = vmatprep.subr.mxu0 0.0
  %2588 = vmatpush1.xpose.msra.mxu0 %v2583
  %2589 = vmatprep.subr.mxu0 0.0
  %2590 = vmatpush1.xpose.msra.mxu0 %v2585
  %2591 = vmatprep.subr.mxu0 0.0
  %2592 = vmatpush1.xpose.msra.mxu0 0.0
  %2593 = vmatprep.subr.mxu0 0.0
  %2594 = vmatpush1.xpose.msra.mxu0 0.0
  %2595 = vmatprep.subr.mxu0 0.0
  %2596 = vmatpush1.xpose.msra.mxu0 0.0
  %2597 = vmatprep.subr.mxu0 0.0
  %2598 = vmatpush1.xpose.msra.mxu0 0.0
  %2599 = vmatprep.subr.mxu0 0.0
  %2600 = vmatpush1.xpose.msra.mxu0 0.0
  %2601 = vmatprep.subr.mxu0 0.0
  %2602 = vmatpush1.xpose.msra.mxu0 0.0
  %2603 = vmatprep.subr.mxu0 0.0
  %2604 = vmatpush1.xpose.msra.mxu0 0.0
  %2605 = vmatprep.subr.mxu0 0.0
  %2606 = vmatpush1.xpose.msra.mxu0 0.0
  %2607 = vmatprep.subr.mxu0 0.0
  %2608 = vmatpush1.xpose.msra.mxu0 0.0
  %2609 = vmatprep.subr.mxu0 0.0
  %2610 = vmatpush1.xpose.msra.mxu0 0.0
  %2611 = vmatprep.subr.mxu0 0.0
  %2612 = vmatpush1.xpose.msra.mxu0 0.0
  %2613 = vmatprep.subr.mxu0 0.0
  %2614 = vmatpush1.xpose.msra.mxu0 0.0
  %2615 = vmatprep.subr.mxu0 0.0
  %2616 = vmatpush1.xpose.msra.mxu0 0.0
  %2617 = vmatprep.subr.mxu0 0.0
  %2618 = vmatpush1.xpose.msra.mxu0 0.0
  %2619 = vmatprep.subr.mxu0 0.0
  %2620 = vmatpush1.xpose.msra.mxu0 0.0
  %2621 = vmatprep.subr.mxu0 0.0
  %2622 = vmatpush1.xpose.msra.mxu0 0.0
  %2623 = vmatprep.subr.mxu0 0.0
  %2624 = vmatpush1.xpose.msra.mxu0 0.0
  %2625 = vmatprep.subr.mxu0 0.0
  %2626 = vmatpush1.xpose.msra.mxu0 0.0
  %2627 = vmatprep.subr.mxu0 0.0
  %2628 = vmatpush1.xpose.msra.mxu0 0.0
  %2629 = vmatprep.subr.mxu0 0.0
  %2630 = vmatpush1.xpose.msra.mxu0 0.0
  %2631 = vmatprep.subr.mxu0 0.0
  %2632 = vmatpush1.xpose.msra.mxu0 0.0
  %2633 = vmatprep.subr.mxu0 0.0
  %2634 = vmatpush1.xpose.msra.mxu0 0.0
  %2635 = vmatprep.subr.mxu0 0.0
  %2636 = vmatpush1.xpose.msra.mxu0 0.0
  %2637 = vmatprep.subr.mxu0 0.0
  %2638 = vmatpush1.xpose.msra.mxu0 0.0
  %2639 = vmatprep.subr.mxu0 0.0
  %2640 = vmatpush1.xpose.msra.mxu0 0.0
  %2641 = vmatprep.subr.mxu0 0.0
  %2642 = vmatpush1.xpose.msra.mxu0 0.0
  %2643 = vmatprep.subr.mxu0 0.0
  %2644 = vmatpush1.xpose.msra.mxu0 0.0
  %2645 = vmatprep.subr.mxu0 0.0
  %2646 = vmatpush1.xpose.msra.mxu0 0.0
  %2647 = vmatprep.subr.mxu0 0.0
  %2648 = vmatpush1.xpose.msra.mxu0 0.0
  %2649 = vmatprep.subr.mxu0 0.0
  %2650 = vmatpush1.xpose.msra.mxu0 0.0
  %2651 = vmatprep.mubr.f32.mxu0 0.0
  %2652 = vmatmul.mubr.f32.gmra.mrb[0].mxu0 %v2579
  %v2653 = vpop.f32.mrb[0].mxu0
  %v2654 = vadd.f32 %v29, %v2653
  %v2655 = vpop.f32.mrb[0].mxu0
  %2656 = vmatprep.mubr.f32.mxu0 0.0
  %2657 = vmatmul.mubr.f32.gmra.mrb[0].mxu0 %v2581
  %v2658 = vpop.f32.mrb[0].mxu0
  %v2659 = vadd.f32 %v30, %v2658
  %v2660 = vpop.f32.mrb[0].mxu0
  %2661 = vdwg.mxu0
  %v2662 = vsel %vm284, %v2654, -inf
  %2663 = vmax.xlane.f32.xlu0 %v2662
  %v2664 = vpop.xlane.xlu0 %2663
  %v2665 = vsel %vm284, %v2659, -inf
  %2666 = vmax.xlane.f32.xlu0 %v2665
  %v2667 = vpop.xlane.xlu0 %2666
  %v2668 = vsub.f32 %v2654, %v2664
  %v2669 = vsub.f32 %v2659, %v2667
  %v2670 = vmul.f32 %v2668, 1.442695
  %v2671 = vpow.pop %v2670
  %v2672 = vmul.f32 %v2669, 1.442695
  %v2673 = vpow.pop %v2672
  %v2674 = vsel %vm284, %v2671, 0.0
  %2675 = vadd.xlane.f32.xlu0 %v2674
  %v2676 = vpop.xlane.xlu0 %2675
  %v2677 = vsel %vm284, %v2673, 0.0
  %2678 = vadd.xlane.f32.xlu0 %v2677
  %v2679 = vpop.xlane.xlu0 %2678
  %v2680 = vrcp.pop %v2676
  %v2681 = vrcp.pop %v2679
  %v2682 = vmul.f32 %v2671, %v2680
  %v2683 = vmul.f32 %v2673, %v2681
  %2684 = vrot.lane.b32.xlu0 %v1717, 40
  %v2685 = vpop.permute.xlu0 %2684
  %2686 = vrot.lane.b32.xlu0 %v1722, 40
  %v2687 = vpop.permute.xlu0 %2686
  %v2691 = vsel %vm284, %v2682, 0
  %v2694 = vsel %vm284, %v2683, 0
  %2696 = vmatprep.subr.mxu0 0.0
  %2697 = vmatpush1.msra.mxu0 %v2685
  %2698 = vmatprep.subr.mxu0 0.0
  %2699 = vmatpush1.msra.mxu0 %v2687
  %2700 = vmatprep.subr.mxu0 0.0
  %2701 = vmatpush1.msra.mxu0 0.0
  %2702 = vmatprep.subr.mxu0 0.0
  %2703 = vmatpush1.msra.mxu0 0.0
  %2704 = vmatprep.subr.mxu0 0.0
  %2705 = vmatpush1.msra.mxu0 0.0
  %2706 = vmatprep.subr.mxu0 0.0
  %2707 = vmatpush1.msra.mxu0 0.0
  %2708 = vmatprep.subr.mxu0 0.0
  %2709 = vmatpush1.msra.mxu0 0.0
  %2710 = vmatprep.subr.mxu0 0.0
  %2711 = vmatpush1.msra.mxu0 0.0
  %2712 = vmatprep.subr.mxu0 0.0
  %2713 = vmatpush1.msra.mxu0 0.0
  %2714 = vmatprep.subr.mxu0 0.0
  %2715 = vmatpush1.msra.mxu0 0.0
  %2716 = vmatprep.subr.mxu0 0.0
  %2717 = vmatpush1.msra.mxu0 0.0
  %2718 = vmatprep.subr.mxu0 0.0
  %2719 = vmatpush1.msra.mxu0 0.0
  %2720 = vmatprep.subr.mxu0 0.0
  %2721 = vmatpush1.msra.mxu0 0.0
  %2722 = vmatprep.subr.mxu0 0.0
  %2723 = vmatpush1.msra.mxu0 0.0
  %2724 = vmatprep.subr.mxu0 0.0
  %2725 = vmatpush1.msra.mxu0 0.0
  %2726 = vmatprep.subr.mxu0 0.0
  %2727 = vmatpush1.msra.mxu0 0.0
  %2728 = vmatprep.subr.mxu0 0.0
  %2729 = vmatpush1.msra.mxu0 0.0
  %2730 = vmatprep.subr.mxu0 0.0
  %2731 = vmatpush1.msra.mxu0 0.0
  %2732 = vmatprep.subr.mxu0 0.0
  %2733 = vmatpush1.msra.mxu0 0.0
  %2734 = vmatprep.subr.mxu0 0.0
  %2735 = vmatpush1.msra.mxu0 0.0
  %2736 = vmatprep.subr.mxu0 0.0
  %2737 = vmatpush1.msra.mxu0 0.0
  %2738 = vmatprep.subr.mxu0 0.0
  %2739 = vmatpush1.msra.mxu0 0.0
  %2740 = vmatprep.subr.mxu0 0.0
  %2741 = vmatpush1.msra.mxu0 0.0
  %2742 = vmatprep.subr.mxu0 0.0
  %2743 = vmatpush1.msra.mxu0 0.0
  %2744 = vmatprep.subr.mxu0 0.0
  %2745 = vmatpush1.msra.mxu0 0.0
  %2746 = vmatprep.subr.mxu0 0.0
  %2747 = vmatpush1.msra.mxu0 0.0
  %2748 = vmatprep.subr.mxu0 0.0
  %2749 = vmatpush1.msra.mxu0 0.0
  %2750 = vmatprep.subr.mxu0 0.0
  %2751 = vmatpush1.msra.mxu0 0.0
  %2752 = vmatprep.subr.mxu0 0.0
  %2753 = vmatpush1.msra.mxu0 0.0
  %2754 = vmatprep.subr.mxu0 0.0
  %2755 = vmatpush1.msra.mxu0 0.0
  %2756 = vmatprep.subr.mxu0 0.0
  %2757 = vmatpush1.msra.mxu0 0.0
  %2758 = vmatprep.subr.mxu0 0.0
  %2759 = vmatpush1.msra.mxu0 0.0
  %2760 = vmatprep.mubr.f32.mxu0 0.0
  %2761 = vmatmul.mubr.f32.gmra.mrb[0].mxu0 %v2691
  %v2762 = vpop.f32.mrb[0].mxu0
  %v2763 = vadd.f32 0.0, %v2762
  %v2764 = vpop.f32.mrb[0].mxu0
  %2765 = vmatprep.mubr.f32.mxu0 0.0
  %2766 = vmatmul.mubr.f32.gmra.mrb[0].mxu0 %v2694
  %v2767 = vpop.f32.mrb[0].mxu0
  %v2768 = vadd.f32 0.0, %v2767
  %v2769 = vpop.f32.mrb[0].mxu0
  %2770 = vdwg.mxu0
  %v2771 = vld [vmem:[%s1563 + $0x98] sm:$0xff]
  %v2773 = vsel %vm200, %v2763, 0
  %v2776 = vsel %vm200, %v2768, 0
  %2778 = vmatprep.subr.mxu0 0.0
  %2779 = vmatpush1.msra.mxu0 %v2771
  %2780 = vmatprep.subr.mxu0 0.0
  %2781 = vmatpush1.msra.mxu0 0.0
  %2782 = vmatprep.subr.mxu0 0.0
  %2783 = vmatpush1.msra.mxu0 0.0
  %2784 = vmatprep.subr.mxu0 0.0
  %2785 = vmatpush1.msra.mxu0 0.0
  %2786 = vmatprep.subr.mxu0 0.0
  %2787 = vmatpush1.msra.mxu0 0.0
  %2788 = vmatprep.subr.mxu0 0.0
  %2789 = vmatpush1.msra.mxu0 0.0
  %2790 = vmatprep.subr.mxu0 0.0
  %2791 = vmatpush1.msra.mxu0 0.0
  %2792 = vmatprep.subr.mxu0 0.0
  %2793 = vmatpush1.msra.mxu0 0.0
  %2794 = vmatprep.subr.mxu0 0.0
  %2795 = vmatpush1.msra.mxu0 0.0
  %2796 = vmatprep.subr.mxu0 0.0
  %2797 = vmatpush1.msra.mxu0 0.0
  %2798 = vmatprep.subr.mxu0 0.0
  %2799 = vmatpush1.msra.mxu0 0.0
  %2800 = vmatprep.subr.mxu0 0.0
  %2801 = vmatpush1.msra.mxu0 0.0
  %2802 = vmatprep.subr.mxu0 0.0
  %2803 = vmatpush1.msra.mxu0 0.0
  %2804 = vmatprep.subr.mxu0 0.0
  %2805 = vmatpush1.msra.mxu0 0.0
  %2806 = vmatprep.subr.mxu0 0.0
  %2807 = vmatpush1.msra.mxu0 0.0
  %2808 = vmatprep.subr.mxu0 0.0
  %2809 = vmatpush1.msra.mxu0 0.0
  %2810 = vmatprep.subr.mxu0 0.0
  %2811 = vmatpush1.msra.mxu0 0.0
  %2812 = vmatprep.subr.mxu0 0.0
  %2813 = vmatpush1.msra.mxu0 0.0
  %2814 = vmatprep.subr.mxu0 0.0
  %2815 = vmatpush1.msra.mxu0 0.0
  %2816 = vmatprep.subr.mxu0 0.0
  %2817 = vmatpush1.msra.mxu0 0.0
  %2818 = vmatprep.subr.mxu0 0.0
  %2819 = vmatpush1.msra.mxu0 0.0
  %2820 = vmatprep.subr.mxu0 0.0
  %2821 = vmatpush1.msra.mxu0 0.0
  %2822 = vmatprep.subr.mxu0 0.0
  %2823 = vmatpush1.msra.mxu0 0.0
  %2824 = vmatprep.subr.mxu0 0.0
  %2825 = vmatpush1.msra.mxu0 0.0
  %2826 = vmatprep.subr.mxu0 0.0
  %2827 = vmatpush1.msra.mxu0 0.0
  %2828 = vmatprep.subr.mxu0 0.0
  %2829 = vmatpush1.msra.mxu0 0.0
  %2830 = vmatprep.subr.mxu0 0.0
  %2831 = vmatpush1.msra.mxu0 0.0
  %2832 = vmatprep.subr.mxu0 0.0
  %2833 = vmatpush1.msra.mxu0 0.0
  %2834 = vmatprep.subr.mxu0 0.0
  %2835 = vmatpush1.msra.mxu0 0.0
  %2836 = vmatprep.subr.mxu0 0.0
  %2837 = vmatpush1.msra.mxu0 0.0
  %2838 = vmatprep.subr.mxu0 0.0
  %2839 = vmatpush1.msra.mxu0 0.0
  %2840 = vmatprep.subr.mxu0 0.0
  %2841 = vmatpush1.msra.mxu0 0.0
  %2842 = vmatprep.mubr.f32.mxu0 0.0
  %2843 = vmatmul.mubr.f32.gmra.mrb[0].mxu0 %v2773
  %v2844 = vpop.f32.mrb[0].mxu0
  %v2845 = vadd.f32 0.0, %v2844
  %v2846 = vpop.f32.mrb[0].mxu0
  %2847 = vmatprep.mubr.f32.mxu0 0.0
  %2848 = vmatmul.mubr.f32.gmra.mrb[0].mxu0 %v2776
  %v2849 = vpop.f32.mrb[0].mxu0
  %v2850 = vadd.f32 0.0, %v2849
  %v2851 = vpop.f32.mrb[0].mxu0
  %2852 = vdwg.mxu0
  %v2853 = vadd.f32 %v2569, %v2845
  %v2854 = vadd.f32 %v2570, %v2850
  %v2855 = vadd.f32 %v1561, %v2853
  %v2856 = vadd.f32 %v1562, %v2854
  %v2857 = vlaneseq
  %v2858 = vshrl.u32 %v2857, 7
  %v2859 = vsub.s32 0, %v2858
  %v2860 = vrot.slane %v1581, %v2859
  %v2861 = vadd.f32 %v2855, %v2860
  %v2862 = vadd.f32 %v2856, %v2860
  %v2863 = vsel %vm55, %v2861, 0.0
  %2864 = vadd.xlane.f32.xlu0 %v2863
  %v2865 = vpop.xlane.xlu0 %2864
  %v2866 = vsel %vm55, %v2862, 0.0
  %2867 = vadd.xlane.f32.xlu0 %v2866
  %v2868 = vpop.xlane.xlu0 %2867
  %v2869 = vmul.f32 %v2865, %v62
  %v2870 = vmul.f32 %v2868, %v62
  %v2871 = vsub.f32 %v2861, %v2869
  %v2872 = vsub.f32 %v2862, %v2870
  %v2873 = vmul.f32 %v2871, %v2871
  %v2874 = vmul.f32 %v2872, %v2872
  %v2875 = vsel %vm55, %v2873, 0.0
  %2876 = vadd.xlane.f32.xlu0 %v2875
  %v2877 = vpop.xlane.xlu0 %2876
  %v2878 = vsel %vm55, %v2874, 0.0
  %2879 = vadd.xlane.f32.xlu0 %v2878
  %v2880 = vpop.xlane.xlu0 %2879
  %v2881 = vmul.f32 %v2877, 0.032258064
  %v2882 = vmul.f32 %v2880, 0.032258064
  %v2883 = vrsqrt.pop %v2881
  %v2884 = vmul.f32 %v2881, %v2883
  %vm2885 = vcmp.eq.f32.partialorder %v2881, inf
  %v2886 = vsel %vm2885, %v2881, %v2884
  %vm2887 = vcmp.eq.f32.partialorder %v2881, 0.0
  %v2888 = vand.u32 %v2881, 2147483648
  %v2889 = vsel %vm2887, %v2888, %v2886
  %v2890 = vrsqrt.pop %v2882
  %v2891 = vmul.f32 %v2882, %v2890
  %vm2892 = vcmp.eq.f32.partialorder %v2882, inf
  %v2893 = vsel %vm2892, %v2882, %v2891
  %vm2894 = vcmp.eq.f32.partialorder %v2882, 0.0
  %v2895 = vand.u32 %v2882, 2147483648
  %v2896 = vsel %vm2894, %v2895, %v2893
  %v2897 = vadd.f32 %v2889, 1e-06
  %v2898 = vadd.f32 %v2896, 1e-06
  %v2899 = vrcp.pop %v2897
  %v2900 = vrcp.pop %v2898
  %v2901 = vmul.f32 %v2871, %v2899
  %v2902 = vmul.f32 %v2872, %v2900
  %v2903 = vlaneseq
  %v2904 = vshrl.u32 %v2903, 7
  %v2905 = vsub.s32 0, %v2904
  %v2906 = vrot.slane %v1586, %v2905
  %v2907 = vmul.f32 %v2906, %v2901
  %v2908 = vmul.f32 %v2906, %v2902
  %v2909 = vlaneseq
  %v2910 = vshrl.u32 %v2909, 7
  %v2911 = vsub.s32 0, %v2910
  %v2912 = vrot.slane %v1587, %v2911
  %v2913 = vadd.f32 %v2907, %v2912
  %v2914 = vadd.f32 %v2908, %v2912
  %v2915 = vlaneseq
  %v2916 = vshrl.u32 %v2915, 7
  %v2917 = vsub.s32 0, %v2916
  %v2918 = vrot.slane %v1582, %v2917
  %v2920 = vsel %vm55, %v2913, 0
  %v2923 = vsel %vm55, %v2914, 0
  %2925 = vmatprep.subr.mxu0 0.0
  %2926 = vmatpush1.msra.mxu0 %v1568
  %2927 = vmatprep.subr.mxu0 0.0
  %2928 = vmatpush1.msra.mxu0 %v1569
  %2929 = vmatprep.subr.mxu0 0.0
  %2930 = vmatpush1.msra.mxu0 %v1570
  %2931 = vmatprep.subr.mxu0 0.0
  %2932 = vmatpush1.msra.mxu0 %v1571
  %2933 = vmatprep.subr.mxu0 0.0
  %2934 = vmatpush1.msra.mxu0 0.0
  %2935 = vmatprep.subr.mxu0 0.0
  %2936 = vmatpush1.msra.mxu0 0.0
  %2937 = vmatprep.subr.mxu0 0.0
  %2938 = vmatpush1.msra.mxu0 0.0
  %2939 = vmatprep.subr.mxu0 0.0
  %2940 = vmatpush1.msra.mxu0 0.0
  %2941 = vmatprep.subr.mxu0 0.0
  %2942 = vmatpush1.msra.mxu0 0.0
  %2943 = vmatprep.subr.mxu0 0.0
  %2944 = vmatpush1.msra.mxu0 0.0
  %2945 = vmatprep.subr.mxu0 0.0
  %2946 = vmatpush1.msra.mxu0 0.0
  %2947 = vmatprep.subr.mxu0 0.0
  %2948 = vmatpush1.msra.mxu0 0.0
  %2949 = vmatprep.subr.mxu0 0.0
  %2950 = vmatpush1.msra.mxu0 0.0
  %2951 = vmatprep.subr.mxu0 0.0
  %2952 = vmatpush1.msra.mxu0 0.0
  %2953 = vmatprep.subr.mxu0 0.0
  %2954 = vmatpush1.msra.mxu0 0.0
  %2955 = vmatprep.subr.mxu0 0.0
  %2956 = vmatpush1.msra.mxu0 0.0
  %2957 = vmatprep.subr.mxu0 0.0
  %2958 = vmatpush1.msra.mxu0 0.0
  %2959 = vmatprep.subr.mxu0 0.0
  %2960 = vmatpush1.msra.mxu0 0.0
  %2961 = vmatprep.subr.mxu0 0.0
  %2962 = vmatpush1.msra.mxu0 0.0
  %2963 = vmatprep.subr.mxu0 0.0
  %2964 = vmatpush1.msra.mxu0 0.0
  %2965 = vmatprep.subr.mxu0 0.0
  %2966 = vmatpush1.msra.mxu0 0.0
  %2967 = vmatprep.subr.mxu0 0.0
  %2968 = vmatpush1.msra.mxu0 0.0
  %2969 = vmatprep.subr.mxu0 0.0
  %2970 = vmatpush1.msra.mxu0 0.0
  %2971 = vmatprep.subr.mxu0 0.0
  %2972 = vmatpush1.msra.mxu0 0.0
  %2973 = vmatprep.subr.mxu0 0.0
  %2974 = vmatpush1.msra.mxu0 0.0
  %2975 = vmatprep.subr.mxu0 0.0
  %2976 = vmatpush1.msra.mxu0 0.0
  %2977 = vmatprep.subr.mxu0 0.0
  %2978 = vmatpush1.msra.mxu0 0.0
  %2979 = vmatprep.subr.mxu0 0.0
  %2980 = vmatpush1.msra.mxu0 0.0
  %2981 = vmatprep.subr.mxu0 0.0
  %2982 = vmatpush1.msra.mxu0 0.0
  %2983 = vmatprep.subr.mxu0 0.0
  %2984 = vmatpush1.msra.mxu0 0.0
  %2985 = vmatprep.subr.mxu0 0.0
  %2986 = vmatpush1.msra.mxu0 0.0
  %2987 = vmatprep.subr.mxu0 0.0
  %2988 = vmatpush1.msra.mxu0 0.0
  %2989 = vmatprep.mubr.f32.mxu0 0.0
  %2990 = vmatmul.mubr.f32.gmra.mrb[0].mxu0 %v2920
  %v2991 = vpop.f32.mrb[0].mxu0
  %v2992 = vadd.f32 %v2918, %v2991
  %v2993 = vpop.f32.mrb[0].mxu0
  %2994 = vmatprep.mubr.f32.mxu0 0.0
  %2995 = vmatmul.mubr.f32.gmra.mrb[0].mxu0 %v2923
  %v2996 = vpop.f32.mrb[0].mxu0
  %v2997 = vadd.f32 %v2918, %v2996
  %v2998 = vpop.f32.mrb[0].mxu0
  %2999 = vdwg.mxu0
  %v3000 = vmax.f32 %v2992, 0.0
  %v3001 = vmax.f32 %v2997, 0.0
  %v3003 = vsel %vm1473, %v3000, 0
  %v3006 = vsel %vm1473, %v3001, 0
  %3008 = vmatprep.subr.mxu0 0.0
  %3009 = vmatpush1.msra.mxu0 %v1572
  %3010 = vmatprep.subr.mxu0 0.0
  %3011 = vmatpush1.msra.mxu0 %v1573
  %3012 = vmatprep.subr.mxu0 0.0
  %3013 = vmatpush1.msra.mxu0 %v1574
  %3014 = vmatprep.subr.mxu0 0.0
  %3015 = vmatpush1.msra.mxu0 %v1575
  %3016 = vmatprep.subr.mxu0 0.0
  %3017 = vmatpush1.msra.mxu0 %v1576
  %3018 = vmatprep.subr.mxu0 0.0
  %3019 = vmatpush1.msra.mxu0 %v1577
  %3020 = vmatprep.subr.mxu0 0.0
  %3021 = vmatpush1.msra.mxu0 %v1578
  %3022 = vmatprep.subr.mxu0 0.0
  %3023 = vmatpush1.msra.mxu0 %v1579
  %3024 = vmatprep.subr.mxu0 0.0
  %3025 = vmatpush1.msra.mxu0 0.0
  %3026 = vmatprep.subr.mxu0 0.0
  %3027 = vmatpush1.msra.mxu0 0.0
  %3028 = vmatprep.subr.mxu0 0.0
  %3029 = vmatpush1.msra.mxu0 0.0
  %3030 = vmatprep.subr.mxu0 0.0
  %3031 = vmatpush1.msra.mxu0 0.0
  %3032 = vmatprep.subr.mxu0 0.0
  %3033 = vmatpush1.msra.mxu0 0.0
  %3034 = vmatprep.subr.mxu0 0.0
  %3035 = vmatpush1.msra.mxu0 0.0
  %3036 = vmatprep.subr.mxu0 0.0
  %3037 = vmatpush1.msra.mxu0 0.0
  %3038 = vmatprep.subr.mxu0 0.0
  %3039 = vmatpush1.msra.mxu0 0.0
  %3040 = vmatprep.subr.mxu0 0.0
  %3041 = vmatpush1.msra.mxu0 0.0
  %3042 = vmatprep.subr.mxu0 0.0
  %3043 = vmatpush1.msra.mxu0 0.0
  %3044 = vmatprep.subr.mxu0 0.0
  %3045 = vmatpush1.msra.mxu0 0.0
  %3046 = vmatprep.subr.mxu0 0.0
  %3047 = vmatpush1.msra.mxu0 0.0
  %3048 = vmatprep.subr.mxu0 0.0
  %3049 = vmatpush1.msra.mxu0 0.0
  %3050 = vmatprep.subr.mxu0 0.0
  %3051 = vmatpush1.msra.mxu0 0.0
  %3052 = vmatprep.subr.mxu0 0.0
  %3053 = vmatpush1.msra.mxu0 0.0
  %3054 = vmatprep.subr.mxu0 0.0
  %3055 = vmatpush1.msra.mxu0 0.0
  %3056 = vmatprep.subr.mxu0 0.0
  %3057 = vmatpush1.msra.mxu0 0.0
  %3058 = vmatprep.subr.mxu0 0.0
  %3059 = vmatpush1.msra.mxu0 0.0
  %3060 = vmatprep.subr.mxu0 0.0
  %3061 = vmatpush1.msra.mxu0 0.0
  %3062 = vmatprep.subr.mxu0 0.0
  %3063 = vmatpush1.msra.mxu0 0.0
  %3064 = vmatprep.subr.mxu0 0.0
  %3065 = vmatpush1.msra.mxu0 0.0
  %3066 = vmatprep.subr.mxu0 0.0
  %3067 = vmatpush1.msra.mxu0 0.0
  %3068 = vmatprep.subr.mxu0 0.0
  %3069 = vmatpush1.msra.mxu0 0.0
  %3070 = vmatprep.subr.mxu0 0.0
  %3071 = vmatpush1.msra.mxu0 0.0
  %3072 = vmatprep.mubr.f32.mxu0 0.0
  %3073 = vmatmul.mubr.f32.gmra.mrb[0].mxu0 %v3003
  %v3074 = vpop.f32.mrb[0].mxu0
  %v3075 = vadd.f32 0.0, %v3074
  %v3076 = vpop.f32.mrb[0].mxu0
  %3077 = vmatprep.mubr.f32.mxu0 0.0
  %3078 = vmatmul.mubr.f32.gmra.mrb[0].mxu0 %v3006
  %v3079 = vpop.f32.mrb[0].mxu0
  %v3080 = vadd.f32 0.0, %v3079
  %v3081 = vpop.f32.mrb[0].mxu0
  %3082 = vdwg.mxu0
  %v3083 = vadd.f32 %v2861, %v3075
  %v3084 = vadd.f32 %v2862, %v3080
  %v3085 = vlaneseq
  %v3086 = vshrl.u32 %v3085, 7
  %v3087 = vsub.s32 0, %v3086
  %v3088 = vrot.slane %v1583, %v3087
  %v3089 = vadd.f32 %v3083, %v3088
  %v3090 = vadd.f32 %v3084, %v3088
  %v3091 = vld [vmem:[%s3] sm:$0xff]
  %v3092 = vld [vmem:[%s3 + $0x8] sm:$0xff]
  %v3093 = vld [vmem:[%s3 + $0x10] sm:$0xff]
  %v3094 = vld [vmem:[%s3 + $0x18] sm:$0xff]
  %v3095 = vld [vmem:[%s3 + $0x20] sm:$0x1]
  %v3096 = vld [vmem:[%s3 + $0x21] sm:$0x1]
  %v3097 = vld [vmem:[%s3 + $0x22] sm:$0x1]
  %v3098 = vsel %vm55, %v3089, 0.0
  %3099 = vadd.xlane.f32.xlu0 %v3098
  %v3100 = vpop.xlane.xlu0 %3099
  %v3101 = vsel %vm55, %v3090, 0.0
  %3102 = vadd.xlane.f32.xlu0 %v3101
  %v3103 = vpop.xlane.xlu0 %3102
  %v3104 = vmul.f32 %v3100, %v62
  %v3105 = vmul.f32 %v3103, %v62
  %v3106 = vsub.f32 %v3089, %v3104
  %v3107 = vsub.f32 %v3090, %v3105
  %v3108 = vmul.f32 %v3106, %v3106
  %v3109 = vmul.f32 %v3107, %v3107
  %v3110 = vsel %vm55, %v3108, 0.0
  %3111 = vadd.xlane.f32.xlu0 %v3110
  %v3112 = vpop.xlane.xlu0 %3111
  %v3113 = vsel %vm55, %v3109, 0.0
  %3114 = vadd.xlane.f32.xlu0 %v3113
  %v3115 = vpop.xlane.xlu0 %3114
  %v3116 = vmul.f32 %v3112, 0.032258064
  %v3117 = vmul.f32 %v3115, 0.032258064
  %v3118 = vrsqrt.pop %v3116
  %v3119 = vmul.f32 %v3116, %v3118
  %vm3120 = vcmp.eq.f32.partialorder %v3116, inf
  %v3121 = vsel %vm3120, %v3116, %v3119
  %vm3122 = vcmp.eq.f32.partialorder %v3116, 0.0
  %v3123 = vand.u32 %v3116, 2147483648
  %v3124 = vsel %vm3122, %v3123, %v3121
  %v3125 = vrsqrt.pop %v3117
  %v3126 = vmul.f32 %v3117, %v3125
  %vm3127 = vcmp.eq.f32.partialorder %v3117, inf
  %v3128 = vsel %vm3127, %v3117, %v3126
  %vm3129 = vcmp.eq.f32.partialorder %v3117, 0.0
  %v3130 = vand.u32 %v3117, 2147483648
  %v3131 = vsel %vm3129, %v3130, %v3128
  %v3132 = vadd.f32 %v3124, 1e-06
  %v3133 = vadd.f32 %v3131, 1e-06
  %v3134 = vrcp.pop %v3132
  %v3135 = vrcp.pop %v3133
  %v3136 = vmul.f32 %v3106, %v3134
  %v3137 = vmul.f32 %v3107, %v3135
  %v3138 = vlaneseq
  %v3139 = vshrl.u32 %v3138, 7
  %v3140 = vsub.s32 0, %v3139
  %v3141 = vrot.slane %v3096, %v3140
  %v3142 = vmul.f32 %v3141, %v3136
  %v3143 = vmul.f32 %v3141, %v3137
  %v3144 = vlaneseq
  %v3145 = vshrl.u32 %v3144, 7
  %v3146 = vsub.s32 0, %v3145
  %v3147 = vrot.slane %v3097, %v3146
  %v3148 = vadd.f32 %v3142, %v3147
  %v3149 = vadd.f32 %v3143, %v3147
  %v3150 = vlaneseq
  %v3151 = vshrl.u32 %v3150, 7
  %v3152 = vsub.s32 0, %v3151
  %v3153 = vrot.slane %v3095, %v3152
  %v3155 = vsel %vm55, %v3148, 0
  %v3158 = vsel %vm55, %v3149, 0
  %3160 = vmatprep.subr.mxu0 0.0
  %3161 = vmatpush1.msra.mxu0 %v3091
  %3162 = vmatprep.subr.mxu0 0.0
  %3163 = vmatpush1.msra.mxu0 %v3092
  %3164 = vmatprep.subr.mxu0 0.0
  %3165 = vmatpush1.msra.mxu0 %v3093
  %3166 = vmatprep.subr.mxu0 0.0
  %3167 = vmatpush1.msra.mxu0 %v3094
  %3168 = vmatprep.subr.mxu0 0.0
  %3169 = vmatpush1.msra.mxu0 0.0
  %3170 = vmatprep.subr.mxu0 0.0
  %3171 = vmatpush1.msra.mxu0 0.0
  %3172 = vmatprep.subr.mxu0 0.0
  %3173 = vmatpush1.msra.mxu0 0.0
  %3174 = vmatprep.subr.mxu0 0.0
  %3175 = vmatpush1.msra.mxu0 0.0
  %3176 = vmatprep.subr.mxu0 0.0
  %3177 = vmatpush1.msra.mxu0 0.0
  %3178 = vmatprep.subr.mxu0 0.0
  %3179 = vmatpush1.msra.mxu0 0.0
  %3180 = vmatprep.subr.mxu0 0.0
  %3181 = vmatpush1.msra.mxu0 0.0
  %3182 = vmatprep.subr.mxu0 0.0
  %3183 = vmatpush1.msra.mxu0 0.0
  %3184 = vmatprep.subr.mxu0 0.0
  %3185 = vmatpush1.msra.mxu0 0.0
  %3186 = vmatprep.subr.mxu0 0.0
  %3187 = vmatpush1.msra.mxu0 0.0
  %3188 = vmatprep.subr.mxu0 0.0
  %3189 = vmatpush1.msra.mxu0 0.0
  %3190 = vmatprep.subr.mxu0 0.0
  %3191 = vmatpush1.msra.mxu0 0.0
  %3192 = vmatprep.subr.mxu0 0.0
  %3193 = vmatpush1.msra.mxu0 0.0
  %3194 = vmatprep.subr.mxu0 0.0
  %3195 = vmatpush1.msra.mxu0 0.0
  %3196 = vmatprep.subr.mxu0 0.0
  %3197 = vmatpush1.msra.mxu0 0.0
  %3198 = vmatprep.subr.mxu0 0.0
  %3199 = vmatpush1.msra.mxu0 0.0
  %3200 = vmatprep.subr.mxu0 0.0
  %3201 = vmatpush1.msra.mxu0 0.0
  %3202 = vmatprep.subr.mxu0 0.0
  %3203 = vmatpush1.msra.mxu0 0.0
  %3204 = vmatprep.subr.mxu0 0.0
  %3205 = vmatpush1.msra.mxu0 0.0
  %3206 = vmatprep.subr.mxu0 0.0
  %3207 = vmatpush1.msra.mxu0 0.0
  %3208 = vmatprep.subr.mxu0 0.0
  %3209 = vmatpush1.msra.mxu0 0.0
  %3210 = vmatprep.subr.mxu0 0.0
  %3211 = vmatpush1.msra.mxu0 0.0
  %3212 = vmatprep.subr.mxu0 0.0
  %3213 = vmatpush1.msra.mxu0 0.0
  %3214 = vmatprep.subr.mxu0 0.0
  %3215 = vmatpush1.msra.mxu0 0.0
  %3216 = vmatprep.subr.mxu0 0.0
  %3217 = vmatpush1.msra.mxu0 0.0
  %3218 = vmatprep.subr.mxu0 0.0
  %3219 = vmatpush1.msra.mxu0 0.0
  %3220 = vmatprep.subr.mxu0 0.0
  %3221 = vmatpush1.msra.mxu0 0.0
  %3222 = vmatprep.subr.mxu0 0.0
  %3223 = vmatpush1.msra.mxu0 0.0
  %3224 = vmatprep.mubr.f32.mxu0 0.0
  %3225 = vmatmul.mubr.f32.gmra.mrb[0].mxu0 %v3155
  %v3226 = vpop.f32.mrb[0].mxu0
  %v3227 = vadd.f32 %v3153, %v3226
  %v3228 = vpop.f32.mrb[0].mxu0
  %3229 = vmatprep.mubr.f32.mxu0 0.0
  %3230 = vmatmul.mubr.f32.gmra.mrb[0].mxu0 %v3158
  %v3231 = vpop.f32.mrb[0].mxu0
  %v3232 = vadd.f32 %v3153, %v3231
  %v3233 = vpop.f32.mrb[0].mxu0
  %3234 = vdwg.mxu0
  %3235 = vmax.xlane.f32.xlu0 %v3227
  %v3236 = vpop.xlane.xlu0 %3235
  %3237 = vmax.xlane.f32.xlu0 %v3232
  %v3238 = vpop.xlane.xlu0 %3237
  %v3239 = vsub.f32 %v3227, %v3236
  %v3240 = vsub.f32 %v3232, %v3238
  %v3241 = vmul.f32 %v3239, 1.442695
  %v3242 = vpow.pop %v3241
  %v3243 = vmul.f32 %v3240, 1.442695
  %v3244 = vpow.pop %v3243
  %3245 = vadd.xlane.f32.xlu0 %v3242
  %v3246 = vpop.xlane.xlu0 %3245
  %3247 = vadd.xlane.f32.xlu0 %v3244
  %v3248 = vpop.xlane.xlu0 %3247
  %v3249 = vlog2.pop %v3246
  %v3250 = vmul.f32 %v3249, 0.6931472
  %v3251 = vlog2.pop %v3248
  %v3252 = vmul.f32 %v3251, 0.6931472
  %v3253 = vadd.f32 %v3250, %v3236
  %v3254 = vadd.f32 %v3252, %v3238
  %v3255 = vsub.f32 %v3227, %v3253
  %v3256 = vsub.f32 %v3232, %v3254
  %3257 = vst [vmem:[%s4] sm:$0xff] %v3255
  %3258 = vst [vmem:[%s4 + $0x8] sm:$0xff] %v3256
  // Predicated region
  $region18: #{transformer_forward.1} parent=0 // pred_check
    _
  $region19: #{transformer_forward.1} parent=0 // pred_check_branch
    %3260 = sbr.rel (0) target = $region21
  $region20: #{transformer_forward.1} parent=0 // pred_region
    _
  $region21: #{transformer_forward.1} parent=0 // pred_fallthru
    _
  // Predicated region
  $region22: #{transformer_forward.1} parent=0 // pred_check
    _
  $region23: #{transformer_forward.1} parent=0 // pred_check_branch
    %3262 = sbr.rel (0) target = $region25
  $region24: #{transformer_forward.1} parent=0 // pred_region
    _
  $region25: #{transformer_forward.1} parent=0 // pred_fallthru
    _

</llo_original>
